<compile_context>
chip_gen: v5e
topology: v5e:2x2
jax: 0.10.0
libtpu: 0.0.40
codegen_flags: <defaults>
</compile_context>

<pallas_src>
import functools

import jax
import jax.numpy as jnp
from jax.experimental import pallas as pl
from jax.experimental.pallas import tpu as pltpu


MATMUL_DTYPE = jnp.bfloat16   # MXU input dtype and intermediate-activation dtype


def _round_up(x, m):
    return ((x + m - 1) // m) * m


def _cdiv(a, b):
    return -(-a // b)


def _pad_to(a, axis, target):
    pad = target - a.shape[axis]
    if pad <= 0:
        return a
    widths = [(0, 0)] * a.ndim
    widths[axis] = (0, pad)
    return jnp.pad(a, widths)


def _vmem_caps():
    """Generation-aware VMEM (limit, tile budget) in bytes."""
    cap = 64 * 1024 * 1024                      # conservative default (v7x-like)
    try:
        info = pltpu.get_tpu_info()
        c = getattr(info, "vmem_capacity_bytes", None)
        if c:
            cap = int(c)
    except Exception:
        pass
    limit = min(cap * 3 // 4, 100 * 1024 * 1024)   # v5e/v6e: 96 MiB, v7x: 48 MiB
    budget = min(cap // 2, 48 * 1024 * 1024)       # v5e/v6e: 48 MiB, v7x: 32 MiB
    return limit, budget


_VMEM_LIMIT_BYTES, _VMEM_BUDGET_BYTES = _vmem_caps()


def _pad_cout(cout):
    # Lane-dense output for real ResNet channel counts; tiny toy channel counts are
    # left unpadded (full-dim blocks stay legal; 16x write inflation would dominate).
    return _round_up(cout, 128) if cout >= 64 else _round_up(cout, 8)


# ----------------------------------------------------------------------------
# Kernel 1: fused matmul + folded-BN bias + optional residual + optional ReLU
# (single K block -> weights VMEM-resident, no scratch, dot written directly)
# ----------------------------------------------------------------------------
def _matmul_bias_act_kernel(*refs, relu, has_residual):
    if has_residual:
        p_ref, w_ref, b_ref, r_ref, o_ref = refs
    else:
        p_ref, w_ref, b_ref, o_ref = refs
    y = jnp.dot(p_ref[...], w_ref[...], preferred_element_type=jnp.float32)
    y = y + b_ref[...]
    if has_residual:
        y = y + r_ref[...].astype(jnp.float32)
    if relu:
        y = jnp.maximum(y, 0.0)
    o_ref[...] = y.astype(o_ref.dtype)


def matmul_bias_act(patches, w_mat, bias, residual=None, *, relu,
                    out_dtype=MATMUL_DTYPE):
    """Fused (patches @ w_mat) + bias [+ residual] [+ ReLU].

    patches:  [M, K]     (cast to bf16)
    w_mat:    [K, Cout]  BN-scale-folded weights (cast to bf16)
    bias:     [Cout]     folded BN bias (f32)
    residual: [M, Cout]  streamed in bf16, or None
    returns:  [M, Cout]  out_dtype
    """
    M, K = patches.shape
    Cout = w_mat.shape[1]
    has_residual = residual is not None
    obytes = jnp.dtype(out_dtype).itemsize

    kp = _round_up(K, 128)          # single K block, full 128-lane vregs
    coutp = _pad_cout(Cout)

    # Row tile: multiple of 128, >=2 tiles once M >= 256 (feeds both v7x cores),
    # capped by the generation-aware VMEM budget.
    fixed = 2 * kp * coutp * 2 + 2 * coutp * 4
    per_row = 2 * kp * 2 + 2 * coutp * obytes + coutp * 4
    if has_residual:
        per_row += 2 * coutp * 2
    cap = max(_VMEM_BUDGET_BYTES - fixed, 0) // per_row // 128 * 128
    cap = max(128, min(1024, cap))
    if M < 256:
        tm = _round_up(M, 16)       # single tile; bf16 packs 16 rows per vreg
    else:
        tiles = max(2, _cdiv(M, cap))
        tm = _round_up(_cdiv(M, tiles), 128)
    mp = _round_up(M, tm)

    patches = _pad_to(_pad_to(patches.astype(MATMUL_DTYPE), 0, mp), 1, kp)
    w_mat = _pad_to(_pad_to(w_mat.astype(MATMUL_DTYPE), 0, kp), 1, coutp)
    bias2d = _pad_to(bias.reshape(1, -1).astype(jnp.float32), 1, coutp)

    in_specs = [
        pl.BlockSpec((tm, kp), lambda i: (i, 0)),
        pl.BlockSpec((kp, coutp), lambda i: (0, 0)),   # constant -> fetched once
        pl.BlockSpec((1, coutp), lambda i: (0, 0)),
    ]
    args = [patches, w_mat, bias2d]
    if has_residual:
        residual = _pad_to(_pad_to(residual.astype(MATMUL_DTYPE), 0, mp), 1, coutp)
        in_specs.append(pl.BlockSpec((tm, coutp), lambda i: (i, 0)))
        args.append(residual)

    flops = 2 * mp * kp * coutp
    bytes_accessed = mp * kp * 2 + kp * coutp * 2 + coutp * 4 + mp * coutp * obytes
    if has_residual:
        bytes_accessed += mp * coutp * 2

    out = pl.pallas_call(
        functools.partial(_matmul_bias_act_kernel, relu=relu,
                          has_residual=has_residual),
        out_shape=jax.ShapeDtypeStruct((mp, coutp), out_dtype),
        grid=(mp // tm,),
        in_specs=in_specs,
        out_specs=pl.BlockSpec((tm, coutp), lambda i: (i, 0)),
        compiler_params=pltpu.CompilerParams(
            dimension_semantics=("parallel",),
            vmem_limit_bytes=_VMEM_LIMIT_BYTES),
        cost_estimate=pl.CostEstimate(flops=int(flops), transcendentals=0,
                                      bytes_accessed=int(bytes_accessed)),
    )(*args)
    return out[:M, :Cout]


# ----------------------------------------------------------------------------
# Kernel 2: direct 3x3 / stride-1 conv (no im2col) + bias + residual + ReLU
# ----------------------------------------------------------------------------
def _direct_conv3x3_kernel(*refs, relu, has_residual, offsets, m_rows):
    if has_residual:
        x_ref, w_ref, b_ref, r_ref, o_ref = refs
    else:
        x_ref, w_ref, b_ref, o_ref = refs
    acc = None
    for t, d in enumerate(offsets):          # 9 statically-shifted matmuls
        xs = x_ref[0, pl.ds(d, m_rows), :]
        part = jnp.dot(xs, w_ref[t], preferred_element_type=jnp.float32)
        acc = part if acc is None else acc + part
    y = acc + b_ref[...]
    if has_residual:
        y = y + r_ref[0].astype(jnp.float32)
    if relu:
        y = jnp.maximum(y, 0.0)
    o_ref[0] = y.astype(o_ref.dtype)


def conv3x3_direct(x, w, scale, bias, residual=None, *, relu,
                   out_dtype=MATMUL_DTYPE):
    """3x3 stride-1 pad-1 conv + folded-BN bias [+ residual] [+ ReLU], direct.

    x:        [N, H, W, Cin]
    w:        [Cout, Cin, 3, 3] (PyTorch layout, f32)
    scale:    [Cout] BN scale (folded into the weights)
    bias:     [Cout] folded BN bias
    residual: [N, H, W, Cout] or None (streamed in bf16)
    """
    N, H, W, Cin = x.shape
    Cout = w.shape[0]
    Hp, Wp = H + 2, W + 2
    m_out = H * Wp                             # valid rows + 2 garbage cols per row
    m_pad = _round_up(m_out, 8)
    l_pad = _round_up(m_pad + 2 * Wp + 2, 8)   # covers the largest tap offset
    coutp = _pad_cout(Cout)
    tn = coutp if coutp <= 128 else 128
    obytes = jnp.dtype(out_dtype).itemsize

    # Whole-image-in-VMEM footprint; fall back to im2col for very large images.
    # TODO(synk): tile the direct conv over output rows with a manual halo DMA
    # (pl.ANY input + make_async_copy) instead of falling back.
    foot = (2 * l_pad * Cin * 2 + 2 * 9 * Cin * tn * 2
            + 2 * m_pad * tn * obytes + 3 * m_pad * tn * 4)
    if residual is not None:
        foot += 2 * m_pad * tn * 2
    if foot > _VMEM_BUDGET_BYTES:
        pat, (n, ho, wo) = im2col3x3(x, 1)
        w_mat = wmat3x3(w) * scale[None, :]
        res2d = None if residual is None else residual.reshape(n * ho * wo, Cout)
        out = matmul_bias_act(pat, w_mat, bias, residual=res2d, relu=relu,
                              out_dtype=out_dtype)
        return out.reshape(n, ho, wo, Cout)

    # Flattened, zero-padded image: tap (kh,kw) == constant flat offset kh*Wp+kw.
    xf = jnp.pad(x.astype(MATMUL_DTYPE), ((0, 0), (1, 1), (1, 1), (0, 0)))
    xf = _pad_to(xf.reshape(N, Hp * Wp, Cin), 1, l_pad)

    wt = jnp.transpose(w, (2, 3, 1, 0)).reshape(9, Cin, Cout) * scale[None, None, :]
    wt = _pad_to(wt.astype(MATMUL_DTYPE), 2, coutp)
    bias2d = _pad_to(bias.reshape(1, -1).astype(jnp.float32), 1, coutp)

    in_specs = [
        pl.BlockSpec((1, l_pad, Cin), lambda n, j: (n, 0, 0)),   # resident across j
        pl.BlockSpec((9, Cin, tn), lambda n, j: (0, 0, j)),
        pl.BlockSpec((1, tn), lambda n, j: (0, j)),
    ]
    args = [xf, wt, bias2d]
    has_residual = residual is not None
    if has_residual:
        rf = jnp.pad(residual.astype(MATMUL_DTYPE), ((0, 0), (0, 0), (0, 2), (0, 0)))
        rf = _pad_to(_pad_to(rf.reshape(N, m_out, Cout), 1, m_pad), 2, coutp)
        in_specs.append(pl.BlockSpec((1, m_pad, tn), lambda n, j: (n, 0, j)))
        args.append(rf)

    offsets = tuple(kh * Wp + kw for kh in range(3) for kw in range(3))
    jc = coutp // tn
    flops = 2 * N * m_pad * 9 * Cin * coutp
    bytes_accessed = (N * l_pad * Cin * 2 + N * 9 * Cin * coutp * 2
                      + N * m_pad * coutp * obytes + jc * coutp * 4)
    if has_residual:
        bytes_accessed += N * m_pad * coutp * 2

    out = pl.pallas_call(
        functools.partial(_direct_conv3x3_kernel, relu=relu,
                          has_residual=has_residual, offsets=offsets,
                          m_rows=m_pad),
        out_shape=jax.ShapeDtypeStruct((N, m_pad, coutp), out_dtype),
        grid=(N, jc),
        in_specs=in_specs,
        out_specs=pl.BlockSpec((1, m_pad, tn), lambda n, j: (n, 0, j)),
        compiler_params=pltpu.CompilerParams(
            dimension_semantics=("parallel", "parallel"),
            vmem_limit_bytes=_VMEM_LIMIT_BYTES),
        cost_estimate=pl.CostEstimate(flops=int(flops), transcendentals=0,
                                      bytes_accessed=int(bytes_accessed)),
    )(*args)
    out = out[:, :m_out, :Cout].reshape(N, H, Wp, Cout)
    return out[:, :, :W, :]


# ----------------------------------------------------------------------------
# Plain-JAX glue: im2col (stride-2 convs only), weight reshaping, BN folding
# ----------------------------------------------------------------------------
def im2col3x3(x, stride):
    """x: NHWC. Returns ([N*Ho*Wo, 9*C] bf16, (N, Ho, Wo)). pad=1, k=3."""
    N, H, W, C = x.shape
    xp = jnp.pad(x.astype(MATMUL_DTYPE), ((0, 0), (1, 1), (1, 1), (0, 0)))
    Ho = (H + 2 - 3) // stride + 1
    Wo = (W + 2 - 3) // stride + 1
    cols = []
    for kh in range(3):
        for kw in range(3):
            patch = xp[:, kh:kh + (Ho - 1) * stride + 1:stride,
                          kw:kw + (Wo - 1) * stride + 1:stride, :]
            cols.append(patch)
    pat = jnp.concatenate(cols, axis=-1)   # (kh, kw, c) ordering
    return pat.reshape(N * Ho * Wo, 9 * C), (N, Ho, Wo)


def wmat3x3(w):
    """PyTorch conv weight [Cout, Cin, 3, 3] -> [9*Cin, Cout] matching im2col order."""
    cout, cin = w.shape[0], w.shape[1]
    return jnp.transpose(w, (2, 3, 1, 0)).reshape(9 * cin, cout)


def fold_bn(bn, eps=1e-5):
    """Inference-mode BN -> per-channel (scale, bias)."""
    scale = bn["gamma"] / jnp.sqrt(bn["var"] + eps)
    bias = bn["beta"] - bn["mean"] * scale
    return scale.astype(jnp.float32), bias.astype(jnp.float32)


# ----------------------------------------------------------------------------
# ResBlock / ResLayer forward (NHWC internally, bf16 intermediates)
# ----------------------------------------------------------------------------
def resblock_forward(x, p, out_dtype=MATMUL_DTYPE):
    stride = p["stride"]
    x = x.astype(MATMUL_DTYPE)
    cin = x.shape[-1]
    cout = p["w1"].shape[0]
    s1, b1 = fold_bn(p["bn1"])
    s2, b2 = fold_bn(p["bn2"])

    # conv1 -> bn1 -> relu
    if stride == 1:
        y1 = conv3x3_direct(x, p["w1"], s1, b1, relu=True)
    else:
        pat1, (n, ho, wo) = im2col3x3(x, stride)
        w1 = wmat3x3(p["w1"]) * s1[None, :]
        y1 = matmul_bias_act(pat1, w1, b1, relu=True).reshape(n, ho, wo, cout)

    # identity path (optional 1x1 conv stride s + bn, fused; bf16 output)
    if p["wd"] is not None:
        sd, bd = fold_bn(p["bnd"])
        xs = x[:, ::stride, ::stride, :]
        n, ho, wo = xs.shape[0], xs.shape[1], xs.shape[2]
        patd = xs.reshape(n * ho * wo, cin)
        wd = jnp.transpose(p["wd"][:, :, 0, 0], (1, 0)) * sd[None, :]
        identity = matmul_bias_act(patd, wd, bd, relu=False).reshape(n, ho, wo, cout)
    else:
        assert stride == 1 and cin == cout, \
            "identity path without downsample requires stride==1 and cin==cout"
        identity = x

    # conv2 -> bn2 -> (+identity) -> relu  (always stride 1 -> direct, fused)
    return conv3x3_direct(y1, p["w2"], s2, b2, residual=identity, relu=True,
                          out_dtype=out_dtype)


def reslayer_forward_nchw(x_nchw, params):
    """Public entry point: NCHW in, NCHW out (matches PyTorch ResLayer.forward)."""
    x = jnp.transpose(x_nchw, (0, 2, 3, 1))   # NCHW -> NHWC
    for bi, p in enumerate(params):
        last = bi == len(params) - 1
        x = resblock_forward(x, p, out_dtype=jnp.float32 if last else MATMUL_DTYPE)
    return jnp.transpose(x, (0, 3, 1, 2)).astype(jnp.float32)   # NHWC -> NCHW


# ----------------------------------------------------------------------------
# Deterministic parameter init (shapes follow ResBlock.__init__)
# ----------------------------------------------------------------------------
def init_bn(key, c):
    k1, k2, k3, k4 = jax.random.split(key, 4)
    return dict(
        gamma=1.0 + 0.1 * jax.random.normal(k1, (c,), jnp.float32),
        beta=0.1 * jax.random.normal(k2, (c,), jnp.float32),
        mean=0.1 * jax.random.normal(k3, (c,), jnp.float32),
        var=jnp.abs(jax.random.normal(k4, (c,), jnp.float32)) + 0.5,
    )


def init_resblock(key, cin, cout, stride):
    ks = jax.random.split(key, 6)
    p = dict(stride=stride)
    p["w1"] = 0.1 * jax.random.normal(ks[0], (cout, cin, 3, 3), jnp.float32)
    p["bn1"] = init_bn(ks[1], cout)
    p["w2"] = 0.1 * jax.random.normal(ks[2], (cout, cout, 3, 3), jnp.float32)
    p["bn2"] = init_bn(ks[3], cout)
    if stride != 1 or cin != cout:
        p["wd"] = 0.1 * jax.random.normal(ks[4], (cout, cin, 1, 1), jnp.float32)
        p["bnd"] = init_bn(ks[5], cout)
    else:
        p["wd"] = None
        p["bnd"] = None
    return p


def init_reslayer(key, cin, cout, blocks, stride):
    keys = jax.random.split(key, blocks)
    params = [init_resblock(keys[0], cin, cout, stride)]
    for i in range(1, blocks):
        params.append(init_resblock(keys[i], cout, cout, 1))
    return params


# ----------------------------------------------------------------------------
# Pure-JAX reference (f32 HIGHEST) for correctness check of the Pallas path
# ----------------------------------------------------------------------------
def _ref_conv(x, w, stride, padding):
    return jax.lax.conv_general_dilated(
        x, jnp.transpose(w, (2, 3, 1, 0)),
        window_strides=(stride, stride), padding=padding,
        dimension_numbers=("NHWC", "HWIO", "NHWC"),
        precision=jax.lax.Precision.HIGHEST,
    )


def _ref_bn(x, bn, eps=1e-5):
    s = bn["gamma"] / jnp.sqrt(bn["var"] + eps)
    return x * s + (bn["beta"] - bn["mean"] * s)


def _ref_resblock(x, p):
    out = jnp.maximum(_ref_bn(_ref_conv(x, p["w1"], p["stride"], ((1, 1), (1, 1))), p["bn1"]), 0.0)
    out = _ref_bn(_ref_conv(out, p["w2"], 1, ((1, 1), (1, 1))), p["bn2"])
    identity = x
    if p["wd"] is not None:
        identity = _ref_bn(_ref_conv(x, p["wd"], p["stride"], ((0, 0), (0, 0))), p["bnd"])
    return jnp.maximum(out + identity, 0.0)


def reslayer_reference_nchw(x_nchw, params):
    x = jnp.transpose(x_nchw, (0, 2, 3, 1))
    for p in params:
        x = _ref_resblock(x, p)
    return jnp.transpose(x, (0, 3, 1, 2))


# ----------------------------------------------------------------------------
if __name__ == "__main__":
    def run_case(case_key, N, CIN, H, W, COUT, BLOCKS, STRIDE):
        kx, kparam = jax.random.split(case_key)
        x = jax.random.normal(kx, (N, CIN, H, W), jnp.float32)
        params = init_reslayer(kparam, CIN, COUT, BLOCKS, STRIDE)
        fwd = jax.jit(functools.partial(reslayer_forward_nchw, params=params))
        out = jax.block_until_ready(fwd(x))
        ref = jax.block_until_ready(reslayer_reference_nchw(x, params))
        assert out.shape == (N, COUT, H // STRIDE, W // STRIDE), out.shape
        # bf16 MXU inputs + bf16 intermediate activations vs. an f32-HIGHEST ref.
        assert jnp.allclose(out, ref, atol=3e-2, rtol=3e-2), \
            float(jnp.max(jnp.abs(out - ref)))

    key = jax.random.PRNGKey(0)
    k1, k2 = jax.random.split(key)

    # ResLayer(in=4, out=8, blocks=2, stride=2) on a 2x4x16x16 input:
    # exercises the im2col stride-2 path, the 1x1 downsample, the direct stride-1
    # path with and without residual, and the no-downsample identity branch.
    run_case(k1, N=2, CIN=4, H=16, W=16, COUT=8, BLOCKS=2, STRIDE=2)

    # Wider case: exercises Cout>=64 lane padding (coutp=128), the multi-M-tile
    # matmul path (M=512 -> 2 row tiles), and the direct kernel at Cin=Cout=64.
    run_case(k2, N=2, CIN=8, H=32, W=32, COUT=64, BLOCKS=1, STRIDE=2)

    print("KERNEL_OK")
</pallas_src>

<mosaic_0001>
module attributes {stable_mosaic.version = 11 : i64} {
  func.func @_matmul_bias_act_kernel(%arg0: i32, %arg1: memref<128x128xbf16, #tpu.memory_space<vmem>>, %arg2: memref<128x8xbf16, #tpu.memory_space<vmem>>, %arg3: memref<1x8xf32, #tpu.memory_space<vmem>>, %arg4: memref<128x8xbf16, #tpu.memory_space<vmem>>) attributes {dimension_semantics = [#tpu.dimension_semantics<parallel>], iteration_bounds = array<i64: 1>, scalar_prefetch = 0 : i64, scratch_operands = 0 : i64, tpu.core_type = #tpu.core_type<tc>, window_params = [{transform_indices = @transform_0, window_bounds = array<i64: 128, 128>}, {pipeline_mode = #tpu.pipeline_mode<synchronous>, transform_indices = @transform_1, window_bounds = array<i64: 128, 8>}, {pipeline_mode = #tpu.pipeline_mode<synchronous>, transform_indices = @transform_2, window_bounds = array<i64: 1, 8>}, {transform_indices = @transform_3, window_bounds = array<i64: 128, 8>}]} {
    %c0 = arith.constant 0 : index
    %c0_0 = arith.constant 0 : index
    %0 = vector.load %arg1[%c0, %c0_0] : memref<128x128xbf16, #tpu.memory_space<vmem>>, vector<128x128xbf16>
    %c0_1 = arith.constant 0 : index
    %c0_2 = arith.constant 0 : index
    %1 = vector.load %arg2[%c0_1, %c0_2] : memref<128x8xbf16, #tpu.memory_space<vmem>>, vector<128x8xbf16>
    %cst = arith.constant dense<0.000000e+00> : vector<128x8xf32>
    %2 = tpu.matmul %0, %1, %cst {dimension_numbers = #tpu.dot_dimension_numbers<[1], [0], [0], [1], [0, 0, 1, 1], [], []>} : vector<128x128xbf16>, vector<128x8xbf16>, vector<128x8xf32> -> vector<128x8xf32>
    %c0_3 = arith.constant 0 : index
    %c0_4 = arith.constant 0 : index
    %3 = vector.load %arg3[%c0_3, %c0_4] : memref<1x8xf32, #tpu.memory_space<vmem>>, vector<1x8xf32>
    %4 = vector.broadcast %3 : vector<1x8xf32> to vector<128x8xf32>
    %5 = arith.addf %2, %4 : vector<128x8xf32>
    %cst_5 = arith.constant 0.000000e+00 : f32
    %6 = vector.broadcast %cst_5 : f32 to vector<128x8xf32>
    %7 = arith.maximumf %5, %6 : vector<128x8xf32>
    %8 = arith.truncf %7 : vector<128x8xf32> to vector<128x8xbf16>
    %c0_6 = arith.constant 0 : index
    %c0_7 = arith.constant 0 : index
    %9 = vector.load %arg4[%c0_6, %c0_7] : memref<128x8xbf16, #tpu.memory_space<vmem>>, vector<128x8xbf16>
    tpu.vector_store %arg4[%c0_6, %c0_7], %8 {strides = array<i32>} : memref<128x8xbf16, #tpu.memory_space<vmem>>, vector<128x8xbf16>,
    return
  }
  func.func @transform_0(%arg0: i32) -> (i32, i32) {
    %c0_i32 = arith.constant 0 : i32
    %c0_i32_0 = arith.constant 0 : i32
    return %arg0, %c0_i32 : i32, i32
  }
  func.func @transform_1(%arg0: i32) -> (i32, i32) {
    %c0_i32 = arith.constant 0 : i32
    %c0_i32_0 = arith.constant 0 : i32
    %c0_i32_1 = arith.constant 0 : i32
    return %c0_i32, %c0_i32_0 : i32, i32
  }
  func.func @transform_2(%arg0: i32) -> (i32, i32) {
    %c0_i32 = arith.constant 0 : i32
    %c0_i32_0 = arith.constant 0 : i32
    %c0_i32_1 = arith.constant 0 : i32
    return %c0_i32, %c0_i32_0 : i32, i32
  }
  func.func @transform_3(%arg0: i32) -> (i32, i32) {
    %c0_i32 = arith.constant 0 : i32
    %c0_i32_0 = arith.constant 0 : i32
    return %arg0, %c0_i32 : i32, i32
  }
}

module attributes {stable_mosaic.version = 11 : i64} {
  func.func @_matmul_bias_act_kernel(%arg0: i32, %arg1: memref<128x128xbf16, #tpu.memory_space<vmem>>, %arg2: memref<128x8xbf16, #tpu.memory_space<vmem>>, %arg3: memref<1x8xf32, #tpu.memory_space<vmem>>, %arg4: memref<128x8xbf16, #tpu.memory_space<vmem>>) attributes {dimension_semantics = [#tpu.dimension_semantics<parallel>], iteration_bounds = array<i64: 1>, scalar_prefetch = 0 : i64, scratch_operands = 0 : i64, tpu.core_type = #tpu.core_type<tc>, window_params = [{transform_indices = @transform_0, window_bounds = array<i64: 128, 128>}, {pipeline_mode = #tpu.pipeline_mode<synchronous>, transform_indices = @transform_1, window_bounds = array<i64: 128, 8>}, {pipeline_mode = #tpu.pipeline_mode<synchronous>, transform_indices = @transform_2, window_bounds = array<i64: 1, 8>}, {transform_indices = @transform_3, window_bounds = array<i64: 128, 8>}]} {
    %c0 = arith.constant 0 : index
    %c0_0 = arith.constant 0 : index
    %0 = vector.load %arg1[%c0, %c0_0] : memref<128x128xbf16, #tpu.memory_space<vmem>>, vector<128x128xbf16>
    %c0_1 = arith.constant 0 : index
    %c0_2 = arith.constant 0 : index
    %1 = vector.load %arg2[%c0_1, %c0_2] : memref<128x8xbf16, #tpu.memory_space<vmem>>, vector<128x8xbf16>
    %cst = arith.constant dense<0.000000e+00> : vector<128x8xf32>
    %2 = tpu.matmul %0, %1, %cst {dimension_numbers = #tpu.dot_dimension_numbers<[1], [0], [0], [1], [0, 0, 1, 1], [], []>} : vector<128x128xbf16>, vector<128x8xbf16>, vector<128x8xf32> -> vector<128x8xf32>
    %c0_3 = arith.constant 0 : index
    %c0_4 = arith.constant 0 : index
    %3 = vector.load %arg3[%c0_3, %c0_4] : memref<1x8xf32, #tpu.memory_space<vmem>>, vector<1x8xf32>
    %4 = vector.broadcast %3 : vector<1x8xf32> to vector<128x8xf32>
    %5 = arith.addf %2, %4 : vector<128x8xf32>
    %6 = arith.truncf %5 : vector<128x8xf32> to vector<128x8xbf16>
    %c0_5 = arith.constant 0 : index
    %c0_6 = arith.constant 0 : index
    %7 = vector.load %arg4[%c0_5, %c0_6] : memref<128x8xbf16, #tpu.memory_space<vmem>>, vector<128x8xbf16>
    tpu.vector_store %arg4[%c0_5, %c0_6], %6 {strides = array<i32>} : memref<128x8xbf16, #tpu.memory_space<vmem>>, vector<128x8xbf16>,
    return
  }
  func.func @transform_0(%arg0: i32) -> (i32, i32) {
    %c0_i32 = arith.constant 0 : i32
    %c0_i32_0 = arith.constant 0 : i32
    return %arg0, %c0_i32 : i32, i32
  }
  func.func @transform_1(%arg0: i32) -> (i32, i32) {
    %c0_i32 = arith.constant 0 : i32
    %c0_i32_0 = arith.constant 0 : i32
    %c0_i32_1 = arith.constant 0 : i32
    return %c0_i32, %c0_i32_0 : i32, i32
  }
  func.func @transform_2(%arg0: i32) -> (i32, i32) {
    %c0_i32 = arith.constant 0 : i32
    %c0_i32_0 = arith.constant 0 : i32
    %c0_i32_1 = arith.constant 0 : i32
    return %c0_i32, %c0_i32_0 : i32, i32
  }
  func.func @transform_3(%arg0: i32) -> (i32, i32) {
    %c0_i32 = arith.constant 0 : i32
    %c0_i32_0 = arith.constant 0 : i32
    return %arg0, %c0_i32 : i32, i32
  }
}

module attributes {stable_mosaic.version = 11 : i64} {
  func.func @_direct_conv3x3_kernel(%arg0: i32, %arg1: i32, %arg2: memref<1x104x8xbf16, #tpu.memory_space<vmem>>, %arg3: memref<9x8x8xbf16, #tpu.memory_space<vmem>>, %arg4: memref<1x8xf32, #tpu.memory_space<vmem>>, %arg5: memref<1x80x8xbf16, #tpu.memory_space<vmem>>, %arg6: memref<1x80x8xbf16, #tpu.memory_space<vmem>>) attributes {dimension_semantics = [#tpu.dimension_semantics<parallel>, #tpu.dimension_semantics<parallel>], iteration_bounds = array<i64: 2, 1>, scalar_prefetch = 0 : i64, scratch_operands = 0 : i64, tpu.core_type = #tpu.core_type<tc>, window_params = [{transform_indices = @transform_0, window_bounds = array<i64: 1, 104, 8>}, {transform_indices = @transform_1, window_bounds = array<i64: 9, 8, 8>}, {transform_indices = @transform_2, window_bounds = array<i64: 1, 8>}, {transform_indices = @transform_3, window_bounds = array<i64: 1, 80, 8>}, {transform_indices = @transform_4, window_bounds = array<i64: 1, 80, 8>}]} {
    %c0 = arith.constant 0 : index
    %c0_0 = arith.constant 0 : index
    %c0_1 = arith.constant 0 : index
    %0 = vector.load %arg2[%c0, %c0_0, %c0_1] : memref<1x104x8xbf16, #tpu.memory_space<vmem>>, vector<1x80x8xbf16>
    %1 = vector.shape_cast %0 : vector<1x80x8xbf16> to vector<80x8xbf16>
    %c0_2 = arith.constant 0 : index
    %c0_3 = arith.constant 0 : index
    %c0_4 = arith.constant 0 : index
    %2 = vector.load %arg3[%c0_2, %c0_3, %c0_4] : memref<9x8x8xbf16, #tpu.memory_space<vmem>>, vector<1x8x8xbf16>
    %3 = vector.shape_cast %2 : vector<1x8x8xbf16> to vector<8x8xbf16>
    %cst = arith.constant dense<0.000000e+00> : vector<80x8xf32>
    %4 = tpu.matmul %1, %3, %cst {dimension_numbers = #tpu.dot_dimension_numbers<[1], [0], [0], [1], [0, 0, 1, 1], [], []>} : vector<80x8xbf16>, vector<8x8xbf16>, vector<80x8xf32> -> vector<80x8xf32>
    %c0_5 = arith.constant 0 : index
    %c1 = arith.constant 1 : index
    %c0_6 = arith.constant 0 : index
    %5 = vector.load %arg2[%c0_5, %c1, %c0_6] : memref<1x104x8xbf16, #tpu.memory_space<vmem>>, vector<1x80x8xbf16>
    %6 = vector.shape_cast %5 : vector<1x80x8xbf16> to vector<80x8xbf16>
    %c1_7 = arith.constant 1 : index
    %c0_8 = arith.constant 0 : index
    %c0_9 = arith.constant 0 : index
    %7 = vector.load %arg3[%c1_7, %c0_8, %c0_9] : memref<9x8x8xbf16, #tpu.memory_space<vmem>>, vector<1x8x8xbf16>
    %8 = vector.shape_cast %7 : vector<1x8x8xbf16> to vector<8x8xbf16>
    %cst_10 = arith.constant dense<0.000000e+00> : vector<80x8xf32>
    %9 = tpu.matmul %6, %8, %cst_10 {dimension_numbers = #tpu.dot_dimension_numbers<[1], [0], [0], [1], [0, 0, 1, 1], [], []>} : vector<80x8xbf16>, vector<8x8xbf16>, vector<80x8xf32> -> vector<80x8xf32>
    %10 = arith.addf %4, %9 : vector<80x8xf32>
    %c0_11 = arith.constant 0 : index
    %c2 = arith.constant 2 : index
    %c0_12 = arith.constant 0 : index
    %11 = vector.load %arg2[%c0_11, %c2, %c0_12] : memref<1x104x8xbf16, #tpu.memory_space<vmem>>, vector<1x80x8xbf16>
    %12 = vector.shape_cast %11 : vector<1x80x8xbf16> to vector<80x8xbf16>
    %c2_13 = arith.constant 2 : index
    %c0_14 = arith.constant 0 : index
    %c0_15 = arith.constant 0 : index
    %13 = vector.load %arg3[%c2_13, %c0_14, %c0_15] : memref<9x8x8xbf16, #tpu.memory_space<vmem>>, vector<1x8x8xbf16>
    %14 = vector.shape_cast %13 : vector<1x8x8xbf16> to vector<8x8xbf16>
    %cst_16 = arith.constant dense<0.000000e+00> : vector<80x8xf32>
    %15 = tpu.matmul %12, %14, %cst_16 {dimension_numbers = #tpu.dot_dimension_numbers<[1], [0], [0], [1], [0, 0, 1, 1], [], []>} : vector<80x8xbf16>, vector<8x8xbf16>, vector<80x8xf32> -> vector<80x8xf32>
    %16 = arith.addf %10, %15 : vector<80x8xf32>
    %c0_17 = arith.constant 0 : index
    %c10 = arith.constant 10 : index
    %c0_18 = arith.constant 0 : index
    %17 = vector.load %arg2[%c0_17, %c10, %c0_18] : memref<1x104x8xbf16, #tpu.memory_space<vmem>>, vector<1x80x8xbf16>
    %18 = vector.shape_cast %17 : vector<1x80x8xbf16> to vector<80x8xbf16>
    %c3 = arith.constant 3 : index
    %c0_19 = arith.constant 0 : index
    %c0_20 = arith.constant 0 : index
    %19 = vector.load %arg3[%c3, %c0_19, %c0_20] : memref<9x8x8xbf16, #tpu.memory_space<vmem>>, vector<1x8x8xbf16>
    %20 = vector.shape_cast %19 : vector<1x8x8xbf16> to vector<8x8xbf16>
    %cst_21 = arith.constant dense<0.000000e+00> : vector<80x8xf32>
    %21 = tpu.matmul %18, %20, %cst_21 {dimension_numbers = #tpu.dot_dimension_numbers<[1], [0], [0], [1], [0, 0, 1, 1], [], []>} : vector<80x8xbf16>, vector<8x8xbf16>, vector<80x8xf32> -> vector<80x8xf32>
    %22 = arith.addf %16, %21 : vector<80x8xf32>
    %c0_22 = arith.constant 0 : index
    %c11 = arith.constant 11 : index
    %c0_23 = arith.constant 0 : index
    %23 = vector.load %arg2[%c0_22, %c11, %c0_23] : memref<1x104x8xbf16, #tpu.memory_space<vmem>>, vector<1x80x8xbf16>
    %24 = vector.shape_cast %23 : vector<1x80x8xbf16> to vector<80x8xbf16>
    %c4 = arith.constant 4 : index
    %c0_24 = arith.constant 0 : index
    %c0_25 = arith.constant 0 : index
    %25 = vector.load %arg3[%c4, %c0_24, %c0_25] : memref<9x8x8xbf16, #tpu.memory_space<vmem>>, vector<1x8x8xbf16>
    %26 = vector.shape_cast %25 : vector<1x8x8xbf16> to vector<8x8xbf16>
    %cst_26 = arith.constant dense<0.000000e+00> : vector<80x8xf32>
    %27 = tpu.matmul %24, %26, %cst_26 {dimension_numbers = #tpu.dot_dimension_numbers<[1], [0], [0], [1], [0, 0, 1, 1], [], []>} : vector<80x8xbf16>, vector<8x8xbf16>, vector<80x8xf32> -> vector<80x8xf32>
    %28 = arith.addf %22, %27 : vector<80x8xf32>
    %c0_27 = arith.constant 0 : index
    %c12 = arith.constant 12 : index
    %c0_28 = arith.constant 0 : index
    %29 = vector.load %arg2[%c0_27, %c12, %c0_28] : memref<1x104x8xbf16, #tpu.memory_space<vmem>>, vector<1x80x8xbf16>
    %30 = vector.shape_cast %29 : vector<1x80x8xbf16> to vector<80x8xbf16>
    %c5 = arith.constant 5 : index
    %c0_29 = arith.constant 0 : index
    %c0_30 = arith.constant 0 : index
    %31 = vector.load %arg3[%c5, %c0_29, %c0_30] : memref<9x8x8xbf16, #tpu.memory_space<vmem>>, vector<1x8x8xbf16>
    %32 = vector.shape_cast %31 : vector<1x8x8xbf16> to vector<8x8xbf16>
    %cst_31 = arith.constant dense<0.000000e+00> : vector<80x8xf32>
    %33 = tpu.matmul %30, %32, %cst_31 {dimension_numbers = #tpu.dot_dimension_numbers<[1], [0], [0], [1], [0, 0, 1, 1], [], []>} : vector<80x8xbf16>, vector<8x8xbf16>, vector<80x8xf32> -> vector<80x8xf32>
    %34 = arith.addf %28, %33 : vector<80x8xf32>
    %c0_32 = arith.constant 0 : index
    %c20 = arith.constant 20 : index
    %c0_33 = arith.constant 0 : index
    %35 = vector.load %arg2[%c0_32, %c20, %c0_33] : memref<1x104x8xbf16, #tpu.memory_space<vmem>>, vector<1x80x8xbf16>
    %36 = vector.shape_cast %35 : vector<1x80x8xbf16> to vector<80x8xbf16>
    %c6 = arith.constant 6 : index
    %c0_34 = arith.constant 0 : index
    %c0_35 = arith.constant 0 : index
    %37 = vector.load %arg3[%c6, %c0_34, %c0_35] : memref<9x8x8xbf16, #tpu.memory_space<vmem>>, vector<1x8x8xbf16>
    %38 = vector.shape_cast %37 : vector<1x8x8xbf16> to vector<8x8xbf16>
    %cst_36 = arith.constant dense<0.000000e+00> : vector<80x8xf32>
    %39 = tpu.matmul %36, %38, %cst_36 {dimension_numbers = #tpu.dot_dimension_numbers<[1], [0], [0], [1], [0, 0, 1, 1], [], []>} : vector<80x8xbf16>, vector<8x8xbf16>, vector<80x8xf32> -> vector<80x8xf32>
    %40 = arith.addf %34, %39 : vector<80x8xf32>
    %c0_37 = arith.constant 0 : index
    %c21 = arith.constant 21 : index
    %c0_38 = arith.constant 0 : index
    %41 = vector.load %arg2[%c0_37, %c21, %c0_38] : memref<1x104x8xbf16, #tpu.memory_space<vmem>>, vector<1x80x8xbf16>
    %42 = vector.shape_cast %41 : vector<1x80x8xbf16> to vector<80x8xbf16>
    %c7 = arith.constant 7 : index
    %c0_39 = arith.constant 0 : index
    %c0_40 = arith.constant 0 : index
    %43 = vector.load %arg3[%c7, %c0_39, %c0_40] : memref<9x8x8xbf16, #tpu.memory_space<vmem>>, vector<1x8x8xbf16>
    %44 = vector.shape_cast %43 : vector<1x8x8xbf16> to vector<8x8xbf16>
    %cst_41 = arith.constant dense<0.000000e+00> : vector<80x8xf32>
    %45 = tpu.matmul %42, %44, %cst_41 {dimension_numbers = #tpu.dot_dimension_numbers<[1], [0], [0], [1], [0, 0, 1, 1], [], []>} : vector<80x8xbf16>, vector<8x8xbf16>, vector<80x8xf32> -> vector<80x8xf32>
    %46 = arith.addf %40, %45 : vector<80x8xf32>
    %c0_42 = arith.constant 0 : index
    %c22 = arith.constant 22 : index
    %c0_43 = arith.constant 0 : index
    %47 = vector.load %arg2[%c0_42, %c22, %c0_43] : memref<1x104x8xbf16, #tpu.memory_space<vmem>>, vector<1x80x8xbf16>
    %48 = vector.shape_cast %47 : vector<1x80x8xbf16> to vector<80x8xbf16>
    %c8 = arith.constant 8 : index
    %c0_44 = arith.constant 0 : index
    %c0_45 = arith.constant 0 : index
    %49 = vector.load %arg3[%c8, %c0_44, %c0_45] : memref<9x8x8xbf16, #tpu.memory_space<vmem>>, vector<1x8x8xbf16>
    %50 = vector.shape_cast %49 : vector<1x8x8xbf16> to vector<8x8xbf16>
    %cst_46 = arith.constant dense<0.000000e+00> : vector<80x8xf32>
    %51 = tpu.matmul %48, %50, %cst_46 {dimension_numbers = #tpu.dot_dimension_numbers<[1], [0], [0], [1], [0, 0, 1, 1], [], []>} : vector<80x8xbf16>, vector<8x8xbf16>, vector<80x8xf32> -> vector<80x8xf32>
    %52 = arith.addf %46, %51 : vector<80x8xf32>
    %c0_47 = arith.constant 0 : index
    %c0_48 = arith.constant 0 : index
    %53 = vector.load %arg4[%c0_47, %c0_48] : memref<1x8xf32, #tpu.memory_space<vmem>>, vector<1x8xf32>
    %54 = vector.broadcast %53 : vector<1x8xf32> to vector<80x8xf32>
    %55 = arith.addf %52, %54 : vector<80x8xf32>
    %c0_49 = arith.constant 0 : index
    %c0_50 = arith.constant 0 : index
    %c0_51 = arith.constant 0 : index
    %56 = vector.load %arg5[%c0_49, %c0_50, %c0_51] : memref<1x80x8xbf16, #tpu.memory_space<vmem>>, vector<1x80x8xbf16>
    %57 = vector.shape_cast %56 : vector<1x80x8xbf16> to vector<80x8xbf16>
    %58 = arith.extf %57 : vector<80x8xbf16> to vector<80x8xf32>
    %59 = arith.addf %55, %58 : vector<80x8xf32>
    %cst_52 = arith.constant 0.000000e+00 : f32
    %60 = vector.broadcast %cst_52 : f32 to vector<80x8xf32>
    %61 = arith.maximumf %59, %60 : vector<80x8xf32>
    %62 = arith.truncf %61 : vector<80x8xf32> to vector<80x8xbf16>
    %c0_53 = arith.constant 0 : index
    %c0_54 = arith.constant 0 : index
    %c0_55 = arith.constant 0 : index
    %63 = vector.load %arg6[%c0_53, %c0_54, %c0_55] : memref<1x80x8xbf16, #tpu.memory_space<vmem>>, vector<1x80x8xbf16>
    %64 = vector.shape_cast %63 : vector<1x80x8xbf16> to vector<80x8xbf16>
    %65 = vector.shape_cast %62 : vector<80x8xbf16> to vector<1x80x8xbf16>
    tpu.vector_store %arg6[%c0_53, %c0_54, %c0_55], %65 {strides = array<i32>} : memref<1x80x8xbf16, #tpu.memory_space<vmem>>, vector<1x80x8xbf16>,
    return
  }
  func.func @transform_0(%arg0: i32, %arg1: i32) -> (i32, i32, i32) {
    %c0_i32 = arith.constant 0 : i32
    %c0_i32_0 = arith.constant 0 : i32
    %c0_i32_1 = arith.constant 0 : i32
    return %arg0, %c0_i32, %c0_i32_0 : i32, i32, i32
  }
  func.func @transform_1(%arg0: i32, %arg1: i32) -> (i32, i32, i32) {
    %c0_i32 = arith.constant 0 : i32
    %c0_i32_0 = arith.constant 0 : i32
    %c0_i32_1 = arith.constant 0 : i32
    return %c0_i32, %c0_i32_0, %arg1 : i32, i32, i32
  }
  func.func @transform_2(%arg0: i32, %arg1: i32) -> (i32, i32) {
    %c0_i32 = arith.constant 0 : i32
    %c0_i32_0 = arith.constant 0 : i32
    return %c0_i32, %arg1 : i32, i32
  }
  func.func @transform_3(%arg0: i32, %arg1: i32) -> (i32, i32, i32) {
    %c0_i32 = arith.constant 0 : i32
    %c0_i32_0 = arith.constant 0 : i32
    return %arg0, %c0_i32, %arg1 : i32, i32, i32
  }
  func.func @transform_4(%arg0: i32, %arg1: i32) -> (i32, i32, i32) {
    %c0_i32 = arith.constant 0 : i32
    %c0_i32_0 = arith.constant 0 : i32
    return %arg0, %c0_i32, %arg1 : i32, i32, i32
  }
}

module attributes {stable_mosaic.version = 11 : i64} {
  func.func @_direct_conv3x3_kernel(%arg0: i32, %arg1: i32, %arg2: memref<1x104x8xbf16, #tpu.memory_space<vmem>>, %arg3: memref<9x8x8xbf16, #tpu.memory_space<vmem>>, %arg4: memref<1x8xf32, #tpu.memory_space<vmem>>, %arg5: memref<1x80x8xbf16, #tpu.memory_space<vmem>>, %arg6: memref<1x80x8xf32, #tpu.memory_space<vmem>>) attributes {dimension_semantics = [#tpu.dimension_semantics<parallel>, #tpu.dimension_semantics<parallel>], iteration_bounds = array<i64: 2, 1>, scalar_prefetch = 0 : i64, scratch_operands = 0 : i64, tpu.core_type = #tpu.core_type<tc>, window_params = [{transform_indices = @transform_0, window_bounds = array<i64: 1, 104, 8>}, {transform_indices = @transform_1, window_bounds = array<i64: 9, 8, 8>}, {transform_indices = @transform_2, window_bounds = array<i64: 1, 8>}, {transform_indices = @transform_3, window_bounds = array<i64: 1, 80, 8>}, {transform_indices = @transform_4, window_bounds = array<i64: 1, 80, 8>}]} {
    %c0 = arith.constant 0 : index
    %c0_0 = arith.constant 0 : index
    %c0_1 = arith.constant 0 : index
    %0 = vector.load %arg2[%c0, %c0_0, %c0_1] : memref<1x104x8xbf16, #tpu.memory_space<vmem>>, vector<1x80x8xbf16>
    %1 = vector.shape_cast %0 : vector<1x80x8xbf16> to vector<80x8xbf16>
    %c0_2 = arith.constant 0 : index
    %c0_3 = arith.constant 0 : index
    %c0_4 = arith.constant 0 : index
    %2 = vector.load %arg3[%c0_2, %c0_3, %c0_4] : memref<9x8x8xbf16, #tpu.memory_space<vmem>>, vector<1x8x8xbf16>
    %3 = vector.shape_cast %2 : vector<1x8x8xbf16> to vector<8x8xbf16>
    %cst = arith.constant dense<0.000000e+00> : vector<80x8xf32>
    %4 = tpu.matmul %1, %3, %cst {dimension_numbers = #tpu.dot_dimension_numbers<[1], [0], [0], [1], [0, 0, 1, 1], [], []>} : vector<80x8xbf16>, vector<8x8xbf16>, vector<80x8xf32> -> vector<80x8xf32>
    %c0_5 = arith.constant 0 : index
    %c1 = arith.constant 1 : index
    %c0_6 = arith.constant 0 : index
    %5 = vector.load %arg2[%c0_5, %c1, %c0_6] : memref<1x104x8xbf16, #tpu.memory_space<vmem>>, vector<1x80x8xbf16>
    %6 = vector.shape_cast %5 : vector<1x80x8xbf16> to vector<80x8xbf16>
    %c1_7 = arith.constant 1 : index
    %c0_8 = arith.constant 0 : index
    %c0_9 = arith.constant 0 : index
    %7 = vector.load %arg3[%c1_7, %c0_8, %c0_9] : memref<9x8x8xbf16, #tpu.memory_space<vmem>>, vector<1x8x8xbf16>
    %8 = vector.shape_cast %7 : vector<1x8x8xbf16> to vector<8x8xbf16>
    %cst_10 = arith.constant dense<0.000000e+00> : vector<80x8xf32>
    %9 = tpu.matmul %6, %8, %cst_10 {dimension_numbers = #tpu.dot_dimension_numbers<[1], [0], [0], [1], [0, 0, 1, 1], [], []>} : vector<80x8xbf16>, vector<8x8xbf16>, vector<80x8xf32> -> vector<80x8xf32>
    %10 = arith.addf %4, %9 : vector<80x8xf32>
    %c0_11 = arith.constant 0 : index
    %c2 = arith.constant 2 : index
    %c0_12 = arith.constant 0 : index
    %11 = vector.load %arg2[%c0_11, %c2, %c0_12] : memref<1x104x8xbf16, #tpu.memory_space<vmem>>, vector<1x80x8xbf16>
    %12 = vector.shape_cast %11 : vector<1x80x8xbf16> to vector<80x8xbf16>
    %c2_13 = arith.constant 2 : index
    %c0_14 = arith.constant 0 : index
    %c0_15 = arith.constant 0 : index
    %13 = vector.load %arg3[%c2_13, %c0_14, %c0_15] : memref<9x8x8xbf16, #tpu.memory_space<vmem>>, vector<1x8x8xbf16>
    %14 = vector.shape_cast %13 : vector<1x8x8xbf16> to vector<8x8xbf16>
    %cst_16 = arith.constant dense<0.000000e+00> : vector<80x8xf32>
    %15 = tpu.matmul %12, %14, %cst_16 {dimension_numbers = #tpu.dot_dimension_numbers<[1], [0], [0], [1], [0, 0, 1, 1], [], []>} : vector<80x8xbf16>, vector<8x8xbf16>, vector<80x8xf32> -> vector<80x8xf32>
    %16 = arith.addf %10, %15 : vector<80x8xf32>
    %c0_17 = arith.constant 0 : index
    %c10 = arith.constant 10 : index
    %c0_18 = arith.constant 0 : index
    %17 = vector.load %arg2[%c0_17, %c10, %c0_18] : memref<1x104x8xbf16, #tpu.memory_space<vmem>>, vector<1x80x8xbf16>
    %18 = vector.shape_cast %17 : vector<1x80x8xbf16> to vector<80x8xbf16>
    %c3 = arith.constant 3 : index
    %c0_19 = arith.constant 0 : index
    %c0_20 = arith.constant 0 : index
    %19 = vector.load %arg3[%c3, %c0_19, %c0_20] : memref<9x8x8xbf16, #tpu.memory_space<vmem>>, vector<1x8x8xbf16>
    %20 = vector.shape_cast %19 : vector<1x8x8xbf16> to vector<8x8xbf16>
    %cst_21 = arith.constant dense<0.000000e+00> : vector<80x8xf32>
    %21 = tpu.matmul %18, %20, %cst_21 {dimension_numbers = #tpu.dot_dimension_numbers<[1], [0], [0], [1], [0, 0, 1, 1], [], []>} : vector<80x8xbf16>, vector<8x8xbf16>, vector<80x8xf32> -> vector<80x8xf32>
    %22 = arith.addf %16, %21 : vector<80x8xf32>
    %c0_22 = arith.constant 0 : index
    %c11 = arith.constant 11 : index
    %c0_23 = arith.constant 0 : index
    %23 = vector.load %arg2[%c0_22, %c11, %c0_23] : memref<1x104x8xbf16, #tpu.memory_space<vmem>>, vector<1x80x8xbf16>
    %24 = vector.shape_cast %23 : vector<1x80x8xbf16> to vector<80x8xbf16>
    %c4 = arith.constant 4 : index
    %c0_24 = arith.constant 0 : index
    %c0_25 = arith.constant 0 : index
    %25 = vector.load %arg3[%c4, %c0_24, %c0_25] : memref<9x8x8xbf16, #tpu.memory_space<vmem>>, vector<1x8x8xbf16>
    %26 = vector.shape_cast %25 : vector<1x8x8xbf16> to vector<8x8xbf16>
    %cst_26 = arith.constant dense<0.000000e+00> : vector<80x8xf32>
    %27 = tpu.matmul %24, %26, %cst_26 {dimension_numbers = #tpu.dot_dimension_numbers<[1], [0], [0], [1], [0, 0, 1, 1], [], []>} : vector<80x8xbf16>, vector<8x8xbf16>, vector<80x8xf32> -> vector<80x8xf32>
    %28 = arith.addf %22, %27 : vector<80x8xf32>
    %c0_27 = arith.constant 0 : index
    %c12 = arith.constant 12 : index
    %c0_28 = arith.constant 0 : index
    %29 = vector.load %arg2[%c0_27, %c12, %c0_28] : memref<1x104x8xbf16, #tpu.memory_space<vmem>>, vector<1x80x8xbf16>
    %30 = vector.shape_cast %29 : vector<1x80x8xbf16> to vector<80x8xbf16>
    %c5 = arith.constant 5 : index
    %c0_29 = arith.constant 0 : index
    %c0_30 = arith.constant 0 : index
    %31 = vector.load %arg3[%c5, %c0_29, %c0_30] : memref<9x8x8xbf16, #tpu.memory_space<vmem>>, vector<1x8x8xbf16>
    %32 = vector.shape_cast %31 : vector<1x8x8xbf16> to vector<8x8xbf16>
    %cst_31 = arith.constant dense<0.000000e+00> : vector<80x8xf32>
    %33 = tpu.matmul %30, %32, %cst_31 {dimension_numbers = #tpu.dot_dimension_numbers<[1], [0], [0], [1], [0, 0, 1, 1], [], []>} : vector<80x8xbf16>, vector<8x8xbf16>, vector<80x8xf32> -> vector<80x8xf32>
    %34 = arith.addf %28, %33 : vector<80x8xf32>
    %c0_32 = arith.constant 0 : index
    %c20 = arith.constant 20 : index
    %c0_33 = arith.constant 0 : index
    %35 = vector.load %arg2[%c0_32, %c20, %c0_33] : memref<1x104x8xbf16, #tpu.memory_space<vmem>>, vector<1x80x8xbf16>
    %36 = vector.shape_cast %35 : vector<1x80x8xbf16> to vector<80x8xbf16>
    %c6 = arith.constant 6 : index
    %c0_34 = arith.constant 0 : index
    %c0_35 = arith.constant 0 : index
    %37 = vector.load %arg3[%c6, %c0_34, %c0_35] : memref<9x8x8xbf16, #tpu.memory_space<vmem>>, vector<1x8x8xbf16>
    %38 = vector.shape_cast %37 : vector<1x8x8xbf16> to vector<8x8xbf16>
    %cst_36 = arith.constant dense<0.000000e+00> : vector<80x8xf32>
    %39 = tpu.matmul %36, %38, %cst_36 {dimension_numbers = #tpu.dot_dimension_numbers<[1], [0], [0], [1], [0, 0, 1, 1], [], []>} : vector<80x8xbf16>, vector<8x8xbf16>, vector<80x8xf32> -> vector<80x8xf32>
    %40 = arith.addf %34, %39 : vector<80x8xf32>
    %c0_37 = arith.constant 0 : index
    %c21 = arith.constant 21 : index
    %c0_38 = arith.constant 0 : index
    %41 = vector.load %arg2[%c0_37, %c21, %c0_38] : memref<1x104x8xbf16, #tpu.memory_space<vmem>>, vector<1x80x8xbf16>
    %42 = vector.shape_cast %41 : vector<1x80x8xbf16> to vector<80x8xbf16>
    %c7 = arith.constant 7 : index
    %c0_39 = arith.constant 0 : index
    %c0_40 = arith.constant 0 : index
    %43 = vector.load %arg3[%c7, %c0_39, %c0_40] : memref<9x8x8xbf16, #tpu.memory_space<vmem>>, vector<1x8x8xbf16>
    %44 = vector.shape_cast %43 : vector<1x8x8xbf16> to vector<8x8xbf16>
    %cst_41 = arith.constant dense<0.000000e+00> : vector<80x8xf32>
    %45 = tpu.matmul %42, %44, %cst_41 {dimension_numbers = #tpu.dot_dimension_numbers<[1], [0], [0], [1], [0, 0, 1, 1], [], []>} : vector<80x8xbf16>, vector<8x8xbf16>, vector<80x8xf32> -> vector<80x8xf32>
    %46 = arith.addf %40, %45 : vector<80x8xf32>
    %c0_42 = arith.constant 0 : index
    %c22 = arith.constant 22 : index
    %c0_43 = arith.constant 0 : index
    %47 = vector.load %arg2[%c0_42, %c22, %c0_43] : memref<1x104x8xbf16, #tpu.memory_space<vmem>>, vector<1x80x8xbf16>
    %48 = vector.shape_cast %47 : vector<1x80x8xbf16> to vector<80x8xbf16>
    %c8 = arith.constant 8 : index
    %c0_44 = arith.constant 0 : index
    %c0_45 = arith.constant 0 : index
    %49 = vector.load %arg3[%c8, %c0_44, %c0_45] : memref<9x8x8xbf16, #tpu.memory_space<vmem>>, vector<1x8x8xbf16>
    %50 = vector.shape_cast %49 : vector<1x8x8xbf16> to vector<8x8xbf16>
    %cst_46 = arith.constant dense<0.000000e+00> : vector<80x8xf32>
    %51 = tpu.matmul %48, %50, %cst_46 {dimension_numbers = #tpu.dot_dimension_numbers<[1], [0], [0], [1], [0, 0, 1, 1], [], []>} : vector<80x8xbf16>, vector<8x8xbf16>, vector<80x8xf32> -> vector<80x8xf32>
    %52 = arith.addf %46, %51 : vector<80x8xf32>
    %c0_47 = arith.constant 0 : index
    %c0_48 = arith.constant 0 : index
    %53 = vector.load %arg4[%c0_47, %c0_48] : memref<1x8xf32, #tpu.memory_space<vmem>>, vector<1x8xf32>
    %54 = vector.broadcast %53 : vector<1x8xf32> to vector<80x8xf32>
    %55 = arith.addf %52, %54 : vector<80x8xf32>
    %c0_49 = arith.constant 0 : index
    %c0_50 = arith.constant 0 : index
    %c0_51 = arith.constant 0 : index
    %56 = vector.load %arg5[%c0_49, %c0_50, %c0_51] : memref<1x80x8xbf16, #tpu.memory_space<vmem>>, vector<1x80x8xbf16>
    %57 = vector.shape_cast %56 : vector<1x80x8xbf16> to vector<80x8xbf16>
    %58 = arith.extf %57 : vector<80x8xbf16> to vector<80x8xf32>
    %59 = arith.addf %55, %58 : vector<80x8xf32>
    %cst_52 = arith.constant 0.000000e+00 : f32
    %60 = vector.broadcast %cst_52 : f32 to vector<80x8xf32>
    %61 = arith.maximumf %59, %60 : vector<80x8xf32>
    %c0_53 = arith.constant 0 : index
    %c0_54 = arith.constant 0 : index
    %c0_55 = arith.constant 0 : index
    %62 = vector.load %arg6[%c0_53, %c0_54, %c0_55] : memref<1x80x8xf32, #tpu.memory_space<vmem>>, vector<1x80x8xf32>
    %63 = vector.shape_cast %62 : vector<1x80x8xf32> to vector<80x8xf32>
    %64 = vector.shape_cast %61 : vector<80x8xf32> to vector<1x80x8xf32>
    tpu.vector_store %arg6[%c0_53, %c0_54, %c0_55], %64 {strides = array<i32>} : memref<1x80x8xf32, #tpu.memory_space<vmem>>, vector<1x80x8xf32>,
    return
  }
  func.func @transform_0(%arg0: i32, %arg1: i32) -> (i32, i32, i32) {
    %c0_i32 = arith.constant 0 : i32
    %c0_i32_0 = arith.constant 0 : i32
    %c0_i32_1 = arith.constant 0 : i32
    return %arg0, %c0_i32, %c0_i32_0 : i32, i32, i32
  }
  func.func @transform_1(%arg0: i32, %arg1: i32) -> (i32, i32, i32) {
    %c0_i32 = arith.constant 0 : i32
    %c0_i32_0 = arith.constant 0 : i32
    %c0_i32_1 = arith.constant 0 : i32
    return %c0_i32, %c0_i32_0, %arg1 : i32, i32, i32
  }
  func.func @transform_2(%arg0: i32, %arg1: i32) -> (i32, i32) {
    %c0_i32 = arith.constant 0 : i32
    %c0_i32_0 = arith.constant 0 : i32
    return %c0_i32, %arg1 : i32, i32
  }
  func.func @transform_3(%arg0: i32, %arg1: i32) -> (i32, i32, i32) {
    %c0_i32 = arith.constant 0 : i32
    %c0_i32_0 = arith.constant 0 : i32
    return %arg0, %c0_i32, %arg1 : i32, i32, i32
  }
  func.func @transform_4(%arg0: i32, %arg1: i32) -> (i32, i32, i32) {
    %c0_i32 = arith.constant 0 : i32
    %c0_i32_0 = arith.constant 0 : i32
    return %arg0, %c0_i32, %arg1 : i32, i32, i32
  }
}

module attributes {stable_mosaic.version = 11 : i64} {
  func.func @_direct_conv3x3_kernel(%arg0: i32, %arg1: i32, %arg2: memref<1x104x8xbf16, #tpu.memory_space<vmem>>, %arg3: memref<9x8x8xbf16, #tpu.memory_space<vmem>>, %arg4: memref<1x8xf32, #tpu.memory_space<vmem>>, %arg5: memref<1x80x8xbf16, #tpu.memory_space<vmem>>) attributes {dimension_semantics = [#tpu.dimension_semantics<parallel>, #tpu.dimension_semantics<parallel>], iteration_bounds = array<i64: 2, 1>, scalar_prefetch = 0 : i64, scratch_operands = 0 : i64, tpu.core_type = #tpu.core_type<tc>, window_params = [{transform_indices = @transform_0, window_bounds = array<i64: 1, 104, 8>}, {transform_indices = @transform_1, window_bounds = array<i64: 9, 8, 8>}, {transform_indices = @transform_2, window_bounds = array<i64: 1, 8>}, {transform_indices = @transform_3, window_bounds = array<i64: 1, 80, 8>}]} {
    %c0 = arith.constant 0 : index
    %c0_0 = arith.constant 0 : index
    %c0_1 = arith.constant 0 : index
    %0 = vector.load %arg2[%c0, %c0_0, %c0_1] : memref<1x104x8xbf16, #tpu.memory_space<vmem>>, vector<1x80x8xbf16>
    %1 = vector.shape_cast %0 : vector<1x80x8xbf16> to vector<80x8xbf16>
    %c0_2 = arith.constant 0 : index
    %c0_3 = arith.constant 0 : index
    %c0_4 = arith.constant 0 : index
    %2 = vector.load %arg3[%c0_2, %c0_3, %c0_4] : memref<9x8x8xbf16, #tpu.memory_space<vmem>>, vector<1x8x8xbf16>
    %3 = vector.shape_cast %2 : vector<1x8x8xbf16> to vector<8x8xbf16>
    %cst = arith.constant dense<0.000000e+00> : vector<80x8xf32>
    %4 = tpu.matmul %1, %3, %cst {dimension_numbers = #tpu.dot_dimension_numbers<[1], [0], [0], [1], [0, 0, 1, 1], [], []>} : vector<80x8xbf16>, vector<8x8xbf16>, vector<80x8xf32> -> vector<80x8xf32>
    %c0_5 = arith.constant 0 : index
    %c1 = arith.constant 1 : index
    %c0_6 = arith.constant 0 : index
    %5 = vector.load %arg2[%c0_5, %c1, %c0_6] : memref<1x104x8xbf16, #tpu.memory_space<vmem>>, vector<1x80x8xbf16>
    %6 = vector.shape_cast %5 : vector<1x80x8xbf16> to vector<80x8xbf16>
    %c1_7 = arith.constant 1 : index
    %c0_8 = arith.constant 0 : index
    %c0_9 = arith.constant 0 : index
    %7 = vector.load %arg3[%c1_7, %c0_8, %c0_9] : memref<9x8x8xbf16, #tpu.memory_space<vmem>>, vector<1x8x8xbf16>
    %8 = vector.shape_cast %7 : vector<1x8x8xbf16> to vector<8x8xbf16>
    %cst_10 = arith.constant dense<0.000000e+00> : vector<80x8xf32>
    %9 = tpu.matmul %6, %8, %cst_10 {dimension_numbers = #tpu.dot_dimension_numbers<[1], [0], [0], [1], [0, 0, 1, 1], [], []>} : vector<80x8xbf16>, vector<8x8xbf16>, vector<80x8xf32> -> vector<80x8xf32>
    %10 = arith.addf %4, %9 : vector<80x8xf32>
    %c0_11 = arith.constant 0 : index
    %c2 = arith.constant 2 : index
    %c0_12 = arith.constant 0 : index
    %11 = vector.load %arg2[%c0_11, %c2, %c0_12] : memref<1x104x8xbf16, #tpu.memory_space<vmem>>, vector<1x80x8xbf16>
    %12 = vector.shape_cast %11 : vector<1x80x8xbf16> to vector<80x8xbf16>
    %c2_13 = arith.constant 2 : index
    %c0_14 = arith.constant 0 : index
    %c0_15 = arith.constant 0 : index
    %13 = vector.load %arg3[%c2_13, %c0_14, %c0_15] : memref<9x8x8xbf16, #tpu.memory_space<vmem>>, vector<1x8x8xbf16>
    %14 = vector.shape_cast %13 : vector<1x8x8xbf16> to vector<8x8xbf16>
    %cst_16 = arith.constant dense<0.000000e+00> : vector<80x8xf32>
    %15 = tpu.matmul %12, %14, %cst_16 {dimension_numbers = #tpu.dot_dimension_numbers<[1], [0], [0], [1], [0, 0, 1, 1], [], []>} : vector<80x8xbf16>, vector<8x8xbf16>, vector<80x8xf32> -> vector<80x8xf32>
    %16 = arith.addf %10, %15 : vector<80x8xf32>
    %c0_17 = arith.constant 0 : index
    %c10 = arith.constant 10 : index
    %c0_18 = arith.constant 0 : index
    %17 = vector.load %arg2[%c0_17, %c10, %c0_18] : memref<1x104x8xbf16, #tpu.memory_space<vmem>>, vector<1x80x8xbf16>
    %18 = vector.shape_cast %17 : vector<1x80x8xbf16> to vector<80x8xbf16>
    %c3 = arith.constant 3 : index
    %c0_19 = arith.constant 0 : index
    %c0_20 = arith.constant 0 : index
    %19 = vector.load %arg3[%c3, %c0_19, %c0_20] : memref<9x8x8xbf16, #tpu.memory_space<vmem>>, vector<1x8x8xbf16>
    %20 = vector.shape_cast %19 : vector<1x8x8xbf16> to vector<8x8xbf16>
    %cst_21 = arith.constant dense<0.000000e+00> : vector<80x8xf32>
    %21 = tpu.matmul %18, %20, %cst_21 {dimension_numbers = #tpu.dot_dimension_numbers<[1], [0], [0], [1], [0, 0, 1, 1], [], []>} : vector<80x8xbf16>, vector<8x8xbf16>, vector<80x8xf32> -> vector<80x8xf32>
    %22 = arith.addf %16, %21 : vector<80x8xf32>
    %c0_22 = arith.constant 0 : index
    %c11 = arith.constant 11 : index
    %c0_23 = arith.constant 0 : index
    %23 = vector.load %arg2[%c0_22, %c11, %c0_23] : memref<1x104x8xbf16, #tpu.memory_space<vmem>>, vector<1x80x8xbf16>
    %24 = vector.shape_cast %23 : vector<1x80x8xbf16> to vector<80x8xbf16>
    %c4 = arith.constant 4 : index
    %c0_24 = arith.constant 0 : index
    %c0_25 = arith.constant 0 : index
    %25 = vector.load %arg3[%c4, %c0_24, %c0_25] : memref<9x8x8xbf16, #tpu.memory_space<vmem>>, vector<1x8x8xbf16>
    %26 = vector.shape_cast %25 : vector<1x8x8xbf16> to vector<8x8xbf16>
    %cst_26 = arith.constant dense<0.000000e+00> : vector<80x8xf32>
    %27 = tpu.matmul %24, %26, %cst_26 {dimension_numbers = #tpu.dot_dimension_numbers<[1], [0], [0], [1], [0, 0, 1, 1], [], []>} : vector<80x8xbf16>, vector<8x8xbf16>, vector<80x8xf32> -> vector<80x8xf32>
    %28 = arith.addf %22, %27 : vector<80x8xf32>
    %c0_27 = arith.constant 0 : index
    %c12 = arith.constant 12 : index
    %c0_28 = arith.constant 0 : index
    %29 = vector.load %arg2[%c0_27, %c12, %c0_28] : memref<1x104x8xbf16, #tpu.memory_space<vmem>>, vector<1x80x8xbf16>
    %30 = vector.shape_cast %29 : vector<1x80x8xbf16> to vector<80x8xbf16>
    %c5 = arith.constant 5 : index
    %c0_29 = arith.constant 0 : index
    %c0_30 = arith.constant 0 : index
    %31 = vector.load %arg3[%c5, %c0_29, %c0_30] : memref<9x8x8xbf16, #tpu.memory_space<vmem>>, vector<1x8x8xbf16>
    %32 = vector.shape_cast %31 : vector<1x8x8xbf16> to vector<8x8xbf16>
    %cst_31 = arith.constant dense<0.000000e+00> : vector<80x8xf32>
    %33 = tpu.matmul %30, %32, %cst_31 {dimension_numbers = #tpu.dot_dimension_numbers<[1], [0], [0], [1], [0, 0, 1, 1], [], []>} : vector<80x8xbf16>, vector<8x8xbf16>, vector<80x8xf32> -> vector<80x8xf32>
    %34 = arith.addf %28, %33 : vector<80x8xf32>
    %c0_32 = arith.constant 0 : index
    %c20 = arith.constant 20 : index
    %c0_33 = arith.constant 0 : index
    %35 = vector.load %arg2[%c0_32, %c20, %c0_33] : memref<1x104x8xbf16, #tpu.memory_space<vmem>>, vector<1x80x8xbf16>
    %36 = vector.shape_cast %35 : vector<1x80x8xbf16> to vector<80x8xbf16>
    %c6 = arith.constant 6 : index
    %c0_34 = arith.constant 0 : index
    %c0_35 = arith.constant 0 : index
    %37 = vector.load %arg3[%c6, %c0_34, %c0_35] : memref<9x8x8xbf16, #tpu.memory_space<vmem>>, vector<1x8x8xbf16>
    %38 = vector.shape_cast %37 : vector<1x8x8xbf16> to vector<8x8xbf16>
    %cst_36 = arith.constant dense<0.000000e+00> : vector<80x8xf32>
    %39 = tpu.matmul %36, %38, %cst_36 {dimension_numbers = #tpu.dot_dimension_numbers<[1], [0], [0], [1], [0, 0, 1, 1], [], []>} : vector<80x8xbf16>, vector<8x8xbf16>, vector<80x8xf32> -> vector<80x8xf32>
    %40 = arith.addf %34, %39 : vector<80x8xf32>
    %c0_37 = arith.constant 0 : index
    %c21 = arith.constant 21 : index
    %c0_38 = arith.constant 0 : index
    %41 = vector.load %arg2[%c0_37, %c21, %c0_38] : memref<1x104x8xbf16, #tpu.memory_space<vmem>>, vector<1x80x8xbf16>
    %42 = vector.shape_cast %41 : vector<1x80x8xbf16> to vector<80x8xbf16>
    %c7 = arith.constant 7 : index
    %c0_39 = arith.constant 0 : index
    %c0_40 = arith.constant 0 : index
    %43 = vector.load %arg3[%c7, %c0_39, %c0_40] : memref<9x8x8xbf16, #tpu.memory_space<vmem>>, vector<1x8x8xbf16>
    %44 = vector.shape_cast %43 : vector<1x8x8xbf16> to vector<8x8xbf16>
    %cst_41 = arith.constant dense<0.000000e+00> : vector<80x8xf32>
    %45 = tpu.matmul %42, %44, %cst_41 {dimension_numbers = #tpu.dot_dimension_numbers<[1], [0], [0], [1], [0, 0, 1, 1], [], []>} : vector<80x8xbf16>, vector<8x8xbf16>, vector<80x8xf32> -> vector<80x8xf32>
    %46 = arith.addf %40, %45 : vector<80x8xf32>
    %c0_42 = arith.constant 0 : index
    %c22 = arith.constant 22 : index
    %c0_43 = arith.constant 0 : index
    %47 = vector.load %arg2[%c0_42, %c22, %c0_43] : memref<1x104x8xbf16, #tpu.memory_space<vmem>>, vector<1x80x8xbf16>
    %48 = vector.shape_cast %47 : vector<1x80x8xbf16> to vector<80x8xbf16>
    %c8 = arith.constant 8 : index
    %c0_44 = arith.constant 0 : index
    %c0_45 = arith.constant 0 : index
    %49 = vector.load %arg3[%c8, %c0_44, %c0_45] : memref<9x8x8xbf16, #tpu.memory_space<vmem>>, vector<1x8x8xbf16>
    %50 = vector.shape_cast %49 : vector<1x8x8xbf16> to vector<8x8xbf16>
    %cst_46 = arith.constant dense<0.000000e+00> : vector<80x8xf32>
    %51 = tpu.matmul %48, %50, %cst_46 {dimension_numbers = #tpu.dot_dimension_numbers<[1], [0], [0], [1], [0, 0, 1, 1], [], []>} : vector<80x8xbf16>, vector<8x8xbf16>, vector<80x8xf32> -> vector<80x8xf32>
    %52 = arith.addf %46, %51 : vector<80x8xf32>
    %c0_47 = arith.constant 0 : index
    %c0_48 = arith.constant 0 : index
    %53 = vector.load %arg4[%c0_47, %c0_48] : memref<1x8xf32, #tpu.memory_space<vmem>>, vector<1x8xf32>
    %54 = vector.broadcast %53 : vector<1x8xf32> to vector<80x8xf32>
    %55 = arith.addf %52, %54 : vector<80x8xf32>
    %cst_49 = arith.constant 0.000000e+00 : f32
    %56 = vector.broadcast %cst_49 : f32 to vector<80x8xf32>
    %57 = arith.maximumf %55, %56 : vector<80x8xf32>
    %58 = arith.truncf %57 : vector<80x8xf32> to vector<80x8xbf16>
    %c0_50 = arith.constant 0 : index
    %c0_51 = arith.constant 0 : index
    %c0_52 = arith.constant 0 : index
    %59 = vector.load %arg5[%c0_50, %c0_51, %c0_52] : memref<1x80x8xbf16, #tpu.memory_space<vmem>>, vector<1x80x8xbf16>
    %60 = vector.shape_cast %59 : vector<1x80x8xbf16> to vector<80x8xbf16>
    %61 = vector.shape_cast %58 : vector<80x8xbf16> to vector<1x80x8xbf16>
    tpu.vector_store %arg5[%c0_50, %c0_51, %c0_52], %61 {strides = array<i32>} : memref<1x80x8xbf16, #tpu.memory_space<vmem>>, vector<1x80x8xbf16>,
    return
  }
  func.func @transform_0(%arg0: i32, %arg1: i32) -> (i32, i32, i32) {
    %c0_i32 = arith.constant 0 : i32
    %c0_i32_0 = arith.constant 0 : i32
    %c0_i32_1 = arith.constant 0 : i32
    return %arg0, %c0_i32, %c0_i32_0 : i32, i32, i32
  }
  func.func @transform_1(%arg0: i32, %arg1: i32) -> (i32, i32, i32) {
    %c0_i32 = arith.constant 0 : i32
    %c0_i32_0 = arith.constant 0 : i32
    %c0_i32_1 = arith.constant 0 : i32
    return %c0_i32, %c0_i32_0, %arg1 : i32, i32, i32
  }
  func.func @transform_2(%arg0: i32, %arg1: i32) -> (i32, i32) {
    %c0_i32 = arith.constant 0 : i32
    %c0_i32_0 = arith.constant 0 : i32
    return %c0_i32, %arg1 : i32, i32
  }
  func.func @transform_3(%arg0: i32, %arg1: i32) -> (i32, i32, i32) {
    %c0_i32 = arith.constant 0 : i32
    %c0_i32_0 = arith.constant 0 : i32
    return %arg0, %c0_i32, %arg1 : i32, i32, i32
  }
}

</mosaic_0001>

<llo_original>
// kernel: reslayer_forward_nchw.5
$region0: #{reslayer_forward_nchw.5}
  #allocation0 [shape = 'u32[]', space=smem, size = 0x4, offset = 0x4, fixed_abs, tag = 'smem constant byte address 0x4 - core index']
  #allocation1 [shape = 'u32[72,128]{1,0:T(1,128)}', space=vmem, size = 0x9000, scoped, tag = 'internal scratch']
  %s0 = inlined_call_operand.vmem [shape: bf16[128,128], index: 0, kind: input, shape index: {}]
  %s1 = inlined_call_operand.vmem [shape: bf16[128,8], index: 1, kind: input, shape index: {}]
  %s2 = inlined_call_operand.vmem [shape: f32[1,8], index: 2, kind: input, shape index: {}]
  %s3 = inlined_call_operand.vmem [shape: bf16[128,8], index: 3, kind: output, shape index: {}]
  %s4 = sld [smem:[#allocation0]]
  $region22: #{reslayer_forward_nchw.5} parent=0
    _
  %s6 = ssub.s32 1, %s4
  %s7 = scalar_select 0, %s6, %s4
  // Predicated region
  $region2: #{reslayer_forward_nchw.5} parent=0 // pred_check
    _
  $region3: #{reslayer_forward_nchw.5} parent=0 // pred_check_branch
    %9 = sbr.rel (0) target = $region5
  $region4: #{reslayer_forward_nchw.5} parent=0 // pred_region
    _
  $region5: #{reslayer_forward_nchw.5} parent=0 // pred_fallthru
    _
  // Predicated region
  $region6: #{reslayer_forward_nchw.5} parent=0 // pred_check
    _
  $region7: #{reslayer_forward_nchw.5} parent=0 // pred_check_branch
    %11 = sbr.rel (0) target = $region9
  $region8: #{reslayer_forward_nchw.5} parent=0 // pred_region
    _
  $region9: #{reslayer_forward_nchw.5} parent=0 // pred_fallthru
    _
  // Predicated region
  $region10: #{reslayer_forward_nchw.5} parent=0 // pred_check
    _
  $region11: #{reslayer_forward_nchw.5} parent=0 // pred_check_branch
    %13 = sbr.rel (0) target = $region13
  $region12: #{reslayer_forward_nchw.5} parent=0 // pred_region
    _
  $region13: #{reslayer_forward_nchw.5} parent=0 // pred_fallthru
    _
  %v14 = vld [vmem:[%s0] sm:$0xf]
  %v15 = vld [vmem:[%s0 + $0x4] sm:$0xf]
  %v16 = vld [vmem:[%s0 + $0x8] sm:$0xf]
  %v17 = vld [vmem:[%s0 + $0xc] sm:$0xf]
  %v18 = vld [vmem:[%s0 + $0x10] sm:$0xf]
  %v19 = vld [vmem:[%s0 + $0x14] sm:$0xf]
  %v20 = vld [vmem:[%s0 + $0x18] sm:$0xf]
  %v21 = vld [vmem:[%s0 + $0x1c] sm:$0xf]
  %v22 = vld [vmem:[%s0 + $0x20] sm:$0xf]
  %v23 = vld [vmem:[%s0 + $0x24] sm:$0xf]
  %v24 = vld [vmem:[%s0 + $0x28] sm:$0xf]
  %v25 = vld [vmem:[%s0 + $0x2c] sm:$0xf]
  %v26 = vld [vmem:[%s0 + $0x30] sm:$0xf]
  %v27 = vld [vmem:[%s0 + $0x34] sm:$0xf]
  %v28 = vld [vmem:[%s0 + $0x38] sm:$0xf]
  %v29 = vld [vmem:[%s0 + $0x3c] sm:$0xf]
  %v30 = vld [vmem:[%s1] sm:$0xf]
  %v31 = vld [vmem:[%s1 + $0x4] sm:$0xf]
  %v32 = vld [vmem:[%s1 + $0x8] sm:$0xf]
  %v33 = vld [vmem:[%s1 + $0xc] sm:$0xf]
  %v34 = vld [vmem:[%s1 + $0x10] sm:$0xf]
  %v35 = vld [vmem:[%s1 + $0x14] sm:$0xf]
  %v36 = vld [vmem:[%s1 + $0x18] sm:$0xf]
  %v37 = vld [vmem:[%s1 + $0x1c] sm:$0xf]
  %v38 = vld [vmem:[%s1 + $0x20] sm:$0xf]
  %v39 = vld [vmem:[%s1 + $0x24] sm:$0xf]
  %v40 = vld [vmem:[%s1 + $0x28] sm:$0xf]
  %v41 = vld [vmem:[%s1 + $0x2c] sm:$0xf]
  %v42 = vld [vmem:[%s1 + $0x30] sm:$0xf]
  %v43 = vld [vmem:[%s1 + $0x34] sm:$0xf]
  %v44 = vld [vmem:[%s1 + $0x38] sm:$0xf]
  %v45 = vld [vmem:[%s1 + $0x3c] sm:$0xf]
  %v46 = vld [vmem:[%s2] sm:$0x1]
  %v48 = vperm.slane %v46, 0
  %v66 = vunpack.c.l.b16 %v14
  %v67 = vunpack.c.l.b16 %v15
  %v68 = vunpack.c.l.b16 %v16
  %v69 = vunpack.c.l.b16 %v17
  %v70 = vunpack.c.l.b16 %v18
  %v71 = vunpack.c.l.b16 %v19
  %v72 = vunpack.c.l.b16 %v20
  %v73 = vunpack.c.l.b16 %v21
  %v74 = vunpack.c.l.b16 %v22
  %v75 = vunpack.c.l.b16 %v23
  %v76 = vunpack.c.l.b16 %v24
  %v77 = vunpack.c.l.b16 %v25
  %v78 = vunpack.c.l.b16 %v26
  %v79 = vunpack.c.l.b16 %v27
  %v80 = vunpack.c.l.b16 %v28
  %v81 = vunpack.c.l.b16 %v29
  %v82 = vpack.c.b16 %v67, %v66
  %v83 = vpack.c.b16 %v69, %v68
  %v84 = vpack.c.b16 %v71, %v70
  %v85 = vpack.c.b16 %v73, %v72
  %v86 = vpack.c.b16 %v75, %v74
  %v87 = vpack.c.b16 %v77, %v76
  %v88 = vpack.c.b16 %v79, %v78
  %v89 = vpack.c.b16 %v81, %v80
  %v114 = vunpack.c.l.b16 %v30
  %v115 = vunpack.c.l.b16 %v31
  %v116 = vunpack.c.l.b16 %v32
  %v117 = vunpack.c.l.b16 %v33
  %v118 = vunpack.c.l.b16 %v34
  %v119 = vunpack.c.l.b16 %v35
  %v120 = vunpack.c.l.b16 %v36
  %v121 = vunpack.c.l.b16 %v37
  %v122 = vunpack.c.l.b16 %v38
  %v123 = vunpack.c.l.b16 %v39
  %v124 = vunpack.c.l.b16 %v40
  %v125 = vunpack.c.l.b16 %v41
  %v126 = vunpack.c.l.b16 %v42
  %v127 = vunpack.c.l.b16 %v43
  %v128 = vunpack.c.l.b16 %v44
  %v129 = vunpack.c.l.b16 %v45
  %v130 = vpack.c.b16 %v115, %v114
  %v131 = vpack.c.b16 %v117, %v116
  %v132 = vpack.c.b16 %v119, %v118
  %v133 = vpack.c.b16 %v121, %v120
  %v134 = vpack.c.b16 %v123, %v122
  %v135 = vpack.c.b16 %v125, %v124
  %v136 = vpack.c.b16 %v127, %v126
  %v137 = vpack.c.b16 %v129, %v128
  %146 = vmatpush.bf16.msra.mxu0 %v137
  %147 = vmatpush.bf16.msra.mxu0 %v136
  %148 = vmatpush.bf16.msra.mxu0 %v135
  %149 = vmatpush.bf16.msra.mxu0 %v134
  %150 = vmatpush.bf16.msra.mxu0 %v133
  %151 = vmatpush.bf16.msra.mxu0 %v132
  %152 = vmatpush.bf16.msra.mxu0 %v131
  %153 = vmatpush.bf16.msra.mxu0 %v130
  %154 = vmatmul.bf16.gmra.mxu0 %v82
  %v155 = vpop.f32.mrf.mxu0
  %v156 = vadd.f32 %v48, %v155
  %v157 = vpop.f32.mrf.mxu0
  %v158 = vadd.f32 %v48, %v157
  %159 = vmatmul.bf16.gmra.mxu0 %v83
  %v160 = vpop.f32.mrf.mxu0
  %v161 = vadd.f32 %v48, %v160
  %v162 = vpop.f32.mrf.mxu0
  %v163 = vadd.f32 %v48, %v162
  %164 = vmatmul.bf16.gmra.mxu0 %v84
  %v165 = vpop.f32.mrf.mxu0
  %v166 = vadd.f32 %v48, %v165
  %v167 = vpop.f32.mrf.mxu0
  %v168 = vadd.f32 %v48, %v167
  %169 = vmatmul.bf16.gmra.mxu0 %v85
  %v170 = vpop.f32.mrf.mxu0
  %v171 = vadd.f32 %v48, %v170
  %v172 = vpop.f32.mrf.mxu0
  %v173 = vadd.f32 %v48, %v172
  %174 = vmatmul.bf16.gmra.mxu0 %v86
  %v175 = vpop.f32.mrf.mxu0
  %v176 = vadd.f32 %v48, %v175
  %v177 = vpop.f32.mrf.mxu0
  %v178 = vadd.f32 %v48, %v177
  %179 = vmatmul.bf16.gmra.mxu0 %v87
  %v180 = vpop.f32.mrf.mxu0
  %v181 = vadd.f32 %v48, %v180
  %v182 = vpop.f32.mrf.mxu0
  %v183 = vadd.f32 %v48, %v182
  %184 = vmatmul.bf16.gmra.mxu0 %v88
  %v185 = vpop.f32.mrf.mxu0
  %v186 = vadd.f32 %v48, %v185
  %v187 = vpop.f32.mrf.mxu0
  %v188 = vadd.f32 %v48, %v187
  %189 = vmatmul.bf16.gmra.mxu0 %v89
  %v190 = vpop.f32.mrf.mxu0
  %v191 = vadd.f32 %v48, %v190
  %v192 = vpop.f32.mrf.mxu0
  %v193 = vadd.f32 %v48, %v192
  %194 = vdwg.mxu0
  %v195 = vmax.f32 %v156, 0.0
  %v196 = vmax.f32 %v158, 0.0
  %v197 = vmax.f32 %v161, 0.0
  %v198 = vmax.f32 %v163, 0.0
  %v199 = vmax.f32 %v166, 0.0
  %v200 = vmax.f32 %v168, 0.0
  %v201 = vmax.f32 %v171, 0.0
  %v202 = vmax.f32 %v173, 0.0
  %v203 = vmax.f32 %v176, 0.0
  %v204 = vmax.f32 %v178, 0.0
  %v205 = vmax.f32 %v181, 0.0
  %v206 = vmax.f32 %v183, 0.0
  %v207 = vmax.f32 %v186, 0.0
  %v208 = vmax.f32 %v188, 0.0
  %v209 = vmax.f32 %v191, 0.0
  %v210 = vmax.f32 %v193, 0.0
  %v211 = vpack.c.bf16 %v195, %v195
  %v212 = vpack.c.bf16 %v196, %v196
  %v213 = vpack.c.bf16 %v197, %v197
  %v214 = vpack.c.bf16 %v198, %v198
  %v215 = vpack.c.bf16 %v199, %v199
  %v216 = vpack.c.bf16 %v200, %v200
  %v217 = vpack.c.bf16 %v201, %v201
  %v218 = vpack.c.bf16 %v202, %v202
  %v219 = vpack.c.bf16 %v203, %v203
  %v220 = vpack.c.bf16 %v204, %v204
  %v221 = vpack.c.bf16 %v205, %v205
  %v222 = vpack.c.bf16 %v206, %v206
  %v223 = vpack.c.bf16 %v207, %v207
  %v224 = vpack.c.bf16 %v208, %v208
  %v225 = vpack.c.bf16 %v209, %v209
  %v226 = vpack.c.bf16 %v210, %v210
  %vm227 = vcmask 60416
  %228 = vst.msk [vmem:[%s3] sm:$0xf] %vm227, %v211
  %229 = vst.msk [vmem:[%s3 + $0x4] sm:$0xf] %vm227, %v212
  %230 = vst.msk [vmem:[%s3 + $0x8] sm:$0xf] %vm227, %v213
  %231 = vst.msk [vmem:[%s3 + $0xc] sm:$0xf] %vm227, %v214
  %232 = vst.msk [vmem:[%s3 + $0x10] sm:$0xf] %vm227, %v215
  %233 = vst.msk [vmem:[%s3 + $0x14] sm:$0xf] %vm227, %v216
  %234 = vst.msk [vmem:[%s3 + $0x18] sm:$0xf] %vm227, %v217
  %235 = vst.msk [vmem:[%s3 + $0x1c] sm:$0xf] %vm227, %v218
  %236 = vst.msk [vmem:[%s3 + $0x20] sm:$0xf] %vm227, %v219
  %237 = vst.msk [vmem:[%s3 + $0x24] sm:$0xf] %vm227, %v220
  %238 = vst.msk [vmem:[%s3 + $0x28] sm:$0xf] %vm227, %v221
  %239 = vst.msk [vmem:[%s3 + $0x2c] sm:$0xf] %vm227, %v222
  %240 = vst.msk [vmem:[%s3 + $0x30] sm:$0xf] %vm227, %v223
  %241 = vst.msk [vmem:[%s3 + $0x34] sm:$0xf] %vm227, %v224
  %242 = vst.msk [vmem:[%s3 + $0x38] sm:$0xf] %vm227, %v225
  %243 = vst.msk [vmem:[%s3 + $0x3c] sm:$0xf] %vm227, %v226
  // Predicated region
  $region14: #{reslayer_forward_nchw.5} parent=0 // pred_check
    _
  $region15: #{reslayer_forward_nchw.5} parent=0 // pred_check_branch
    %245 = sbr.rel (0) target = $region17
  $region16: #{reslayer_forward_nchw.5} parent=0 // pred_region
    _
  $region17: #{reslayer_forward_nchw.5} parent=0 // pred_fallthru
    _
  // Predicated region
  $region18: #{reslayer_forward_nchw.5} parent=0 // pred_check
    _
  $region19: #{reslayer_forward_nchw.5} parent=0 // pred_check_branch
    %247 = sbr.rel (0) target = $region21
  $region20: #{reslayer_forward_nchw.5} parent=0 // pred_region
    _
  $region21: #{reslayer_forward_nchw.5} parent=0 // pred_fallthru
    _

// kernel: reslayer_forward_nchw.6
$region0: #{reslayer_forward_nchw.6}
  #allocation0 [shape = 'u32[]', space=smem, size = 0x4, offset = 0x4, fixed_abs, tag = 'smem constant byte address 0x4 - core index']
  #allocation1 [shape = 'u32[72,128]{1,0:T(1,128)}', space=vmem, size = 0x9000, scoped, tag = 'internal scratch']
  %s0 = inlined_call_operand.vmem [shape: bf16[128,128], index: 0, kind: input, shape index: {}]
  %s1 = inlined_call_operand.vmem [shape: bf16[128,8], index: 1, kind: input, shape index: {}]
  %s2 = inlined_call_operand.vmem [shape: f32[1,8], index: 2, kind: input, shape index: {}]
  %s3 = inlined_call_operand.vmem [shape: bf16[128,8], index: 3, kind: output, shape index: {}]
  %s4 = sld [smem:[#allocation0]]
  $region22: #{reslayer_forward_nchw.6} parent=0
    _
  %s6 = ssub.s32 1, %s4
  %s7 = scalar_select 0, %s6, %s4
  // Predicated region
  $region2: #{reslayer_forward_nchw.6} parent=0 // pred_check
    _
  $region3: #{reslayer_forward_nchw.6} parent=0 // pred_check_branch
    %9 = sbr.rel (0) target = $region5
  $region4: #{reslayer_forward_nchw.6} parent=0 // pred_region
    _
  $region5: #{reslayer_forward_nchw.6} parent=0 // pred_fallthru
    _
  // Predicated region
  $region6: #{reslayer_forward_nchw.6} parent=0 // pred_check
    _
  $region7: #{reslayer_forward_nchw.6} parent=0 // pred_check_branch
    %11 = sbr.rel (0) target = $region9
  $region8: #{reslayer_forward_nchw.6} parent=0 // pred_region
    _
  $region9: #{reslayer_forward_nchw.6} parent=0 // pred_fallthru
    _
  // Predicated region
  $region10: #{reslayer_forward_nchw.6} parent=0 // pred_check
    _
  $region11: #{reslayer_forward_nchw.6} parent=0 // pred_check_branch
    %13 = sbr.rel (0) target = $region13
  $region12: #{reslayer_forward_nchw.6} parent=0 // pred_region
    _
  $region13: #{reslayer_forward_nchw.6} parent=0 // pred_fallthru
    _
  %v14 = vld [vmem:[%s0] sm:$0xf]
  %v15 = vld [vmem:[%s0 + $0x4] sm:$0xf]
  %v16 = vld [vmem:[%s0 + $0x8] sm:$0xf]
  %v17 = vld [vmem:[%s0 + $0xc] sm:$0xf]
  %v18 = vld [vmem:[%s0 + $0x10] sm:$0xf]
  %v19 = vld [vmem:[%s0 + $0x14] sm:$0xf]
  %v20 = vld [vmem:[%s0 + $0x18] sm:$0xf]
  %v21 = vld [vmem:[%s0 + $0x1c] sm:$0xf]
  %v22 = vld [vmem:[%s0 + $0x20] sm:$0xf]
  %v23 = vld [vmem:[%s0 + $0x24] sm:$0xf]
  %v24 = vld [vmem:[%s0 + $0x28] sm:$0xf]
  %v25 = vld [vmem:[%s0 + $0x2c] sm:$0xf]
  %v26 = vld [vmem:[%s0 + $0x30] sm:$0xf]
  %v27 = vld [vmem:[%s0 + $0x34] sm:$0xf]
  %v28 = vld [vmem:[%s0 + $0x38] sm:$0xf]
  %v29 = vld [vmem:[%s0 + $0x3c] sm:$0xf]
  %v30 = vld [vmem:[%s1] sm:$0xf]
  %v31 = vld [vmem:[%s1 + $0x4] sm:$0xf]
  %v32 = vld [vmem:[%s1 + $0x8] sm:$0xf]
  %v33 = vld [vmem:[%s1 + $0xc] sm:$0xf]
  %v34 = vld [vmem:[%s1 + $0x10] sm:$0xf]
  %v35 = vld [vmem:[%s1 + $0x14] sm:$0xf]
  %v36 = vld [vmem:[%s1 + $0x18] sm:$0xf]
  %v37 = vld [vmem:[%s1 + $0x1c] sm:$0xf]
  %v38 = vld [vmem:[%s1 + $0x20] sm:$0xf]
  %v39 = vld [vmem:[%s1 + $0x24] sm:$0xf]
  %v40 = vld [vmem:[%s1 + $0x28] sm:$0xf]
  %v41 = vld [vmem:[%s1 + $0x2c] sm:$0xf]
  %v42 = vld [vmem:[%s1 + $0x30] sm:$0xf]
  %v43 = vld [vmem:[%s1 + $0x34] sm:$0xf]
  %v44 = vld [vmem:[%s1 + $0x38] sm:$0xf]
  %v45 = vld [vmem:[%s1 + $0x3c] sm:$0xf]
  %v46 = vld [vmem:[%s2] sm:$0x1]
  %v48 = vperm.slane %v46, 0
  %v66 = vunpack.c.l.b16 %v14
  %v67 = vunpack.c.l.b16 %v15
  %v68 = vunpack.c.l.b16 %v16
  %v69 = vunpack.c.l.b16 %v17
  %v70 = vunpack.c.l.b16 %v18
  %v71 = vunpack.c.l.b16 %v19
  %v72 = vunpack.c.l.b16 %v20
  %v73 = vunpack.c.l.b16 %v21
  %v74 = vunpack.c.l.b16 %v22
  %v75 = vunpack.c.l.b16 %v23
  %v76 = vunpack.c.l.b16 %v24
  %v77 = vunpack.c.l.b16 %v25
  %v78 = vunpack.c.l.b16 %v26
  %v79 = vunpack.c.l.b16 %v27
  %v80 = vunpack.c.l.b16 %v28
  %v81 = vunpack.c.l.b16 %v29
  %v82 = vpack.c.b16 %v67, %v66
  %v83 = vpack.c.b16 %v69, %v68
  %v84 = vpack.c.b16 %v71, %v70
  %v85 = vpack.c.b16 %v73, %v72
  %v86 = vpack.c.b16 %v75, %v74
  %v87 = vpack.c.b16 %v77, %v76
  %v88 = vpack.c.b16 %v79, %v78
  %v89 = vpack.c.b16 %v81, %v80
  %v114 = vunpack.c.l.b16 %v30
  %v115 = vunpack.c.l.b16 %v31
  %v116 = vunpack.c.l.b16 %v32
  %v117 = vunpack.c.l.b16 %v33
  %v118 = vunpack.c.l.b16 %v34
  %v119 = vunpack.c.l.b16 %v35
  %v120 = vunpack.c.l.b16 %v36
  %v121 = vunpack.c.l.b16 %v37
  %v122 = vunpack.c.l.b16 %v38
  %v123 = vunpack.c.l.b16 %v39
  %v124 = vunpack.c.l.b16 %v40
  %v125 = vunpack.c.l.b16 %v41
  %v126 = vunpack.c.l.b16 %v42
  %v127 = vunpack.c.l.b16 %v43
  %v128 = vunpack.c.l.b16 %v44
  %v129 = vunpack.c.l.b16 %v45
  %v130 = vpack.c.b16 %v115, %v114
  %v131 = vpack.c.b16 %v117, %v116
  %v132 = vpack.c.b16 %v119, %v118
  %v133 = vpack.c.b16 %v121, %v120
  %v134 = vpack.c.b16 %v123, %v122
  %v135 = vpack.c.b16 %v125, %v124
  %v136 = vpack.c.b16 %v127, %v126
  %v137 = vpack.c.b16 %v129, %v128
  %146 = vmatpush.bf16.msra.mxu0 %v137
  %147 = vmatpush.bf16.msra.mxu0 %v136
  %148 = vmatpush.bf16.msra.mxu0 %v135
  %149 = vmatpush.bf16.msra.mxu0 %v134
  %150 = vmatpush.bf16.msra.mxu0 %v133
  %151 = vmatpush.bf16.msra.mxu0 %v132
  %152 = vmatpush.bf16.msra.mxu0 %v131
  %153 = vmatpush.bf16.msra.mxu0 %v130
  %154 = vmatmul.bf16.gmra.mxu0 %v82
  %v155 = vpop.f32.mrf.mxu0
  %v156 = vadd.f32 %v48, %v155
  %v157 = vpop.f32.mrf.mxu0
  %v158 = vadd.f32 %v48, %v157
  %159 = vmatmul.bf16.gmra.mxu0 %v83
  %v160 = vpop.f32.mrf.mxu0
  %v161 = vadd.f32 %v48, %v160
  %v162 = vpop.f32.mrf.mxu0
  %v163 = vadd.f32 %v48, %v162
  %164 = vmatmul.bf16.gmra.mxu0 %v84
  %v165 = vpop.f32.mrf.mxu0
  %v166 = vadd.f32 %v48, %v165
  %v167 = vpop.f32.mrf.mxu0
  %v168 = vadd.f32 %v48, %v167
  %169 = vmatmul.bf16.gmra.mxu0 %v85
  %v170 = vpop.f32.mrf.mxu0
  %v171 = vadd.f32 %v48, %v170
  %v172 = vpop.f32.mrf.mxu0
  %v173 = vadd.f32 %v48, %v172
  %174 = vmatmul.bf16.gmra.mxu0 %v86
  %v175 = vpop.f32.mrf.mxu0
  %v176 = vadd.f32 %v48, %v175
  %v177 = vpop.f32.mrf.mxu0
  %v178 = vadd.f32 %v48, %v177
  %179 = vmatmul.bf16.gmra.mxu0 %v87
  %v180 = vpop.f32.mrf.mxu0
  %v181 = vadd.f32 %v48, %v180
  %v182 = vpop.f32.mrf.mxu0
  %v183 = vadd.f32 %v48, %v182
  %184 = vmatmul.bf16.gmra.mxu0 %v88
  %v185 = vpop.f32.mrf.mxu0
  %v186 = vadd.f32 %v48, %v185
  %v187 = vpop.f32.mrf.mxu0
  %v188 = vadd.f32 %v48, %v187
  %189 = vmatmul.bf16.gmra.mxu0 %v89
  %v190 = vpop.f32.mrf.mxu0
  %v191 = vadd.f32 %v48, %v190
  %v192 = vpop.f32.mrf.mxu0
  %v193 = vadd.f32 %v48, %v192
  %194 = vdwg.mxu0
  %v195 = vpack.c.bf16 %v156, %v156
  %v196 = vpack.c.bf16 %v158, %v158
  %v197 = vpack.c.bf16 %v161, %v161
  %v198 = vpack.c.bf16 %v163, %v163
  %v199 = vpack.c.bf16 %v166, %v166
  %v200 = vpack.c.bf16 %v168, %v168
  %v201 = vpack.c.bf16 %v171, %v171
  %v202 = vpack.c.bf16 %v173, %v173
  %v203 = vpack.c.bf16 %v176, %v176
  %v204 = vpack.c.bf16 %v178, %v178
  %v205 = vpack.c.bf16 %v181, %v181
  %v206 = vpack.c.bf16 %v183, %v183
  %v207 = vpack.c.bf16 %v186, %v186
  %v208 = vpack.c.bf16 %v188, %v188
  %v209 = vpack.c.bf16 %v191, %v191
  %v210 = vpack.c.bf16 %v193, %v193
  %vm211 = vcmask 60416
  %212 = vst.msk [vmem:[%s3] sm:$0xf] %vm211, %v195
  %213 = vst.msk [vmem:[%s3 + $0x4] sm:$0xf] %vm211, %v196
  %214 = vst.msk [vmem:[%s3 + $0x8] sm:$0xf] %vm211, %v197
  %215 = vst.msk [vmem:[%s3 + $0xc] sm:$0xf] %vm211, %v198
  %216 = vst.msk [vmem:[%s3 + $0x10] sm:$0xf] %vm211, %v199
  %217 = vst.msk [vmem:[%s3 + $0x14] sm:$0xf] %vm211, %v200
  %218 = vst.msk [vmem:[%s3 + $0x18] sm:$0xf] %vm211, %v201
  %219 = vst.msk [vmem:[%s3 + $0x1c] sm:$0xf] %vm211, %v202
  %220 = vst.msk [vmem:[%s3 + $0x20] sm:$0xf] %vm211, %v203
  %221 = vst.msk [vmem:[%s3 + $0x24] sm:$0xf] %vm211, %v204
  %222 = vst.msk [vmem:[%s3 + $0x28] sm:$0xf] %vm211, %v205
  %223 = vst.msk [vmem:[%s3 + $0x2c] sm:$0xf] %vm211, %v206
  %224 = vst.msk [vmem:[%s3 + $0x30] sm:$0xf] %vm211, %v207
  %225 = vst.msk [vmem:[%s3 + $0x34] sm:$0xf] %vm211, %v208
  %226 = vst.msk [vmem:[%s3 + $0x38] sm:$0xf] %vm211, %v209
  %227 = vst.msk [vmem:[%s3 + $0x3c] sm:$0xf] %vm211, %v210
  // Predicated region
  $region14: #{reslayer_forward_nchw.6} parent=0 // pred_check
    _
  $region15: #{reslayer_forward_nchw.6} parent=0 // pred_check_branch
    %229 = sbr.rel (0) target = $region17
  $region16: #{reslayer_forward_nchw.6} parent=0 // pred_region
    _
  $region17: #{reslayer_forward_nchw.6} parent=0 // pred_fallthru
    _
  // Predicated region
  $region18: #{reslayer_forward_nchw.6} parent=0 // pred_check
    _
  $region19: #{reslayer_forward_nchw.6} parent=0 // pred_check_branch
    %231 = sbr.rel (0) target = $region21
  $region20: #{reslayer_forward_nchw.6} parent=0 // pred_region
    _
  $region21: #{reslayer_forward_nchw.6} parent=0 // pred_fallthru
    _

// kernel: reslayer_forward_nchw.8
$region0: #{reslayer_forward_nchw.8}
  #allocation0 [shape = 'u32[]', space=smem, size = 0x4, offset = 0x4, fixed_abs, tag = 'smem constant byte address 0x4 - core index']
  #allocation1 [shape = 'u32[72,128]{1,0:T(1,128)}', space=vmem, size = 0x9000, scoped, tag = 'internal scratch']
  %s0 = inlined_call_operand.vmem [shape: bf16[2,104,8], index: 0, kind: input, shape index: {}]
  %s1 = inlined_call_operand.vmem [shape: bf16[9,8,8], index: 1, kind: input, shape index: {}]
  %s2 = inlined_call_operand.vmem [shape: f32[1,8], index: 2, kind: input, shape index: {}]
  %s3 = inlined_call_operand.vmem [shape: bf16[2,80,8], index: 3, kind: output, shape index: {}]
  %s4 = sld [smem:[#allocation0]]
  $region45: #{reslayer_forward_nchw.8} parent=0
    _
  %s6 = ssub.s32 1, %s4
  %s7 = scalar_select 0, %s6, %s4
  loop: start=0, step=1, limit=4
  $region2: #{reslayer_forward_nchw.8} parent=0 // loop_pre_header
    _
  $region3: #{reslayer_forward_nchw.8} parent=0 // loop_header
    %s9 = sphi 0, %s13
    %p10 = scmp.ge.s32.totalorder %s9, 4
    %s16 = sphi 0, %s28
    %s17 = sphi 0, %s24
    %s18 = sphi 0, %s16
    %s19 = sphi 0, %s17
    %s20 = sphi 0, %s18
    %s21 = sphi 0, %s19
    %s31 = sphi 0, %s33
    %s34 = sphi 0, %s31
    %s35 = sphi 0, %s34
    %s51 = sphi 0, %s35
    %s57 = sphi 0, %s59
    %s60 = sphi 0, %s57
    %s61 = sphi 0, %s60
    %s77 = sphi 0, %s61
    %s83 = sphi 0, %s85
    %s86 = sphi 0, %s83
    %s87 = sphi 0, %s86
    %s103 = sphi 0, %s87
    %s111 = sphi 0, %s113
    %s114 = sphi 0, %s111
    %s115 = sphi 0, %s114
    %s131 = sphi 0, %s115
  $region4: #{reslayer_forward_nchw.8} parent=0 // loop_header_branch
    %12 = sbr.rel (%p10) target = $region8
  $region5: #{reslayer_forward_nchw.8} parent=0 // loop_body
    %s14 = ssub.s32 %s9, 1
    %s15 = ssub.s32 %s9, 2
    %s22 = sadd.s32 1, %s17
    %p23 = scmp.ge.s32.totalorder %s22, 1
    %s24 = scalar_select %p23, 0, %s22
    %s25 = sadd.s32 1, %s16
    %s26 = scalar_select %p23, %s25, %s16
    %p27 = scmp.ge.s32.totalorder %s26, 2
    %s28 = scalar_select %p27, 0, %s26
    %s29 = ssub.s32 %s16, %s28
    %p30 = scmp.eq.s32.totalorder %s29, 0
    %s32 = sadd.s32 %s31, 1
    %s33 = scalar_select %p30, %s31, %s32
    %p36 = pneg %p30
    %p37 = scmp.eq.s32.totalorder %s9, 1
    %p38 = por %p36, %p37
    %p39 = scmp.ne.s32.totalorder %s31, %s34
    %p40 = scmp.eq.s32.totalorder %s9, 0
    %p41 = por %p39, %p40
    %p42 = scmp.ne.s32.totalorder %s31, %s34
    %p43 = scmp.eq.s32.totalorder %s14, 1
    %p44 = por %p42, %p43
    %p45 = scmp.ne.s32.totalorder %s34, %s35
    %p46 = scmp.eq.s32.totalorder %s14, 0
    %p47 = por %p45, %p46
    %p48 = scmp.ne.s32.totalorder %s34, %s35
    %p49 = scmp.eq.s32.totalorder %s15, 1
    %p50 = por %p48, %p49
    %p52 = scmp.ne.s32.totalorder %s35, %s51
    %p53 = scmp.eq.s32.totalorder %s15, 0
    %p54 = por %p52, %p53
    %s55 = ssub.s32 %s17, %s24
    %p56 = scmp.eq.s32.totalorder %s55, 0
    %s58 = sadd.s32 %s57, 1
    %s59 = scalar_select %p56, %s57, %s58
    %p62 = pneg %p56
    %p63 = scmp.eq.s32.totalorder %s9, 1
    %p64 = por %p62, %p63
    %p65 = scmp.ne.s32.totalorder %s57, %s60
    %p66 = scmp.eq.s32.totalorder %s9, 0
    %p67 = por %p65, %p66
    %p68 = scmp.ne.s32.totalorder %s57, %s60
    %p69 = scmp.eq.s32.totalorder %s14, 1
    %p70 = por %p68, %p69
    %p71 = scmp.ne.s32.totalorder %s60, %s61
    %p72 = scmp.eq.s32.totalorder %s14, 0
    %p73 = por %p71, %p72
    %p74 = scmp.ne.s32.totalorder %s60, %s61
    %p75 = scmp.eq.s32.totalorder %s15, 1
    %p76 = por %p74, %p75
    %p78 = scmp.ne.s32.totalorder %s61, %s77
    %p79 = scmp.eq.s32.totalorder %s15, 0
    %p80 = por %p78, %p79
    %s81 = ssub.s32 %s17, %s24
    %p82 = scmp.eq.s32.totalorder %s81, 0
    %s84 = sadd.s32 %s83, 1
    %s85 = scalar_select %p82, %s83, %s84
    %p88 = pneg %p82
    %p89 = scmp.eq.s32.totalorder %s9, 1
    %p90 = por %p88, %p89
    %p91 = scmp.ne.s32.totalorder %s83, %s86
    %p92 = scmp.eq.s32.totalorder %s9, 0
    %p93 = por %p91, %p92
    %p94 = scmp.ne.s32.totalorder %s83, %s86
    %p95 = scmp.eq.s32.totalorder %s14, 1
    %p96 = por %p94, %p95
    %p97 = scmp.ne.s32.totalorder %s86, %s87
    %p98 = scmp.eq.s32.totalorder %s14, 0
    %p99 = por %p97, %p98
    %p100 = scmp.ne.s32.totalorder %s86, %s87
    %p101 = scmp.eq.s32.totalorder %s15, 1
    %p102 = por %p100, %p101
    %p104 = scmp.ne.s32.totalorder %s87, %s103
    %p105 = scmp.eq.s32.totalorder %s15, 0
    %p106 = por %p104, %p105
    %s107 = ssub.s32 %s16, %s28
    %s108 = ssub.s32 %s17, %s24
    %s109 = sor.u32 %s107, %s108
    %p110 = scmp.eq.s32.totalorder %s109, 0
    %s112 = sadd.s32 %s111, 1
    %s113 = scalar_select %p110, %s111, %s112
    %p116 = pneg %p110
    %p117 = scmp.eq.s32.totalorder %s9, 1
    %p118 = por %p116, %p117
    %p119 = scmp.ne.s32.totalorder %s111, %s114
    %p120 = scmp.eq.s32.totalorder %s9, 0
    %p121 = por %p119, %p120
    %p122 = scmp.ne.s32.totalorder %s111, %s114
    %p123 = scmp.eq.s32.totalorder %s14, 1
    %p124 = por %p122, %p123
    %p125 = scmp.ne.s32.totalorder %s114, %s115
    %p126 = scmp.eq.s32.totalorder %s14, 0
    %p127 = por %p125, %p126
    %p128 = scmp.ne.s32.totalorder %s114, %s115
    %p129 = scmp.eq.s32.totalorder %s15, 1
    %p130 = por %p128, %p129
    %p132 = scmp.ne.s32.totalorder %s115, %s131
    %p133 = scmp.eq.s32.totalorder %s15, 0
    %p134 = por %p132, %p133
    %p135 = scmp.le.s32.totalorder 1, %s9
    %p136 = scmp.lt.s32.totalorder %s9, 3
    %p137 = pnand %p135, %p136
    %p138 = pneg %p137
    // Predicated region
    $region9: #{reslayer_forward_nchw.8} parent=5 // pred_check
      _
    $region10: #{reslayer_forward_nchw.8} parent=5 // pred_check_branch
      %140 = sbr.rel (%p137) target = $region12
    $region11: #{reslayer_forward_nchw.8} parent=5 // pred_region
      %s141 = ssub.s32 %s9, 1
      // Predicated region
      $region13: #{reslayer_forward_nchw.8} parent=11 // pred_check
        %p142 = pneg %p73
      $region14: #{reslayer_forward_nchw.8} parent=11 // pred_check_branch
        %144 = sbr.rel (%p142) target = $region16
      $region15: #{reslayer_forward_nchw.8} parent=11 // pred_region
        %p145 = scmp.lt.s32.totalorder %s19, 0
        %s146 = scalar_select %p145, %s19, 0
        %s147 = smul.addr %s146, 4
        %s148 = scalar_lea.vmem %s1, %s147
      $region16: #{reslayer_forward_nchw.8} parent=11 // pred_fallthru
        _
      // Predicated region
      $region17: #{reslayer_forward_nchw.8} parent=11 // pred_check
        %p149 = pneg %p99
      $region18: #{reslayer_forward_nchw.8} parent=11 // pred_check_branch
        %151 = sbr.rel (%p149) target = $region20
      $region19: #{reslayer_forward_nchw.8} parent=11 // pred_region
        %p152 = scmp.lt.s32.totalorder %s19, 0
        %s153 = scalar_select %p152, %s19, 0
        %s154 = scalar_lea.vmem %s2, %s153
      $region20: #{reslayer_forward_nchw.8} parent=11 // pred_fallthru
        _
    $region12: #{reslayer_forward_nchw.8} parent=5 // pred_fallthru
      _
    %p155 = scmp.lt.s32.totalorder %s9, 2
    // Predicated region
    $region21: #{reslayer_forward_nchw.8} parent=5 // pred_check
      %p156 = pneg %p155
    $region22: #{reslayer_forward_nchw.8} parent=5 // pred_check_branch
      %158 = sbr.rel (%p156) target = $region24
    $region23: #{reslayer_forward_nchw.8} parent=5 // pred_region
      // Predicated region
      $region25: #{reslayer_forward_nchw.8} parent=23 // pred_check
        %p159 = pneg %p41
      $region26: #{reslayer_forward_nchw.8} parent=23 // pred_check_branch
        %161 = sbr.rel (%p159) target = $region28
      $region27: #{reslayer_forward_nchw.8} parent=23 // pred_region
        %p162 = scmp.lt.s32.totalorder %s16, 1
        %s163 = scalar_select %p162, %s16, 1
        %s164 = smul.addr %s163, 13
        %s165 = smul.addr %s164, 4
        %s166 = scalar_lea.vmem %s0, %s165
      $region28: #{reslayer_forward_nchw.8} parent=23 // pred_fallthru
        _
    $region24: #{reslayer_forward_nchw.8} parent=5 // pred_fallthru
      _
    %p167 = scmp.le.s32.totalorder 1, %s9
    %p168 = scmp.lt.s32.totalorder %s9, 3
    %p169 = pnand %p167, %p168
    %p170 = pneg %p169
    // Predicated region
    $region29: #{reslayer_forward_nchw.8} parent=5 // pred_check
      _
    $region30: #{reslayer_forward_nchw.8} parent=5 // pred_check_branch
      %172 = sbr.rel (%p169) target = $region32
    $region31: #{reslayer_forward_nchw.8} parent=5 // pred_region
      %s173 = ssub.s32 %s9, 1
      %p174 = scmp.lt.s32.totalorder %s18, 1
      %s175 = scalar_select %p174, %s18, 1
      %s176 = smul.addr %s175, 13
      %s177 = smul.addr %s176, 4
      %s178 = scalar_lea.vmem %s0, %s177
      %p179 = pneg %p47
      %p180 = pneg %p44
      %p181 = scmp.lt.s32.totalorder %s19, 0
      %s182 = scalar_select %p181, %s19, 0
      %s183 = smul.addr %s182, 4
      %s184 = scalar_lea.vmem %s1, %s183
      %p185 = pneg %p73
      %p186 = pneg %p70
      %p187 = scmp.lt.s32.totalorder %s19, 0
      %s188 = scalar_select %p187, %s19, 0
      %s189 = scalar_lea.vmem %s2, %s188
      %p190 = pneg %p99
      %p191 = pneg %p96
      %p192 = pneg %p127
      %p193 = pneg %p124
      %p194 = scmp.lt.s32.totalorder %s18, 1
      %s195 = scalar_select %p194, %s18, 1
      %p196 = scmp.lt.s32.totalorder %s19, 0
      %s197 = scalar_select %p196, %s19, 0
      %s198 = smul.addr %s195, 10
      %s199 = sadd.s32 %s197, %s198
      %s200 = smul.addr %s199, 4
      %s201 = scalar_lea.vmem %s3, %s200
      %p202 = scmp.lt.s32.totalorder %s18, 1
      %s203 = scalar_select %p202, %s18, 1
      %s204 = smul.addr %s203, 13
      %s205 = smul.addr %s204, 4
      %s206 = scalar_lea.vmem %s0, %s205
      %p207 = scmp.lt.s32.totalorder %s19, 0
      %s208 = scalar_select %p207, %s19, 0
      %s209 = smul.addr %s208, 4
      %s210 = scalar_lea.vmem %s1, %s209
      %p211 = scmp.lt.s32.totalorder %s19, 0
      %s212 = scalar_select %p211, %s19, 0
      %s213 = scalar_lea.vmem %s2, %s212
      %p214 = scmp.lt.s32.totalorder %s18, 1
      %s215 = scalar_select %p214, %s18, 1
      %p216 = scmp.lt.s32.totalorder %s19, 0
      %s217 = scalar_select %p216, %s19, 0
      %s218 = smul.addr %s215, 10
      %s219 = sadd.s32 %s217, %s218
      %s220 = smul.addr %s219, 4
      %s221 = scalar_lea.vmem %s3, %s220
      %v223 = vld [vmem:[%s206] sm:$0xf]
      %v224 = vld [vmem:[%s206 + $0x4] sm:$0xf]
      %v225 = vld [vmem:[%s206 + $0x8] sm:$0xf]
      %v226 = vld [vmem:[%s206 + $0xc] sm:$0xf]
      %v227 = vld [vmem:[%s206 + $0x10] sm:$0xf]
      %v228 = vld [vmem:[%s206 + $0x14] sm:$0xf]
      %v229 = vld [vmem:[%s206 + $0x18] sm:$0xf]
      %v230 = vld [vmem:[%s206 + $0x1c] sm:$0xf]
      %v231 = vld [vmem:[%s206 + $0x20] sm:$0xf]
      %v232 = vld [vmem:[%s206 + $0x24] sm:$0xf]
      %v233 = vld [vmem:[%s210] sm:$0xf]
      %v234 = vld [vmem:[%s206 + $0x28] sm:$0x1]
      %s235 = scalar_lea.vmem %s210, 4
      %v236 = vld [vmem:[%s235] sm:$0xf]
      %v248 = vunpack.c.l.b16 %v223
      %v249 = vunpack.c.l.b16 %v224
      %v250 = vunpack.c.l.b16 %v225
      %v251 = vunpack.c.l.b16 %v226
      %v252 = vunpack.c.l.b16 %v227
      %v253 = vunpack.c.l.b16 %v228
      %v254 = vunpack.c.l.b16 %v229
      %v255 = vunpack.c.l.b16 %v230
      %v256 = vunpack.c.l.b16 %v231
      %v257 = vunpack.c.l.b16 %v232
      %v258 = vunpack.c.l.b16 %v234
      %v259 = vpack.c.b16 %v249, %v248
      %v260 = vpack.c.b16 %v251, %v250
      %v261 = vpack.c.b16 %v253, %v252
      %v262 = vpack.c.b16 %v255, %v254
      %v263 = vpack.c.b16 %v257, %v256
      %v264 = vpack.c.b16 %v258, %v258
      %vm265 = vsmask.f32 7424
      %v267 = vshrl.u32 %v259, 16
      %v269 = vshll.u32 %v259, 16
      %v271 = vrot.slane %v269, 1
      %v272 = vor.u32 %v267, %v271
      %v274 = vshll.u32 %v260, 16
      %v276 = vrot.slane %v274, 1
      %v277 = vsel %vm265, %v272, %v276
      %v278 = vshrl.u32 %v260, 16
      %v280 = vor.u32 %v278, %v276
      %v282 = vshll.u32 %v261, 16
      %v284 = vrot.slane %v282, 1
      %v285 = vsel %vm265, %v280, %v284
      %v286 = vshrl.u32 %v261, 16
      %v288 = vor.u32 %v286, %v284
      %v290 = vshll.u32 %v262, 16
      %v292 = vrot.slane %v290, 1
      %v293 = vsel %vm265, %v288, %v292
      %v294 = vshrl.u32 %v262, 16
      %v296 = vor.u32 %v294, %v292
      %v298 = vshll.u32 %v263, 16
      %v300 = vrot.slane %v298, 1
      %v301 = vsel %vm265, %v296, %v300
      %v302 = vshrl.u32 %v263, 16
      %v304 = vor.u32 %v302, %v300
      %v306 = vshll.u32 %v264, 16
      %v308 = vrot.slane %v306, 1
      %v309 = vsel %vm265, %v304, %v308
      %vm310 = vcmask 64512
      %v312 = vsel %vm310, %v277, 0
      %v315 = vsel %vm310, %v285, 0
      %v318 = vsel %vm310, %v293, 0
      %v321 = vsel %vm310, %v301, 0
      %v324 = vsel %vm310, %v309, 0
      %vm326 = vcmask 1043456
      %v328 = vsel %vm326, %v236, 0
      %330 = vmatpush.bf16.msra.mxu0 0
      %331 = vmatpush.bf16.msra.mxu0 0
      %332 = vmatpush.bf16.msra.mxu0 0
      %333 = vmatpush.bf16.msra.mxu0 0
      %334 = vmatpush.bf16.msra.mxu0 0
      %335 = vmatpush.bf16.msra.mxu0 0
      %336 = vmatpush.bf16.msra.mxu0 0
      %337 = vmatpush.bf16.msra.mxu0 %v328
      %338 = vmatmul.bf16.gmra.mxu0 %v312
      %v339 = vpop.f32.mrf.mxu0
      %v340 = vadd.f32 0.0, %v339
      %v341 = vpop.f32.mrf.mxu0
      %v342 = vadd.f32 0.0, %v341
      %343 = vmatmul.bf16.gmra.mxu0 %v315
      %v344 = vpop.f32.mrf.mxu0
      %v345 = vadd.f32 0.0, %v344
      %v346 = vpop.f32.mrf.mxu0
      %v347 = vadd.f32 0.0, %v346
      %348 = vmatmul.bf16.gmra.mxu0 %v318
      %v349 = vpop.f32.mrf.mxu0
      %v350 = vadd.f32 0.0, %v349
      %v351 = vpop.f32.mrf.mxu0
      %v352 = vadd.f32 0.0, %v351
      %353 = vmatmul.bf16.gmra.mxu0 %v321
      %v354 = vpop.f32.mrf.mxu0
      %v355 = vadd.f32 0.0, %v354
      %v356 = vpop.f32.mrf.mxu0
      %v357 = vadd.f32 0.0, %v356
      %358 = vmatmul.bf16.gmra.mxu0 %v324
      %v359 = vpop.f32.mrf.mxu0
      %v360 = vadd.f32 0.0, %v359
      %v361 = vpop.f32.mrf.mxu0
      %v362 = vadd.f32 0.0, %v361
      %363 = vdwg.mxu0
      %v364 = vsel %vm310, %v259, 0
      %v366 = vsel %vm310, %v260, 0
      %v368 = vsel %vm310, %v261, 0
      %v370 = vsel %vm310, %v262, 0
      %v372 = vsel %vm310, %v263, 0
      %v375 = vsel %vm326, %v233, 0
      %377 = vmatpush.bf16.msra.mxu0 0
      %378 = vmatpush.bf16.msra.mxu0 0
      %379 = vmatpush.bf16.msra.mxu0 0
      %380 = vmatpush.bf16.msra.mxu0 0
      %381 = vmatpush.bf16.msra.mxu0 0
      %382 = vmatpush.bf16.msra.mxu0 0
      %383 = vmatpush.bf16.msra.mxu0 0
      %384 = vmatpush.bf16.msra.mxu0 %v375
      %385 = vmatmul.bf16.gmra.mxu0 %v364
      %v386 = vpop.f32.mrf.mxu0
      %v387 = vadd.f32 %v340, %v386
      %v388 = vpop.f32.mrf.mxu0
      %v389 = vadd.f32 %v342, %v388
      %390 = vmatmul.bf16.gmra.mxu0 %v366
      %v391 = vpop.f32.mrf.mxu0
      %v392 = vadd.f32 %v345, %v391
      %v393 = vpop.f32.mrf.mxu0
      %v394 = vadd.f32 %v347, %v393
      %395 = vmatmul.bf16.gmra.mxu0 %v368
      %v396 = vpop.f32.mrf.mxu0
      %v397 = vadd.f32 %v350, %v396
      %v398 = vpop.f32.mrf.mxu0
      %v399 = vadd.f32 %v352, %v398
      %400 = vmatmul.bf16.gmra.mxu0 %v370
      %v401 = vpop.f32.mrf.mxu0
      %v402 = vadd.f32 %v355, %v401
      %v403 = vpop.f32.mrf.mxu0
      %v404 = vadd.f32 %v357, %v403
      %405 = vmatmul.bf16.gmra.mxu0 %v372
      %v406 = vpop.f32.mrf.mxu0
      %v407 = vadd.f32 %v360, %v406
      %v408 = vpop.f32.mrf.mxu0
      %v409 = vadd.f32 %v362, %v408
      %410 = vdwg.mxu0
      %v411 = vld [vmem:[%s206] sm:$0xe]
      %s412 = scalar_lea.vmem %s210, 8
      %v413 = vld [vmem:[%s412] sm:$0xf]
      %v415 = vunpack.c.l.b16 %v411
      %v416 = vpack.c.b16 %v249, %v415
      %vm417 = vcmask 1046528
      %v418 = vrot.slane %v416, 1
      %v419 = vrot.slane %v260, 1
      %v420 = vsel %vm417, %v418, %v419
      %v421 = vrot.slane %v261, 1
      %v422 = vsel %vm417, %v419, %v421
      %v423 = vrot.slane %v262, 1
      %v424 = vsel %vm417, %v421, %v423
      %v425 = vrot.slane %v263, 1
      %v426 = vsel %vm417, %v423, %v425
      %v427 = vrot.slane %v264, 1
      %v428 = vsel %vm417, %v425, %v427
      %v430 = vsel %vm310, %v420, 0
      %v433 = vsel %vm310, %v422, 0
      %v436 = vsel %vm310, %v424, 0
      %v439 = vsel %vm310, %v426, 0
      %v442 = vsel %vm310, %v428, 0
      %v445 = vsel %vm326, %v413, 0
      %447 = vmatpush.bf16.msra.mxu0 0
      %448 = vmatpush.bf16.msra.mxu0 0
      %449 = vmatpush.bf16.msra.mxu0 0
      %450 = vmatpush.bf16.msra.mxu0 0
      %451 = vmatpush.bf16.msra.mxu0 0
      %452 = vmatpush.bf16.msra.mxu0 0
      %453 = vmatpush.bf16.msra.mxu0 0
      %454 = vmatpush.bf16.msra.mxu0 %v445
      %455 = vmatmul.bf16.gmra.mxu0 %v430
      %v456 = vpop.f32.mrf.mxu0
      %v457 = vadd.f32 0.0, %v456
      %v458 = vpop.f32.mrf.mxu0
      %v459 = vadd.f32 0.0, %v458
      %460 = vmatmul.bf16.gmra.mxu0 %v433
      %v461 = vpop.f32.mrf.mxu0
      %v462 = vadd.f32 0.0, %v461
      %v463 = vpop.f32.mrf.mxu0
      %v464 = vadd.f32 0.0, %v463
      %465 = vmatmul.bf16.gmra.mxu0 %v436
      %v466 = vpop.f32.mrf.mxu0
      %v467 = vadd.f32 0.0, %v466
      %v468 = vpop.f32.mrf.mxu0
      %v469 = vadd.f32 0.0, %v468
      %470 = vmatmul.bf16.gmra.mxu0 %v439
      %v471 = vpop.f32.mrf.mxu0
      %v472 = vadd.f32 0.0, %v471
      %v473 = vpop.f32.mrf.mxu0
      %v474 = vadd.f32 0.0, %v473
      %475 = vmatmul.bf16.gmra.mxu0 %v442
      %v476 = vpop.f32.mrf.mxu0
      %v477 = vadd.f32 0.0, %v476
      %v478 = vpop.f32.mrf.mxu0
      %v479 = vadd.f32 0.0, %v478
      %480 = vdwg.mxu0
      %v481 = vadd.f32 %v387, %v457
      %v482 = vadd.f32 %v389, %v459
      %v483 = vadd.f32 %v392, %v462
      %v484 = vadd.f32 %v394, %v464
      %v485 = vadd.f32 %v397, %v467
      %v486 = vadd.f32 %v399, %v469
      %v487 = vadd.f32 %v402, %v472
      %v488 = vadd.f32 %v404, %v474
      %v489 = vadd.f32 %v407, %v477
      %v490 = vadd.f32 %v409, %v479
      %v491 = vld [vmem:[%s206 + $0x4] sm:$0xe]
      %v492 = vld [vmem:[%s206 + $0x8] sm:$0xf]
      %v493 = vld [vmem:[%s206 + $0xc] sm:$0xf]
      %v494 = vld [vmem:[%s206 + $0x10] sm:$0xf]
      %v495 = vld [vmem:[%s206 + $0x14] sm:$0xf]
      %v496 = vld [vmem:[%s206 + $0x18] sm:$0xf]
      %v497 = vld [vmem:[%s206 + $0x1c] sm:$0xf]
      %v498 = vld [vmem:[%s206 + $0x20] sm:$0xf]
      %v499 = vld [vmem:[%s206 + $0x24] sm:$0xf]
      %v500 = vld [vmem:[%s206 + $0x28] sm:$0xf]
      %v501 = vld [vmem:[%s206 + $0x2c] sm:$0x1]
      %s502 = scalar_lea.vmem %s210, 12
      %v503 = vld [vmem:[%s502] sm:$0xf]
      %v515 = vunpack.c.l.b16 %v491
      %v516 = vunpack.c.l.b16 %v492
      %v517 = vunpack.c.l.b16 %v493
      %v518 = vunpack.c.l.b16 %v494
      %v519 = vunpack.c.l.b16 %v495
      %v520 = vunpack.c.l.b16 %v496
      %v521 = vunpack.c.l.b16 %v497
      %v522 = vunpack.c.l.b16 %v498
      %v523 = vunpack.c.l.b16 %v499
      %v524 = vunpack.c.l.b16 %v500
      %v525 = vunpack.c.l.b16 %v501
      %v526 = vpack.c.b16 %v516, %v515
      %v527 = vpack.c.b16 %v518, %v517
      %v528 = vpack.c.b16 %v520, %v519
      %v529 = vpack.c.b16 %v522, %v521
      %v530 = vpack.c.b16 %v524, %v523
      %v531 = vpack.c.b16 %v525, %v525
      %v532 = vrot.slane %v526, 1
      %v533 = vrot.slane %v527, 1
      %v534 = vsel %vm417, %v532, %v533
      %v535 = vrot.slane %v528, 1
      %v536 = vsel %vm417, %v533, %v535
      %v537 = vrot.slane %v529, 1
      %v538 = vsel %vm417, %v535, %v537
      %v539 = vrot.slane %v530, 1
      %v540 = vsel %vm417, %v537, %v539
      %v541 = vrot.slane %v531, 1
      %v542 = vsel %vm417, %v539, %v541
      %v544 = vsel %vm310, %v534, 0
      %v547 = vsel %vm310, %v536, 0
      %v550 = vsel %vm310, %v538, 0
      %v553 = vsel %vm310, %v540, 0
      %v556 = vsel %vm310, %v542, 0
      %v559 = vsel %vm326, %v503, 0
      %561 = vmatpush.bf16.msra.mxu0 0
      %562 = vmatpush.bf16.msra.mxu0 0
      %563 = vmatpush.bf16.msra.mxu0 0
      %564 = vmatpush.bf16.msra.mxu0 0
      %565 = vmatpush.bf16.msra.mxu0 0
      %566 = vmatpush.bf16.msra.mxu0 0
      %567 = vmatpush.bf16.msra.mxu0 0
      %568 = vmatpush.bf16.msra.mxu0 %v559
      %569 = vmatmul.bf16.gmra.mxu0 %v544
      %v570 = vpop.f32.mrf.mxu0
      %v571 = vadd.f32 0.0, %v570
      %v572 = vpop.f32.mrf.mxu0
      %v573 = vadd.f32 0.0, %v572
      %574 = vmatmul.bf16.gmra.mxu0 %v547
      %v575 = vpop.f32.mrf.mxu0
      %v576 = vadd.f32 0.0, %v575
      %v577 = vpop.f32.mrf.mxu0
      %v578 = vadd.f32 0.0, %v577
      %579 = vmatmul.bf16.gmra.mxu0 %v550
      %v580 = vpop.f32.mrf.mxu0
      %v581 = vadd.f32 0.0, %v580
      %v582 = vpop.f32.mrf.mxu0
      %v583 = vadd.f32 0.0, %v582
      %584 = vmatmul.bf16.gmra.mxu0 %v553
      %v585 = vpop.f32.mrf.mxu0
      %v586 = vadd.f32 0.0, %v585
      %v587 = vpop.f32.mrf.mxu0
      %v588 = vadd.f32 0.0, %v587
      %589 = vmatmul.bf16.gmra.mxu0 %v556
      %v590 = vpop.f32.mrf.mxu0
      %v591 = vadd.f32 0.0, %v590
      %v592 = vpop.f32.mrf.mxu0
      %v593 = vadd.f32 0.0, %v592
      %594 = vdwg.mxu0
      %v595 = vadd.f32 %v481, %v571
      %v596 = vadd.f32 %v482, %v573
      %v597 = vadd.f32 %v483, %v576
      %v598 = vadd.f32 %v484, %v578
      %v599 = vadd.f32 %v485, %v581
      %v600 = vadd.f32 %v486, %v583
      %v601 = vadd.f32 %v487, %v586
      %v602 = vadd.f32 %v488, %v588
      %v603 = vadd.f32 %v489, %v591
      %v604 = vadd.f32 %v490, %v593
      %v605 = vld [vmem:[%s206 + $0x2c] sm:$0x3]
      %s606 = scalar_lea.vmem %s210, 16
      %v607 = vld [vmem:[%s606] sm:$0xf]
      %v609 = vunpack.c.l.b16 %v605
      %v610 = vpack.c.b16 %v609, %v609
      %vm611 = vsmask.f32 6400
      %v613 = vshrl.u32 %v526, 16
      %v615 = vrot.slane %v613, 1
      %v616 = vshll.u32 %v526, 16
      %v618 = vrot.slane %v616, 2
      %v619 = vor.u32 %v615, %v618
      %v621 = vshrl.u32 %v527, 16
      %v623 = vrot.slane %v621, 1
      %v624 = vshll.u32 %v527, 16
      %v626 = vrot.slane %v624, 2
      %v627 = vor.u32 %v623, %v626
      %v628 = vsel %vm611, %v619, %v627
      %v630 = vshrl.u32 %v528, 16
      %v632 = vrot.slane %v630, 1
      %v633 = vshll.u32 %v528, 16
      %v635 = vrot.slane %v633, 2
      %v636 = vor.u32 %v632, %v635
      %v637 = vsel %vm611, %v627, %v636
      %v639 = vshrl.u32 %v529, 16
      %v641 = vrot.slane %v639, 1
      %v642 = vshll.u32 %v529, 16
      %v644 = vrot.slane %v642, 2
      %v645 = vor.u32 %v641, %v644
      %v646 = vsel %vm611, %v636, %v645
      %v648 = vshrl.u32 %v530, 16
      %v650 = vrot.slane %v648, 1
      %v651 = vshll.u32 %v530, 16
      %v653 = vrot.slane %v651, 2
      %v654 = vor.u32 %v650, %v653
      %v655 = vsel %vm611, %v645, %v654
      %v657 = vshrl.u32 %v610, 16
      %v659 = vrot.slane %v657, 1
      %v660 = vshll.u32 %v610, 16
      %v662 = vrot.slane %v660, 2
      %v663 = vor.u32 %v659, %v662
      %v664 = vsel %vm611, %v654, %v663
      %v666 = vsel %vm310, %v628, 0
      %v669 = vsel %vm310, %v637, 0
      %v672 = vsel %vm310, %v646, 0
      %v675 = vsel %vm310, %v655, 0
      %v678 = vsel %vm310, %v664, 0
      %v681 = vsel %vm326, %v607, 0
      %683 = vmatpush.bf16.msra.mxu0 0
      %684 = vmatpush.bf16.msra.mxu0 0
      %685 = vmatpush.bf16.msra.mxu0 0
      %686 = vmatpush.bf16.msra.mxu0 0
      %687 = vmatpush.bf16.msra.mxu0 0
      %688 = vmatpush.bf16.msra.mxu0 0
      %689 = vmatpush.bf16.msra.mxu0 0
      %690 = vmatpush.bf16.msra.mxu0 %v681
      %691 = vmatmul.bf16.gmra.mxu0 %v666
      %v692 = vpop.f32.mrf.mxu0
      %v693 = vadd.f32 0.0, %v692
      %v694 = vpop.f32.mrf.mxu0
      %v695 = vadd.f32 0.0, %v694
      %696 = vmatmul.bf16.gmra.mxu0 %v669
      %v697 = vpop.f32.mrf.mxu0
      %v698 = vadd.f32 0.0, %v697
      %v699 = vpop.f32.mrf.mxu0
      %v700 = vadd.f32 0.0, %v699
      %701 = vmatmul.bf16.gmra.mxu0 %v672
      %v702 = vpop.f32.mrf.mxu0
      %v703 = vadd.f32 0.0, %v702
      %v704 = vpop.f32.mrf.mxu0
      %v705 = vadd.f32 0.0, %v704
      %706 = vmatmul.bf16.gmra.mxu0 %v675
      %v707 = vpop.f32.mrf.mxu0
      %v708 = vadd.f32 0.0, %v707
      %v709 = vpop.f32.mrf.mxu0
      %v710 = vadd.f32 0.0, %v709
      %711 = vmatmul.bf16.gmra.mxu0 %v678
      %v712 = vpop.f32.mrf.mxu0
      %v713 = vadd.f32 0.0, %v712
      %v714 = vpop.f32.mrf.mxu0
      %v715 = vadd.f32 0.0, %v714
      %716 = vdwg.mxu0
      %v717 = vadd.f32 %v595, %v693
      %v718 = vadd.f32 %v596, %v695
      %v719 = vadd.f32 %v597, %v698
      %v720 = vadd.f32 %v598, %v700
      %v721 = vadd.f32 %v599, %v703
      %v722 = vadd.f32 %v600, %v705
      %v723 = vadd.f32 %v601, %v708
      %v724 = vadd.f32 %v602, %v710
      %v725 = vadd.f32 %v603, %v713
      %v726 = vadd.f32 %v604, %v715
      %v727 = vld [vmem:[%s206 + $0x4] sm:$0xc]
      %s728 = scalar_lea.vmem %s210, 20
      %v729 = vld [vmem:[%s728] sm:$0xf]
      %v731 = vunpack.c.l.b16 %v727
      %v732 = vpack.c.b16 %v516, %v731
      %vm733 = vcmask 1045504
      %v734 = vrot.slane %v732, 2
      %v735 = vrot.slane %v527, 2
      %v736 = vsel %vm733, %v734, %v735
      %v737 = vrot.slane %v528, 2
      %v738 = vsel %vm733, %v735, %v737
      %v739 = vrot.slane %v529, 2
      %v740 = vsel %vm733, %v737, %v739
      %v741 = vrot.slane %v530, 2
      %v742 = vsel %vm733, %v739, %v741
      %v743 = vrot.slane %v610, 2
      %v744 = vsel %vm733, %v741, %v743
      %v746 = vsel %vm310, %v736, 0
      %v749 = vsel %vm310, %v738, 0
      %v752 = vsel %vm310, %v740, 0
      %v755 = vsel %vm310, %v742, 0
      %v758 = vsel %vm310, %v744, 0
      %v761 = vsel %vm326, %v729, 0
      %763 = vmatpush.bf16.msra.mxu0 0
      %764 = vmatpush.bf16.msra.mxu0 0
      %765 = vmatpush.bf16.msra.mxu0 0
      %766 = vmatpush.bf16.msra.mxu0 0
      %767 = vmatpush.bf16.msra.mxu0 0
      %768 = vmatpush.bf16.msra.mxu0 0
      %769 = vmatpush.bf16.msra.mxu0 0
      %770 = vmatpush.bf16.msra.mxu0 %v761
      %771 = vmatmul.bf16.gmra.mxu0 %v746
      %v772 = vpop.f32.mrf.mxu0
      %v773 = vadd.f32 0.0, %v772
      %v774 = vpop.f32.mrf.mxu0
      %v775 = vadd.f32 0.0, %v774
      %776 = vmatmul.bf16.gmra.mxu0 %v749
      %v777 = vpop.f32.mrf.mxu0
      %v778 = vadd.f32 0.0, %v777
      %v779 = vpop.f32.mrf.mxu0
      %v780 = vadd.f32 0.0, %v779
      %781 = vmatmul.bf16.gmra.mxu0 %v752
      %v782 = vpop.f32.mrf.mxu0
      %v783 = vadd.f32 0.0, %v782
      %v784 = vpop.f32.mrf.mxu0
      %v785 = vadd.f32 0.0, %v784
      %786 = vmatmul.bf16.gmra.mxu0 %v755
      %v787 = vpop.f32.mrf.mxu0
      %v788 = vadd.f32 0.0, %v787
      %v789 = vpop.f32.mrf.mxu0
      %v790 = vadd.f32 0.0, %v789
      %791 = vmatmul.bf16.gmra.mxu0 %v758
      %v792 = vpop.f32.mrf.mxu0
      %v793 = vadd.f32 0.0, %v792
      %v794 = vpop.f32.mrf.mxu0
      %v795 = vadd.f32 0.0, %v794
      %796 = vdwg.mxu0
      %v797 = vadd.f32 %v717, %v773
      %v798 = vadd.f32 %v718, %v775
      %v799 = vadd.f32 %v719, %v778
      %v800 = vadd.f32 %v720, %v780
      %v801 = vadd.f32 %v721, %v783
      %v802 = vadd.f32 %v722, %v785
      %v803 = vadd.f32 %v723, %v788
      %v804 = vadd.f32 %v724, %v790
      %v805 = vadd.f32 %v725, %v793
      %v806 = vadd.f32 %v726, %v795
      %v807 = vld [vmem:[%s206 + $0x8] sm:$0xc]
      %v808 = vld [vmem:[%s206 + $0xc] sm:$0xf]
      %v809 = vld [vmem:[%s206 + $0x10] sm:$0xf]
      %v810 = vld [vmem:[%s206 + $0x14] sm:$0xf]
      %v811 = vld [vmem:[%s206 + $0x18] sm:$0xf]
      %v812 = vld [vmem:[%s206 + $0x1c] sm:$0xf]
      %v813 = vld [vmem:[%s206 + $0x20] sm:$0xf]
      %v814 = vld [vmem:[%s206 + $0x24] sm:$0xf]
      %v815 = vld [vmem:[%s206 + $0x28] sm:$0xf]
      %v816 = vld [vmem:[%s206 + $0x2c] sm:$0xf]
      %v817 = vld [vmem:[%s206 + $0x30] sm:$0x3]
      %s818 = scalar_lea.vmem %s210, 24
      %v819 = vld [vmem:[%s818] sm:$0xf]
      %v831 = vunpack.c.l.b16 %v807
      %v832 = vunpack.c.l.b16 %v808
      %v833 = vunpack.c.l.b16 %v809
      %v834 = vunpack.c.l.b16 %v810
      %v835 = vunpack.c.l.b16 %v811
      %v836 = vunpack.c.l.b16 %v812
      %v837 = vunpack.c.l.b16 %v813
      %v838 = vunpack.c.l.b16 %v814
      %v839 = vunpack.c.l.b16 %v815
      %v840 = vunpack.c.l.b16 %v816
      %v841 = vunpack.c.l.b16 %v817
      %v842 = vpack.c.b16 %v832, %v831
      %v843 = vpack.c.b16 %v834, %v833
      %v844 = vpack.c.b16 %v836, %v835
      %v845 = vpack.c.b16 %v838, %v837
      %v846 = vpack.c.b16 %v840, %v839
      %v847 = vpack.c.b16 %v841, %v841
      %v848 = vrot.slane %v842, 2
      %v849 = vrot.slane %v843, 2
      %v850 = vsel %vm733, %v848, %v849
      %v851 = vrot.slane %v844, 2
      %v852 = vsel %vm733, %v849, %v851
      %v853 = vrot.slane %v845, 2
      %v854 = vsel %vm733, %v851, %v853
      %v855 = vrot.slane %v846, 2
      %v856 = vsel %vm733, %v853, %v855
      %v857 = vrot.slane %v847, 2
      %v858 = vsel %vm733, %v855, %v857
      %v860 = vsel %vm310, %v850, 0
      %v863 = vsel %vm310, %v852, 0
      %v866 = vsel %vm310, %v854, 0
      %v869 = vsel %vm310, %v856, 0
      %v872 = vsel %vm310, %v858, 0
      %v875 = vsel %vm326, %v819, 0
      %877 = vmatpush.bf16.msra.mxu0 0
      %878 = vmatpush.bf16.msra.mxu0 0
      %879 = vmatpush.bf16.msra.mxu0 0
      %880 = vmatpush.bf16.msra.mxu0 0
      %881 = vmatpush.bf16.msra.mxu0 0
      %882 = vmatpush.bf16.msra.mxu0 0
      %883 = vmatpush.bf16.msra.mxu0 0
      %884 = vmatpush.bf16.msra.mxu0 %v875
      %885 = vmatmul.bf16.gmra.mxu0 %v860
      %v886 = vpop.f32.mrf.mxu0
      %v887 = vadd.f32 0.0, %v886
      %v888 = vpop.f32.mrf.mxu0
      %v889 = vadd.f32 0.0, %v888
      %890 = vmatmul.bf16.gmra.mxu0 %v863
      %v891 = vpop.f32.mrf.mxu0
      %v892 = vadd.f32 0.0, %v891
      %v893 = vpop.f32.mrf.mxu0
      %v894 = vadd.f32 0.0, %v893
      %895 = vmatmul.bf16.gmra.mxu0 %v866
      %v896 = vpop.f32.mrf.mxu0
      %v897 = vadd.f32 0.0, %v896
      %v898 = vpop.f32.mrf.mxu0
      %v899 = vadd.f32 0.0, %v898
      %900 = vmatmul.bf16.gmra.mxu0 %v869
      %v901 = vpop.f32.mrf.mxu0
      %v902 = vadd.f32 0.0, %v901
      %v903 = vpop.f32.mrf.mxu0
      %v904 = vadd.f32 0.0, %v903
      %905 = vmatmul.bf16.gmra.mxu0 %v872
      %v906 = vpop.f32.mrf.mxu0
      %v907 = vadd.f32 0.0, %v906
      %v908 = vpop.f32.mrf.mxu0
      %v909 = vadd.f32 0.0, %v908
      %910 = vdwg.mxu0
      %v911 = vadd.f32 %v797, %v887
      %v912 = vadd.f32 %v798, %v889
      %v913 = vadd.f32 %v799, %v892
      %v914 = vadd.f32 %v800, %v894
      %v915 = vadd.f32 %v801, %v897
      %v916 = vadd.f32 %v802, %v899
      %v917 = vadd.f32 %v803, %v902
      %v918 = vadd.f32 %v804, %v904
      %v919 = vadd.f32 %v805, %v907
      %v920 = vadd.f32 %v806, %v909
      %v921 = vld [vmem:[%s206 + $0x30] sm:$0x7]
      %s922 = scalar_lea.vmem %s210, 28
      %v923 = vld [vmem:[%s922] sm:$0xf]
      %v925 = vunpack.c.l.b16 %v921
      %v926 = vpack.c.b16 %v925, %v925
      %vm927 = vsmask.f32 5376
      %v929 = vshrl.u32 %v842, 16
      %v931 = vrot.slane %v929, 2
      %v932 = vshll.u32 %v842, 16
      %v934 = vrot.slane %v932, 3
      %v935 = vor.u32 %v931, %v934
      %v937 = vshrl.u32 %v843, 16
      %v939 = vrot.slane %v937, 2
      %v940 = vshll.u32 %v843, 16
      %v942 = vrot.slane %v940, 3
      %v943 = vor.u32 %v939, %v942
      %v944 = vsel %vm927, %v935, %v943
      %v946 = vshrl.u32 %v844, 16
      %v948 = vrot.slane %v946, 2
      %v949 = vshll.u32 %v844, 16
      %v951 = vrot.slane %v949, 3
      %v952 = vor.u32 %v948, %v951
      %v953 = vsel %vm927, %v943, %v952
      %v955 = vshrl.u32 %v845, 16
      %v957 = vrot.slane %v955, 2
      %v958 = vshll.u32 %v845, 16
      %v960 = vrot.slane %v958, 3
      %v961 = vor.u32 %v957, %v960
      %v962 = vsel %vm927, %v952, %v961
      %v964 = vshrl.u32 %v846, 16
      %v966 = vrot.slane %v964, 2
      %v967 = vshll.u32 %v846, 16
      %v969 = vrot.slane %v967, 3
      %v970 = vor.u32 %v966, %v969
      %v971 = vsel %vm927, %v961, %v970
      %v973 = vshrl.u32 %v926, 16
      %v975 = vrot.slane %v973, 2
      %v976 = vshll.u32 %v926, 16
      %v978 = vrot.slane %v976, 3
      %v979 = vor.u32 %v975, %v978
      %v980 = vsel %vm927, %v970, %v979
      %v982 = vsel %vm310, %v944, 0
      %v985 = vsel %vm310, %v953, 0
      %v988 = vsel %vm310, %v962, 0
      %v991 = vsel %vm310, %v971, 0
      %v994 = vsel %vm310, %v980, 0
      %v997 = vsel %vm326, %v923, 0
      %999 = vmatpush.bf16.msra.mxu0 0
      %1000 = vmatpush.bf16.msra.mxu0 0
      %1001 = vmatpush.bf16.msra.mxu0 0
      %1002 = vmatpush.bf16.msra.mxu0 0
      %1003 = vmatpush.bf16.msra.mxu0 0
      %1004 = vmatpush.bf16.msra.mxu0 0
      %1005 = vmatpush.bf16.msra.mxu0 0
      %1006 = vmatpush.bf16.msra.mxu0 %v997
      %1007 = vmatmul.bf16.gmra.mxu0 %v982
      %v1008 = vpop.f32.mrf.mxu0
      %v1009 = vadd.f32 0.0, %v1008
      %v1010 = vpop.f32.mrf.mxu0
      %v1011 = vadd.f32 0.0, %v1010
      %1012 = vmatmul.bf16.gmra.mxu0 %v985
      %v1013 = vpop.f32.mrf.mxu0
      %v1014 = vadd.f32 0.0, %v1013
      %v1015 = vpop.f32.mrf.mxu0
      %v1016 = vadd.f32 0.0, %v1015
      %1017 = vmatmul.bf16.gmra.mxu0 %v988
      %v1018 = vpop.f32.mrf.mxu0
      %v1019 = vadd.f32 0.0, %v1018
      %v1020 = vpop.f32.mrf.mxu0
      %v1021 = vadd.f32 0.0, %v1020
      %1022 = vmatmul.bf16.gmra.mxu0 %v991
      %v1023 = vpop.f32.mrf.mxu0
      %v1024 = vadd.f32 0.0, %v1023
      %v1025 = vpop.f32.mrf.mxu0
      %v1026 = vadd.f32 0.0, %v1025
      %1027 = vmatmul.bf16.gmra.mxu0 %v994
      %v1028 = vpop.f32.mrf.mxu0
      %v1029 = vadd.f32 0.0, %v1028
      %v1030 = vpop.f32.mrf.mxu0
      %v1031 = vadd.f32 0.0, %v1030
      %1032 = vdwg.mxu0
      %v1033 = vadd.f32 %v911, %v1009
      %v1034 = vadd.f32 %v912, %v1011
      %v1035 = vadd.f32 %v913, %v1014
      %v1036 = vadd.f32 %v914, %v1016
      %v1037 = vadd.f32 %v915, %v1019
      %v1038 = vadd.f32 %v916, %v1021
      %v1039 = vadd.f32 %v917, %v1024
      %v1040 = vadd.f32 %v918, %v1026
      %v1041 = vadd.f32 %v919, %v1029
      %v1042 = vadd.f32 %v920, %v1031
      %v1043 = vld [vmem:[%s206 + $0x8] sm:$0x8]
      %s1044 = scalar_lea.vmem %s210, 32
      %v1045 = vld [vmem:[%s1044] sm:$0xf]
      %v1047 = vunpack.c.l.b16 %v1043
      %v1048 = vpack.c.b16 %v832, %v1047
      %vm1049 = vcmask 1044480
      %v1050 = vrot.slane %v1048, 3
      %v1051 = vrot.slane %v843, 3
      %v1052 = vsel %vm1049, %v1050, %v1051
      %v1053 = vrot.slane %v844, 3
      %v1054 = vsel %vm1049, %v1051, %v1053
      %v1055 = vrot.slane %v845, 3
      %v1056 = vsel %vm1049, %v1053, %v1055
      %v1057 = vrot.slane %v846, 3
      %v1058 = vsel %vm1049, %v1055, %v1057
      %v1059 = vrot.slane %v926, 3
      %v1060 = vsel %vm1049, %v1057, %v1059
      %v1062 = vsel %vm310, %v1052, 0
      %v1065 = vsel %vm310, %v1054, 0
      %v1068 = vsel %vm310, %v1056, 0
      %v1071 = vsel %vm310, %v1058, 0
      %v1074 = vsel %vm310, %v1060, 0
      %v1077 = vsel %vm326, %v1045, 0
      %1079 = vmatpush.bf16.msra.mxu0 0
      %1080 = vmatpush.bf16.msra.mxu0 0
      %1081 = vmatpush.bf16.msra.mxu0 0
      %1082 = vmatpush.bf16.msra.mxu0 0
      %1083 = vmatpush.bf16.msra.mxu0 0
      %1084 = vmatpush.bf16.msra.mxu0 0
      %1085 = vmatpush.bf16.msra.mxu0 0
      %1086 = vmatpush.bf16.msra.mxu0 %v1077
      %1087 = vmatmul.bf16.gmra.mxu0 %v1062
      %v1088 = vpop.f32.mrf.mxu0
      %v1089 = vadd.f32 0.0, %v1088
      %v1090 = vpop.f32.mrf.mxu0
      %v1091 = vadd.f32 0.0, %v1090
      %1092 = vmatmul.bf16.gmra.mxu0 %v1065
      %v1093 = vpop.f32.mrf.mxu0
      %v1094 = vadd.f32 0.0, %v1093
      %v1095 = vpop.f32.mrf.mxu0
      %v1096 = vadd.f32 0.0, %v1095
      %1097 = vmatmul.bf16.gmra.mxu0 %v1068
      %v1098 = vpop.f32.mrf.mxu0
      %v1099 = vadd.f32 0.0, %v1098
      %v1100 = vpop.f32.mrf.mxu0
      %v1101 = vadd.f32 0.0, %v1100
      %1102 = vmatmul.bf16.gmra.mxu0 %v1071
      %v1103 = vpop.f32.mrf.mxu0
      %v1104 = vadd.f32 0.0, %v1103
      %v1105 = vpop.f32.mrf.mxu0
      %v1106 = vadd.f32 0.0, %v1105
      %1107 = vmatmul.bf16.gmra.mxu0 %v1074
      %v1108 = vpop.f32.mrf.mxu0
      %v1109 = vadd.f32 0.0, %v1108
      %v1110 = vpop.f32.mrf.mxu0
      %v1111 = vadd.f32 0.0, %v1110
      %1112 = vdwg.mxu0
      %v1113 = vadd.f32 %v1033, %v1089
      %v1114 = vadd.f32 %v1034, %v1091
      %v1115 = vadd.f32 %v1035, %v1094
      %v1116 = vadd.f32 %v1036, %v1096
      %v1117 = vadd.f32 %v1037, %v1099
      %v1118 = vadd.f32 %v1038, %v1101
      %v1119 = vadd.f32 %v1039, %v1104
      %v1120 = vadd.f32 %v1040, %v1106
      %v1121 = vadd.f32 %v1041, %v1109
      %v1122 = vadd.f32 %v1042, %v1111
      %v1123 = vld [vmem:[%s213] sm:$0x1]
      %v1125 = vperm.slane %v1123, 0
      %v1127 = vadd.f32 %v1113, %v1125
      %v1128 = vadd.f32 %v1114, %v1125
      %v1129 = vadd.f32 %v1115, %v1125
      %v1130 = vadd.f32 %v1116, %v1125
      %v1131 = vadd.f32 %v1117, %v1125
      %v1132 = vadd.f32 %v1118, %v1125
      %v1133 = vadd.f32 %v1119, %v1125
      %v1134 = vadd.f32 %v1120, %v1125
      %v1135 = vadd.f32 %v1121, %v1125
      %v1136 = vadd.f32 %v1122, %v1125
      %v1137 = vmax.f32 %v1127, 0.0
      %v1138 = vmax.f32 %v1128, 0.0
      %v1139 = vmax.f32 %v1129, 0.0
      %v1140 = vmax.f32 %v1130, 0.0
      %v1141 = vmax.f32 %v1131, 0.0
      %v1142 = vmax.f32 %v1132, 0.0
      %v1143 = vmax.f32 %v1133, 0.0
      %v1144 = vmax.f32 %v1134, 0.0
      %v1145 = vmax.f32 %v1135, 0.0
      %v1146 = vmax.f32 %v1136, 0.0
      %v1147 = vpack.c.bf16 %v1137, %v1137
      %v1148 = vpack.c.bf16 %v1138, %v1138
      %v1149 = vpack.c.bf16 %v1139, %v1139
      %v1150 = vpack.c.bf16 %v1140, %v1140
      %v1151 = vpack.c.bf16 %v1141, %v1141
      %v1152 = vpack.c.bf16 %v1142, %v1142
      %v1153 = vpack.c.bf16 %v1143, %v1143
      %v1154 = vpack.c.bf16 %v1144, %v1144
      %v1155 = vpack.c.bf16 %v1145, %v1145
      %v1156 = vpack.c.bf16 %v1146, %v1146
      %vm1157 = vcmask 60416
      %1158 = vst.msk [vmem:[%s221] sm:$0xf] %vm1157, %v1147
      %1159 = vst.msk [vmem:[%s221 + $0x4] sm:$0xf] %vm1157, %v1148
      %1160 = vst.msk [vmem:[%s221 + $0x8] sm:$0xf] %vm1157, %v1149
      %1161 = vst.msk [vmem:[%s221 + $0xc] sm:$0xf] %vm1157, %v1150
      %1162 = vst.msk [vmem:[%s221 + $0x10] sm:$0xf] %vm1157, %v1151
      %1163 = vst.msk [vmem:[%s221 + $0x14] sm:$0xf] %vm1157, %v1152
      %1164 = vst.msk [vmem:[%s221 + $0x18] sm:$0xf] %vm1157, %v1153
      %1165 = vst.msk [vmem:[%s221 + $0x1c] sm:$0xf] %vm1157, %v1154
      %1166 = vst.msk [vmem:[%s221 + $0x20] sm:$0xf] %vm1157, %v1155
      %1167 = vst.msk [vmem:[%s221 + $0x24] sm:$0xf] %vm1157, %v1156
      %p1168 = scmp.lt.s32.totalorder %s18, 1
      %s1169 = scalar_select %p1168, %s18, 1
      %p1170 = scmp.lt.s32.totalorder %s19, 0
      %s1171 = scalar_select %p1170, %s19, 0
      %s1172 = smul.addr %s1169, 10
      %s1173 = sadd.s32 %s1171, %s1172
      %s1174 = smul.addr %s1173, 4
      %s1175 = scalar_lea.vmem %s3, %s1174
      // Predicated region
      $region33: #{reslayer_forward_nchw.8} parent=31 // pred_check
        %p1176 = pneg %p124
      $region34: #{reslayer_forward_nchw.8} parent=31 // pred_check_branch
        %1178 = sbr.rel (%p1176) target = $region36
      $region35: #{reslayer_forward_nchw.8} parent=31 // pred_region
        _
      $region36: #{reslayer_forward_nchw.8} parent=31 // pred_fallthru
        _
    $region32: #{reslayer_forward_nchw.8} parent=5 // pred_fallthru
      _
    %p1179 = scmp.le.s32.totalorder 2, %s9
    // Predicated region
    $region37: #{reslayer_forward_nchw.8} parent=5 // pred_check
      %p1180 = pneg %p1179
    $region38: #{reslayer_forward_nchw.8} parent=5 // pred_check_branch
      %1182 = sbr.rel (%p1180) target = $region40
    $region39: #{reslayer_forward_nchw.8} parent=5 // pred_region
      %s1183 = ssub.s32 %s9, 2
      // Predicated region
      $region41: #{reslayer_forward_nchw.8} parent=39 // pred_check
        %p1184 = pneg %p130
      $region42: #{reslayer_forward_nchw.8} parent=39 // pred_check_branch
        %1186 = sbr.rel (%p1184) target = $region44
      $region43: #{reslayer_forward_nchw.8} parent=39 // pred_region
        %p1187 = scmp.lt.s32.totalorder %s20, 1
        %s1188 = scalar_select %p1187, %s20, 1
        %p1189 = scmp.lt.s32.totalorder %s21, 0
        %s1190 = scalar_select %p1189, %s21, 0
        %s1191 = smul.addr %s1188, 10
        %s1192 = sadd.s32 %s1190, %s1191
        %s1193 = smul.addr %s1192, 4
        %s1194 = scalar_lea.vmem %s3, %s1193
      $region44: #{reslayer_forward_nchw.8} parent=39 // pred_fallthru
        _
    $region40: #{reslayer_forward_nchw.8} parent=5 // pred_fallthru
      _
  $region6: #{reslayer_forward_nchw.8} parent=0 // loop_footer
    %s13 = sadd.s32 1, %s9
  $region7: #{reslayer_forward_nchw.8} parent=0 // loop_footer_branch
    %8 = sbr.rel target = $region3
  $region8: #{reslayer_forward_nchw.8} parent=0 // loop_exit
    _

// kernel: reslayer_forward_nchw.7
$region0: #{reslayer_forward_nchw.7}
  #allocation0 [shape = 'u32[]', space=smem, size = 0x4, offset = 0x4, fixed_abs, tag = 'smem constant byte address 0x4 - core index']
  #allocation1 [shape = 'u32[72,128]{1,0:T(1,128)}', space=vmem, size = 0x9000, scoped, tag = 'internal scratch']
  %s0 = inlined_call_operand.vmem [shape: bf16[2,104,8], index: 0, kind: input, shape index: {}]
  %s1 = inlined_call_operand.vmem [shape: bf16[9,8,8], index: 1, kind: input, shape index: {}]
  %s2 = inlined_call_operand.vmem [shape: f32[1,8], index: 2, kind: input, shape index: {}]
  %s3 = inlined_call_operand.vmem [shape: bf16[2,80,8], index: 3, kind: input, shape index: {}]
  %s4 = inlined_call_operand.vmem [shape: bf16[2,80,8], index: 4, kind: output, shape index: {}]
  %s5 = sld [smem:[#allocation0]]
  $region49: #{reslayer_forward_nchw.7} parent=0
    _
  %s7 = ssub.s32 1, %s5
  %s8 = scalar_select 0, %s7, %s5
  loop: start=0, step=1, limit=4
  $region2: #{reslayer_forward_nchw.7} parent=0 // loop_pre_header
    _
  $region3: #{reslayer_forward_nchw.7} parent=0 // loop_header
    %s10 = sphi 0, %s14
    %p11 = scmp.ge.s32.totalorder %s10, 4
    %s17 = sphi 0, %s29
    %s18 = sphi 0, %s25
    %s19 = sphi 0, %s17
    %s20 = sphi 0, %s18
    %s21 = sphi 0, %s19
    %s22 = sphi 0, %s20
    %s32 = sphi 0, %s34
    %s35 = sphi 0, %s32
    %s36 = sphi 0, %s35
    %s52 = sphi 0, %s36
    %s58 = sphi 0, %s60
    %s61 = sphi 0, %s58
    %s62 = sphi 0, %s61
    %s78 = sphi 0, %s62
    %s84 = sphi 0, %s86
    %s87 = sphi 0, %s84
    %s88 = sphi 0, %s87
    %s104 = sphi 0, %s88
    %s112 = sphi 0, %s114
    %s115 = sphi 0, %s112
    %s116 = sphi 0, %s115
    %s132 = sphi 0, %s116
    %s140 = sphi 0, %s142
    %s143 = sphi 0, %s140
    %s144 = sphi 0, %s143
    %s160 = sphi 0, %s144
  $region4: #{reslayer_forward_nchw.7} parent=0 // loop_header_branch
    %13 = sbr.rel (%p11) target = $region8
  $region5: #{reslayer_forward_nchw.7} parent=0 // loop_body
    %s15 = ssub.s32 %s10, 1
    %s16 = ssub.s32 %s10, 2
    %s23 = sadd.s32 1, %s18
    %p24 = scmp.ge.s32.totalorder %s23, 1
    %s25 = scalar_select %p24, 0, %s23
    %s26 = sadd.s32 1, %s17
    %s27 = scalar_select %p24, %s26, %s17
    %p28 = scmp.ge.s32.totalorder %s27, 2
    %s29 = scalar_select %p28, 0, %s27
    %s30 = ssub.s32 %s17, %s29
    %p31 = scmp.eq.s32.totalorder %s30, 0
    %s33 = sadd.s32 %s32, 1
    %s34 = scalar_select %p31, %s32, %s33
    %p37 = pneg %p31
    %p38 = scmp.eq.s32.totalorder %s10, 1
    %p39 = por %p37, %p38
    %p40 = scmp.ne.s32.totalorder %s32, %s35
    %p41 = scmp.eq.s32.totalorder %s10, 0
    %p42 = por %p40, %p41
    %p43 = scmp.ne.s32.totalorder %s32, %s35
    %p44 = scmp.eq.s32.totalorder %s15, 1
    %p45 = por %p43, %p44
    %p46 = scmp.ne.s32.totalorder %s35, %s36
    %p47 = scmp.eq.s32.totalorder %s15, 0
    %p48 = por %p46, %p47
    %p49 = scmp.ne.s32.totalorder %s35, %s36
    %p50 = scmp.eq.s32.totalorder %s16, 1
    %p51 = por %p49, %p50
    %p53 = scmp.ne.s32.totalorder %s36, %s52
    %p54 = scmp.eq.s32.totalorder %s16, 0
    %p55 = por %p53, %p54
    %s56 = ssub.s32 %s18, %s25
    %p57 = scmp.eq.s32.totalorder %s56, 0
    %s59 = sadd.s32 %s58, 1
    %s60 = scalar_select %p57, %s58, %s59
    %p63 = pneg %p57
    %p64 = scmp.eq.s32.totalorder %s10, 1
    %p65 = por %p63, %p64
    %p66 = scmp.ne.s32.totalorder %s58, %s61
    %p67 = scmp.eq.s32.totalorder %s10, 0
    %p68 = por %p66, %p67
    %p69 = scmp.ne.s32.totalorder %s58, %s61
    %p70 = scmp.eq.s32.totalorder %s15, 1
    %p71 = por %p69, %p70
    %p72 = scmp.ne.s32.totalorder %s61, %s62
    %p73 = scmp.eq.s32.totalorder %s15, 0
    %p74 = por %p72, %p73
    %p75 = scmp.ne.s32.totalorder %s61, %s62
    %p76 = scmp.eq.s32.totalorder %s16, 1
    %p77 = por %p75, %p76
    %p79 = scmp.ne.s32.totalorder %s62, %s78
    %p80 = scmp.eq.s32.totalorder %s16, 0
    %p81 = por %p79, %p80
    %s82 = ssub.s32 %s18, %s25
    %p83 = scmp.eq.s32.totalorder %s82, 0
    %s85 = sadd.s32 %s84, 1
    %s86 = scalar_select %p83, %s84, %s85
    %p89 = pneg %p83
    %p90 = scmp.eq.s32.totalorder %s10, 1
    %p91 = por %p89, %p90
    %p92 = scmp.ne.s32.totalorder %s84, %s87
    %p93 = scmp.eq.s32.totalorder %s10, 0
    %p94 = por %p92, %p93
    %p95 = scmp.ne.s32.totalorder %s84, %s87
    %p96 = scmp.eq.s32.totalorder %s15, 1
    %p97 = por %p95, %p96
    %p98 = scmp.ne.s32.totalorder %s87, %s88
    %p99 = scmp.eq.s32.totalorder %s15, 0
    %p100 = por %p98, %p99
    %p101 = scmp.ne.s32.totalorder %s87, %s88
    %p102 = scmp.eq.s32.totalorder %s16, 1
    %p103 = por %p101, %p102
    %p105 = scmp.ne.s32.totalorder %s88, %s104
    %p106 = scmp.eq.s32.totalorder %s16, 0
    %p107 = por %p105, %p106
    %s108 = ssub.s32 %s17, %s29
    %s109 = ssub.s32 %s18, %s25
    %s110 = sor.u32 %s108, %s109
    %p111 = scmp.eq.s32.totalorder %s110, 0
    %s113 = sadd.s32 %s112, 1
    %s114 = scalar_select %p111, %s112, %s113
    %p117 = pneg %p111
    %p118 = scmp.eq.s32.totalorder %s10, 1
    %p119 = por %p117, %p118
    %p120 = scmp.ne.s32.totalorder %s112, %s115
    %p121 = scmp.eq.s32.totalorder %s10, 0
    %p122 = por %p120, %p121
    %p123 = scmp.ne.s32.totalorder %s112, %s115
    %p124 = scmp.eq.s32.totalorder %s15, 1
    %p125 = por %p123, %p124
    %p126 = scmp.ne.s32.totalorder %s115, %s116
    %p127 = scmp.eq.s32.totalorder %s15, 0
    %p128 = por %p126, %p127
    %p129 = scmp.ne.s32.totalorder %s115, %s116
    %p130 = scmp.eq.s32.totalorder %s16, 1
    %p131 = por %p129, %p130
    %p133 = scmp.ne.s32.totalorder %s116, %s132
    %p134 = scmp.eq.s32.totalorder %s16, 0
    %p135 = por %p133, %p134
    %s136 = ssub.s32 %s17, %s29
    %s137 = ssub.s32 %s18, %s25
    %s138 = sor.u32 %s136, %s137
    %p139 = scmp.eq.s32.totalorder %s138, 0
    %s141 = sadd.s32 %s140, 1
    %s142 = scalar_select %p139, %s140, %s141
    %p145 = pneg %p139
    %p146 = scmp.eq.s32.totalorder %s10, 1
    %p147 = por %p145, %p146
    %p148 = scmp.ne.s32.totalorder %s140, %s143
    %p149 = scmp.eq.s32.totalorder %s10, 0
    %p150 = por %p148, %p149
    %p151 = scmp.ne.s32.totalorder %s140, %s143
    %p152 = scmp.eq.s32.totalorder %s15, 1
    %p153 = por %p151, %p152
    %p154 = scmp.ne.s32.totalorder %s143, %s144
    %p155 = scmp.eq.s32.totalorder %s15, 0
    %p156 = por %p154, %p155
    %p157 = scmp.ne.s32.totalorder %s143, %s144
    %p158 = scmp.eq.s32.totalorder %s16, 1
    %p159 = por %p157, %p158
    %p161 = scmp.ne.s32.totalorder %s144, %s160
    %p162 = scmp.eq.s32.totalorder %s16, 0
    %p163 = por %p161, %p162
    %p164 = scmp.le.s32.totalorder 1, %s10
    %p165 = scmp.lt.s32.totalorder %s10, 3
    %p166 = pnand %p164, %p165
    %p167 = pneg %p166
    // Predicated region
    $region9: #{reslayer_forward_nchw.7} parent=5 // pred_check
      _
    $region10: #{reslayer_forward_nchw.7} parent=5 // pred_check_branch
      %169 = sbr.rel (%p166) target = $region12
    $region11: #{reslayer_forward_nchw.7} parent=5 // pred_region
      %s170 = ssub.s32 %s10, 1
      // Predicated region
      $region13: #{reslayer_forward_nchw.7} parent=11 // pred_check
        %p171 = pneg %p74
      $region14: #{reslayer_forward_nchw.7} parent=11 // pred_check_branch
        %173 = sbr.rel (%p171) target = $region16
      $region15: #{reslayer_forward_nchw.7} parent=11 // pred_region
        %p174 = scmp.lt.s32.totalorder %s20, 0
        %s175 = scalar_select %p174, %s20, 0
        %s176 = smul.addr %s175, 4
        %s177 = scalar_lea.vmem %s1, %s176
      $region16: #{reslayer_forward_nchw.7} parent=11 // pred_fallthru
        _
      // Predicated region
      $region17: #{reslayer_forward_nchw.7} parent=11 // pred_check
        %p178 = pneg %p100
      $region18: #{reslayer_forward_nchw.7} parent=11 // pred_check_branch
        %180 = sbr.rel (%p178) target = $region20
      $region19: #{reslayer_forward_nchw.7} parent=11 // pred_region
        %p181 = scmp.lt.s32.totalorder %s20, 0
        %s182 = scalar_select %p181, %s20, 0
        %s183 = scalar_lea.vmem %s2, %s182
      $region20: #{reslayer_forward_nchw.7} parent=11 // pred_fallthru
        _
    $region12: #{reslayer_forward_nchw.7} parent=5 // pred_fallthru
      _
    %p184 = scmp.lt.s32.totalorder %s10, 2
    // Predicated region
    $region21: #{reslayer_forward_nchw.7} parent=5 // pred_check
      %p185 = pneg %p184
    $region22: #{reslayer_forward_nchw.7} parent=5 // pred_check_branch
      %187 = sbr.rel (%p185) target = $region24
    $region23: #{reslayer_forward_nchw.7} parent=5 // pred_region
      // Predicated region
      $region25: #{reslayer_forward_nchw.7} parent=23 // pred_check
        %p188 = pneg %p42
      $region26: #{reslayer_forward_nchw.7} parent=23 // pred_check_branch
        %190 = sbr.rel (%p188) target = $region28
      $region27: #{reslayer_forward_nchw.7} parent=23 // pred_region
        %p191 = scmp.lt.s32.totalorder %s17, 1
        %s192 = scalar_select %p191, %s17, 1
        %s193 = smul.addr %s192, 13
        %s194 = smul.addr %s193, 4
        %s195 = scalar_lea.vmem %s0, %s194
      $region28: #{reslayer_forward_nchw.7} parent=23 // pred_fallthru
        _
      // Predicated region
      $region29: #{reslayer_forward_nchw.7} parent=23 // pred_check
        %p196 = pneg %p122
      $region30: #{reslayer_forward_nchw.7} parent=23 // pred_check_branch
        %198 = sbr.rel (%p196) target = $region32
      $region31: #{reslayer_forward_nchw.7} parent=23 // pred_region
        %p199 = scmp.lt.s32.totalorder %s17, 1
        %s200 = scalar_select %p199, %s17, 1
        %p201 = scmp.lt.s32.totalorder %s18, 0
        %s202 = scalar_select %p201, %s18, 0
        %s203 = smul.addr %s200, 10
        %s204 = sadd.s32 %s202, %s203
        %s205 = smul.addr %s204, 4
        %s206 = scalar_lea.vmem %s3, %s205
      $region32: #{reslayer_forward_nchw.7} parent=23 // pred_fallthru
        _
    $region24: #{reslayer_forward_nchw.7} parent=5 // pred_fallthru
      _
    %p207 = scmp.le.s32.totalorder 1, %s10
    %p208 = scmp.lt.s32.totalorder %s10, 3
    %p209 = pnand %p207, %p208
    %p210 = pneg %p209
    // Predicated region
    $region33: #{reslayer_forward_nchw.7} parent=5 // pred_check
      _
    $region34: #{reslayer_forward_nchw.7} parent=5 // pred_check_branch
      %212 = sbr.rel (%p209) target = $region36
    $region35: #{reslayer_forward_nchw.7} parent=5 // pred_region
      %s213 = ssub.s32 %s10, 1
      %p214 = scmp.lt.s32.totalorder %s19, 1
      %s215 = scalar_select %p214, %s19, 1
      %s216 = smul.addr %s215, 13
      %s217 = smul.addr %s216, 4
      %s218 = scalar_lea.vmem %s0, %s217
      %p219 = pneg %p48
      %p220 = pneg %p45
      %p221 = scmp.lt.s32.totalorder %s20, 0
      %s222 = scalar_select %p221, %s20, 0
      %s223 = smul.addr %s222, 4
      %s224 = scalar_lea.vmem %s1, %s223
      %p225 = pneg %p74
      %p226 = pneg %p71
      %p227 = scmp.lt.s32.totalorder %s20, 0
      %s228 = scalar_select %p227, %s20, 0
      %s229 = scalar_lea.vmem %s2, %s228
      %p230 = pneg %p100
      %p231 = pneg %p97
      %p232 = scmp.lt.s32.totalorder %s19, 1
      %s233 = scalar_select %p232, %s19, 1
      %p234 = scmp.lt.s32.totalorder %s20, 0
      %s235 = scalar_select %p234, %s20, 0
      %s236 = smul.addr %s233, 10
      %s237 = sadd.s32 %s235, %s236
      %s238 = smul.addr %s237, 4
      %s239 = scalar_lea.vmem %s3, %s238
      %p240 = pneg %p128
      %p241 = pneg %p125
      %p242 = pneg %p156
      %p243 = pneg %p153
      %p244 = scmp.lt.s32.totalorder %s19, 1
      %s245 = scalar_select %p244, %s19, 1
      %p246 = scmp.lt.s32.totalorder %s20, 0
      %s247 = scalar_select %p246, %s20, 0
      %s248 = smul.addr %s245, 10
      %s249 = sadd.s32 %s247, %s248
      %s250 = smul.addr %s249, 4
      %s251 = scalar_lea.vmem %s4, %s250
      %p252 = scmp.lt.s32.totalorder %s19, 1
      %s253 = scalar_select %p252, %s19, 1
      %s254 = smul.addr %s253, 13
      %s255 = smul.addr %s254, 4
      %s256 = scalar_lea.vmem %s0, %s255
      %p257 = scmp.lt.s32.totalorder %s20, 0
      %s258 = scalar_select %p257, %s20, 0
      %s259 = smul.addr %s258, 4
      %s260 = scalar_lea.vmem %s1, %s259
      %p261 = scmp.lt.s32.totalorder %s20, 0
      %s262 = scalar_select %p261, %s20, 0
      %s263 = scalar_lea.vmem %s2, %s262
      %p264 = scmp.lt.s32.totalorder %s19, 1
      %s265 = scalar_select %p264, %s19, 1
      %p266 = scmp.lt.s32.totalorder %s20, 0
      %s267 = scalar_select %p266, %s20, 0
      %s268 = smul.addr %s265, 10
      %s269 = sadd.s32 %s267, %s268
      %s270 = smul.addr %s269, 4
      %s271 = scalar_lea.vmem %s3, %s270
      %p272 = scmp.lt.s32.totalorder %s19, 1
      %s273 = scalar_select %p272, %s19, 1
      %p274 = scmp.lt.s32.totalorder %s20, 0
      %s275 = scalar_select %p274, %s20, 0
      %s276 = smul.addr %s273, 10
      %s277 = sadd.s32 %s275, %s276
      %s278 = smul.addr %s277, 4
      %s279 = scalar_lea.vmem %s4, %s278
      %v281 = vld [vmem:[%s256] sm:$0xf]
      %v282 = vld [vmem:[%s256 + $0x4] sm:$0xf]
      %v283 = vld [vmem:[%s256 + $0x8] sm:$0xf]
      %v284 = vld [vmem:[%s256 + $0xc] sm:$0xf]
      %v285 = vld [vmem:[%s256 + $0x10] sm:$0xf]
      %v286 = vld [vmem:[%s256 + $0x14] sm:$0xf]
      %v287 = vld [vmem:[%s256 + $0x18] sm:$0xf]
      %v288 = vld [vmem:[%s256 + $0x1c] sm:$0xf]
      %v289 = vld [vmem:[%s256 + $0x20] sm:$0xf]
      %v290 = vld [vmem:[%s256 + $0x24] sm:$0xf]
      %v291 = vld [vmem:[%s260] sm:$0xf]
      %v292 = vld [vmem:[%s256 + $0x28] sm:$0x1]
      %s293 = scalar_lea.vmem %s260, 4
      %v294 = vld [vmem:[%s293] sm:$0xf]
      %v306 = vunpack.c.l.b16 %v281
      %v307 = vunpack.c.l.b16 %v282
      %v308 = vunpack.c.l.b16 %v283
      %v309 = vunpack.c.l.b16 %v284
      %v310 = vunpack.c.l.b16 %v285
      %v311 = vunpack.c.l.b16 %v286
      %v312 = vunpack.c.l.b16 %v287
      %v313 = vunpack.c.l.b16 %v288
      %v314 = vunpack.c.l.b16 %v289
      %v315 = vunpack.c.l.b16 %v290
      %v316 = vunpack.c.l.b16 %v292
      %v317 = vpack.c.b16 %v307, %v306
      %v318 = vpack.c.b16 %v309, %v308
      %v319 = vpack.c.b16 %v311, %v310
      %v320 = vpack.c.b16 %v313, %v312
      %v321 = vpack.c.b16 %v315, %v314
      %v322 = vpack.c.b16 %v316, %v316
      %vm323 = vsmask.f32 7424
      %v325 = vshrl.u32 %v317, 16
      %v327 = vshll.u32 %v317, 16
      %v329 = vrot.slane %v327, 1
      %v330 = vor.u32 %v325, %v329
      %v332 = vshll.u32 %v318, 16
      %v334 = vrot.slane %v332, 1
      %v335 = vsel %vm323, %v330, %v334
      %v336 = vshrl.u32 %v318, 16
      %v338 = vor.u32 %v336, %v334
      %v340 = vshll.u32 %v319, 16
      %v342 = vrot.slane %v340, 1
      %v343 = vsel %vm323, %v338, %v342
      %v344 = vshrl.u32 %v319, 16
      %v346 = vor.u32 %v344, %v342
      %v348 = vshll.u32 %v320, 16
      %v350 = vrot.slane %v348, 1
      %v351 = vsel %vm323, %v346, %v350
      %v352 = vshrl.u32 %v320, 16
      %v354 = vor.u32 %v352, %v350
      %v356 = vshll.u32 %v321, 16
      %v358 = vrot.slane %v356, 1
      %v359 = vsel %vm323, %v354, %v358
      %v360 = vshrl.u32 %v321, 16
      %v362 = vor.u32 %v360, %v358
      %v364 = vshll.u32 %v322, 16
      %v366 = vrot.slane %v364, 1
      %v367 = vsel %vm323, %v362, %v366
      %vm368 = vcmask 64512
      %v370 = vsel %vm368, %v335, 0
      %v373 = vsel %vm368, %v343, 0
      %v376 = vsel %vm368, %v351, 0
      %v379 = vsel %vm368, %v359, 0
      %v382 = vsel %vm368, %v367, 0
      %vm384 = vcmask 1043456
      %v386 = vsel %vm384, %v294, 0
      %388 = vmatpush.bf16.msra.mxu0 0
      %389 = vmatpush.bf16.msra.mxu0 0
      %390 = vmatpush.bf16.msra.mxu0 0
      %391 = vmatpush.bf16.msra.mxu0 0
      %392 = vmatpush.bf16.msra.mxu0 0
      %393 = vmatpush.bf16.msra.mxu0 0
      %394 = vmatpush.bf16.msra.mxu0 0
      %395 = vmatpush.bf16.msra.mxu0 %v386
      %396 = vmatmul.bf16.gmra.mxu0 %v370
      %v397 = vpop.f32.mrf.mxu0
      %v398 = vadd.f32 0.0, %v397
      %v399 = vpop.f32.mrf.mxu0
      %v400 = vadd.f32 0.0, %v399
      %401 = vmatmul.bf16.gmra.mxu0 %v373
      %v402 = vpop.f32.mrf.mxu0
      %v403 = vadd.f32 0.0, %v402
      %v404 = vpop.f32.mrf.mxu0
      %v405 = vadd.f32 0.0, %v404
      %406 = vmatmul.bf16.gmra.mxu0 %v376
      %v407 = vpop.f32.mrf.mxu0
      %v408 = vadd.f32 0.0, %v407
      %v409 = vpop.f32.mrf.mxu0
      %v410 = vadd.f32 0.0, %v409
      %411 = vmatmul.bf16.gmra.mxu0 %v379
      %v412 = vpop.f32.mrf.mxu0
      %v413 = vadd.f32 0.0, %v412
      %v414 = vpop.f32.mrf.mxu0
      %v415 = vadd.f32 0.0, %v414
      %416 = vmatmul.bf16.gmra.mxu0 %v382
      %v417 = vpop.f32.mrf.mxu0
      %v418 = vadd.f32 0.0, %v417
      %v419 = vpop.f32.mrf.mxu0
      %v420 = vadd.f32 0.0, %v419
      %421 = vdwg.mxu0
      %v422 = vsel %vm368, %v317, 0
      %v424 = vsel %vm368, %v318, 0
      %v426 = vsel %vm368, %v319, 0
      %v428 = vsel %vm368, %v320, 0
      %v430 = vsel %vm368, %v321, 0
      %v433 = vsel %vm384, %v291, 0
      %435 = vmatpush.bf16.msra.mxu0 0
      %436 = vmatpush.bf16.msra.mxu0 0
      %437 = vmatpush.bf16.msra.mxu0 0
      %438 = vmatpush.bf16.msra.mxu0 0
      %439 = vmatpush.bf16.msra.mxu0 0
      %440 = vmatpush.bf16.msra.mxu0 0
      %441 = vmatpush.bf16.msra.mxu0 0
      %442 = vmatpush.bf16.msra.mxu0 %v433
      %443 = vmatmul.bf16.gmra.mxu0 %v422
      %v444 = vpop.f32.mrf.mxu0
      %v445 = vadd.f32 %v398, %v444
      %v446 = vpop.f32.mrf.mxu0
      %v447 = vadd.f32 %v400, %v446
      %448 = vmatmul.bf16.gmra.mxu0 %v424
      %v449 = vpop.f32.mrf.mxu0
      %v450 = vadd.f32 %v403, %v449
      %v451 = vpop.f32.mrf.mxu0
      %v452 = vadd.f32 %v405, %v451
      %453 = vmatmul.bf16.gmra.mxu0 %v426
      %v454 = vpop.f32.mrf.mxu0
      %v455 = vadd.f32 %v408, %v454
      %v456 = vpop.f32.mrf.mxu0
      %v457 = vadd.f32 %v410, %v456
      %458 = vmatmul.bf16.gmra.mxu0 %v428
      %v459 = vpop.f32.mrf.mxu0
      %v460 = vadd.f32 %v413, %v459
      %v461 = vpop.f32.mrf.mxu0
      %v462 = vadd.f32 %v415, %v461
      %463 = vmatmul.bf16.gmra.mxu0 %v430
      %v464 = vpop.f32.mrf.mxu0
      %v465 = vadd.f32 %v418, %v464
      %v466 = vpop.f32.mrf.mxu0
      %v467 = vadd.f32 %v420, %v466
      %468 = vdwg.mxu0
      %v469 = vld [vmem:[%s256] sm:$0xe]
      %s470 = scalar_lea.vmem %s260, 8
      %v471 = vld [vmem:[%s470] sm:$0xf]
      %v473 = vunpack.c.l.b16 %v469
      %v474 = vpack.c.b16 %v307, %v473
      %vm475 = vcmask 1046528
      %v476 = vrot.slane %v474, 1
      %v477 = vrot.slane %v318, 1
      %v478 = vsel %vm475, %v476, %v477
      %v479 = vrot.slane %v319, 1
      %v480 = vsel %vm475, %v477, %v479
      %v481 = vrot.slane %v320, 1
      %v482 = vsel %vm475, %v479, %v481
      %v483 = vrot.slane %v321, 1
      %v484 = vsel %vm475, %v481, %v483
      %v485 = vrot.slane %v322, 1
      %v486 = vsel %vm475, %v483, %v485
      %v488 = vsel %vm368, %v478, 0
      %v491 = vsel %vm368, %v480, 0
      %v494 = vsel %vm368, %v482, 0
      %v497 = vsel %vm368, %v484, 0
      %v500 = vsel %vm368, %v486, 0
      %v503 = vsel %vm384, %v471, 0
      %505 = vmatpush.bf16.msra.mxu0 0
      %506 = vmatpush.bf16.msra.mxu0 0
      %507 = vmatpush.bf16.msra.mxu0 0
      %508 = vmatpush.bf16.msra.mxu0 0
      %509 = vmatpush.bf16.msra.mxu0 0
      %510 = vmatpush.bf16.msra.mxu0 0
      %511 = vmatpush.bf16.msra.mxu0 0
      %512 = vmatpush.bf16.msra.mxu0 %v503
      %513 = vmatmul.bf16.gmra.mxu0 %v488
      %v514 = vpop.f32.mrf.mxu0
      %v515 = vadd.f32 0.0, %v514
      %v516 = vpop.f32.mrf.mxu0
      %v517 = vadd.f32 0.0, %v516
      %518 = vmatmul.bf16.gmra.mxu0 %v491
      %v519 = vpop.f32.mrf.mxu0
      %v520 = vadd.f32 0.0, %v519
      %v521 = vpop.f32.mrf.mxu0
      %v522 = vadd.f32 0.0, %v521
      %523 = vmatmul.bf16.gmra.mxu0 %v494
      %v524 = vpop.f32.mrf.mxu0
      %v525 = vadd.f32 0.0, %v524
      %v526 = vpop.f32.mrf.mxu0
      %v527 = vadd.f32 0.0, %v526
      %528 = vmatmul.bf16.gmra.mxu0 %v497
      %v529 = vpop.f32.mrf.mxu0
      %v530 = vadd.f32 0.0, %v529
      %v531 = vpop.f32.mrf.mxu0
      %v532 = vadd.f32 0.0, %v531
      %533 = vmatmul.bf16.gmra.mxu0 %v500
      %v534 = vpop.f32.mrf.mxu0
      %v535 = vadd.f32 0.0, %v534
      %v536 = vpop.f32.mrf.mxu0
      %v537 = vadd.f32 0.0, %v536
      %538 = vdwg.mxu0
      %v539 = vadd.f32 %v445, %v515
      %v540 = vadd.f32 %v447, %v517
      %v541 = vadd.f32 %v450, %v520
      %v542 = vadd.f32 %v452, %v522
      %v543 = vadd.f32 %v455, %v525
      %v544 = vadd.f32 %v457, %v527
      %v545 = vadd.f32 %v460, %v530
      %v546 = vadd.f32 %v462, %v532
      %v547 = vadd.f32 %v465, %v535
      %v548 = vadd.f32 %v467, %v537
      %v549 = vld [vmem:[%s256 + $0x4] sm:$0xe]
      %v550 = vld [vmem:[%s256 + $0x8] sm:$0xf]
      %v551 = vld [vmem:[%s256 + $0xc] sm:$0xf]
      %v552 = vld [vmem:[%s256 + $0x10] sm:$0xf]
      %v553 = vld [vmem:[%s256 + $0x14] sm:$0xf]
      %v554 = vld [vmem:[%s256 + $0x18] sm:$0xf]
      %v555 = vld [vmem:[%s256 + $0x1c] sm:$0xf]
      %v556 = vld [vmem:[%s256 + $0x20] sm:$0xf]
      %v557 = vld [vmem:[%s256 + $0x24] sm:$0xf]
      %v558 = vld [vmem:[%s256 + $0x28] sm:$0xf]
      %v559 = vld [vmem:[%s256 + $0x2c] sm:$0x1]
      %s560 = scalar_lea.vmem %s260, 12
      %v561 = vld [vmem:[%s560] sm:$0xf]
      %v573 = vunpack.c.l.b16 %v549
      %v574 = vunpack.c.l.b16 %v550
      %v575 = vunpack.c.l.b16 %v551
      %v576 = vunpack.c.l.b16 %v552
      %v577 = vunpack.c.l.b16 %v553
      %v578 = vunpack.c.l.b16 %v554
      %v579 = vunpack.c.l.b16 %v555
      %v580 = vunpack.c.l.b16 %v556
      %v581 = vunpack.c.l.b16 %v557
      %v582 = vunpack.c.l.b16 %v558
      %v583 = vunpack.c.l.b16 %v559
      %v584 = vpack.c.b16 %v574, %v573
      %v585 = vpack.c.b16 %v576, %v575
      %v586 = vpack.c.b16 %v578, %v577
      %v587 = vpack.c.b16 %v580, %v579
      %v588 = vpack.c.b16 %v582, %v581
      %v589 = vpack.c.b16 %v583, %v583
      %v590 = vrot.slane %v584, 1
      %v591 = vrot.slane %v585, 1
      %v592 = vsel %vm475, %v590, %v591
      %v593 = vrot.slane %v586, 1
      %v594 = vsel %vm475, %v591, %v593
      %v595 = vrot.slane %v587, 1
      %v596 = vsel %vm475, %v593, %v595
      %v597 = vrot.slane %v588, 1
      %v598 = vsel %vm475, %v595, %v597
      %v599 = vrot.slane %v589, 1
      %v600 = vsel %vm475, %v597, %v599
      %v602 = vsel %vm368, %v592, 0
      %v605 = vsel %vm368, %v594, 0
      %v608 = vsel %vm368, %v596, 0
      %v611 = vsel %vm368, %v598, 0
      %v614 = vsel %vm368, %v600, 0
      %v617 = vsel %vm384, %v561, 0
      %619 = vmatpush.bf16.msra.mxu0 0
      %620 = vmatpush.bf16.msra.mxu0 0
      %621 = vmatpush.bf16.msra.mxu0 0
      %622 = vmatpush.bf16.msra.mxu0 0
      %623 = vmatpush.bf16.msra.mxu0 0
      %624 = vmatpush.bf16.msra.mxu0 0
      %625 = vmatpush.bf16.msra.mxu0 0
      %626 = vmatpush.bf16.msra.mxu0 %v617
      %627 = vmatmul.bf16.gmra.mxu0 %v602
      %v628 = vpop.f32.mrf.mxu0
      %v629 = vadd.f32 0.0, %v628
      %v630 = vpop.f32.mrf.mxu0
      %v631 = vadd.f32 0.0, %v630
      %632 = vmatmul.bf16.gmra.mxu0 %v605
      %v633 = vpop.f32.mrf.mxu0
      %v634 = vadd.f32 0.0, %v633
      %v635 = vpop.f32.mrf.mxu0
      %v636 = vadd.f32 0.0, %v635
      %637 = vmatmul.bf16.gmra.mxu0 %v608
      %v638 = vpop.f32.mrf.mxu0
      %v639 = vadd.f32 0.0, %v638
      %v640 = vpop.f32.mrf.mxu0
      %v641 = vadd.f32 0.0, %v640
      %642 = vmatmul.bf16.gmra.mxu0 %v611
      %v643 = vpop.f32.mrf.mxu0
      %v644 = vadd.f32 0.0, %v643
      %v645 = vpop.f32.mrf.mxu0
      %v646 = vadd.f32 0.0, %v645
      %647 = vmatmul.bf16.gmra.mxu0 %v614
      %v648 = vpop.f32.mrf.mxu0
      %v649 = vadd.f32 0.0, %v648
      %v650 = vpop.f32.mrf.mxu0
      %v651 = vadd.f32 0.0, %v650
      %652 = vdwg.mxu0
      %v653 = vadd.f32 %v539, %v629
      %v654 = vadd.f32 %v540, %v631
      %v655 = vadd.f32 %v541, %v634
      %v656 = vadd.f32 %v542, %v636
      %v657 = vadd.f32 %v543, %v639
      %v658 = vadd.f32 %v544, %v641
      %v659 = vadd.f32 %v545, %v644
      %v660 = vadd.f32 %v546, %v646
      %v661 = vadd.f32 %v547, %v649
      %v662 = vadd.f32 %v548, %v651
      %v663 = vld [vmem:[%s256 + $0x2c] sm:$0x3]
      %s664 = scalar_lea.vmem %s260, 16
      %v665 = vld [vmem:[%s664] sm:$0xf]
      %v667 = vunpack.c.l.b16 %v663
      %v668 = vpack.c.b16 %v667, %v667
      %vm669 = vsmask.f32 6400
      %v671 = vshrl.u32 %v584, 16
      %v673 = vrot.slane %v671, 1
      %v674 = vshll.u32 %v584, 16
      %v676 = vrot.slane %v674, 2
      %v677 = vor.u32 %v673, %v676
      %v679 = vshrl.u32 %v585, 16
      %v681 = vrot.slane %v679, 1
      %v682 = vshll.u32 %v585, 16
      %v684 = vrot.slane %v682, 2
      %v685 = vor.u32 %v681, %v684
      %v686 = vsel %vm669, %v677, %v685
      %v688 = vshrl.u32 %v586, 16
      %v690 = vrot.slane %v688, 1
      %v691 = vshll.u32 %v586, 16
      %v693 = vrot.slane %v691, 2
      %v694 = vor.u32 %v690, %v693
      %v695 = vsel %vm669, %v685, %v694
      %v697 = vshrl.u32 %v587, 16
      %v699 = vrot.slane %v697, 1
      %v700 = vshll.u32 %v587, 16
      %v702 = vrot.slane %v700, 2
      %v703 = vor.u32 %v699, %v702
      %v704 = vsel %vm669, %v694, %v703
      %v706 = vshrl.u32 %v588, 16
      %v708 = vrot.slane %v706, 1
      %v709 = vshll.u32 %v588, 16
      %v711 = vrot.slane %v709, 2
      %v712 = vor.u32 %v708, %v711
      %v713 = vsel %vm669, %v703, %v712
      %v715 = vshrl.u32 %v668, 16
      %v717 = vrot.slane %v715, 1
      %v718 = vshll.u32 %v668, 16
      %v720 = vrot.slane %v718, 2
      %v721 = vor.u32 %v717, %v720
      %v722 = vsel %vm669, %v712, %v721
      %v724 = vsel %vm368, %v686, 0
      %v727 = vsel %vm368, %v695, 0
      %v730 = vsel %vm368, %v704, 0
      %v733 = vsel %vm368, %v713, 0
      %v736 = vsel %vm368, %v722, 0
      %v739 = vsel %vm384, %v665, 0
      %741 = vmatpush.bf16.msra.mxu0 0
      %742 = vmatpush.bf16.msra.mxu0 0
      %743 = vmatpush.bf16.msra.mxu0 0
      %744 = vmatpush.bf16.msra.mxu0 0
      %745 = vmatpush.bf16.msra.mxu0 0
      %746 = vmatpush.bf16.msra.mxu0 0
      %747 = vmatpush.bf16.msra.mxu0 0
      %748 = vmatpush.bf16.msra.mxu0 %v739
      %749 = vmatmul.bf16.gmra.mxu0 %v724
      %v750 = vpop.f32.mrf.mxu0
      %v751 = vadd.f32 0.0, %v750
      %v752 = vpop.f32.mrf.mxu0
      %v753 = vadd.f32 0.0, %v752
      %754 = vmatmul.bf16.gmra.mxu0 %v727
      %v755 = vpop.f32.mrf.mxu0
      %v756 = vadd.f32 0.0, %v755
      %v757 = vpop.f32.mrf.mxu0
      %v758 = vadd.f32 0.0, %v757
      %759 = vmatmul.bf16.gmra.mxu0 %v730
      %v760 = vpop.f32.mrf.mxu0
      %v761 = vadd.f32 0.0, %v760
      %v762 = vpop.f32.mrf.mxu0
      %v763 = vadd.f32 0.0, %v762
      %764 = vmatmul.bf16.gmra.mxu0 %v733
      %v765 = vpop.f32.mrf.mxu0
      %v766 = vadd.f32 0.0, %v765
      %v767 = vpop.f32.mrf.mxu0
      %v768 = vadd.f32 0.0, %v767
      %769 = vmatmul.bf16.gmra.mxu0 %v736
      %v770 = vpop.f32.mrf.mxu0
      %v771 = vadd.f32 0.0, %v770
      %v772 = vpop.f32.mrf.mxu0
      %v773 = vadd.f32 0.0, %v772
      %774 = vdwg.mxu0
      %v775 = vadd.f32 %v653, %v751
      %v776 = vadd.f32 %v654, %v753
      %v777 = vadd.f32 %v655, %v756
      %v778 = vadd.f32 %v656, %v758
      %v779 = vadd.f32 %v657, %v761
      %v780 = vadd.f32 %v658, %v763
      %v781 = vadd.f32 %v659, %v766
      %v782 = vadd.f32 %v660, %v768
      %v783 = vadd.f32 %v661, %v771
      %v784 = vadd.f32 %v662, %v773
      %v785 = vld [vmem:[%s256 + $0x4] sm:$0xc]
      %s786 = scalar_lea.vmem %s260, 20
      %v787 = vld [vmem:[%s786] sm:$0xf]
      %v789 = vunpack.c.l.b16 %v785
      %v790 = vpack.c.b16 %v574, %v789
      %vm791 = vcmask 1045504
      %v792 = vrot.slane %v790, 2
      %v793 = vrot.slane %v585, 2
      %v794 = vsel %vm791, %v792, %v793
      %v795 = vrot.slane %v586, 2
      %v796 = vsel %vm791, %v793, %v795
      %v797 = vrot.slane %v587, 2
      %v798 = vsel %vm791, %v795, %v797
      %v799 = vrot.slane %v588, 2
      %v800 = vsel %vm791, %v797, %v799
      %v801 = vrot.slane %v668, 2
      %v802 = vsel %vm791, %v799, %v801
      %v804 = vsel %vm368, %v794, 0
      %v807 = vsel %vm368, %v796, 0
      %v810 = vsel %vm368, %v798, 0
      %v813 = vsel %vm368, %v800, 0
      %v816 = vsel %vm368, %v802, 0
      %v819 = vsel %vm384, %v787, 0
      %821 = vmatpush.bf16.msra.mxu0 0
      %822 = vmatpush.bf16.msra.mxu0 0
      %823 = vmatpush.bf16.msra.mxu0 0
      %824 = vmatpush.bf16.msra.mxu0 0
      %825 = vmatpush.bf16.msra.mxu0 0
      %826 = vmatpush.bf16.msra.mxu0 0
      %827 = vmatpush.bf16.msra.mxu0 0
      %828 = vmatpush.bf16.msra.mxu0 %v819
      %829 = vmatmul.bf16.gmra.mxu0 %v804
      %v830 = vpop.f32.mrf.mxu0
      %v831 = vadd.f32 0.0, %v830
      %v832 = vpop.f32.mrf.mxu0
      %v833 = vadd.f32 0.0, %v832
      %834 = vmatmul.bf16.gmra.mxu0 %v807
      %v835 = vpop.f32.mrf.mxu0
      %v836 = vadd.f32 0.0, %v835
      %v837 = vpop.f32.mrf.mxu0
      %v838 = vadd.f32 0.0, %v837
      %839 = vmatmul.bf16.gmra.mxu0 %v810
      %v840 = vpop.f32.mrf.mxu0
      %v841 = vadd.f32 0.0, %v840
      %v842 = vpop.f32.mrf.mxu0
      %v843 = vadd.f32 0.0, %v842
      %844 = vmatmul.bf16.gmra.mxu0 %v813
      %v845 = vpop.f32.mrf.mxu0
      %v846 = vadd.f32 0.0, %v845
      %v847 = vpop.f32.mrf.mxu0
      %v848 = vadd.f32 0.0, %v847
      %849 = vmatmul.bf16.gmra.mxu0 %v816
      %v850 = vpop.f32.mrf.mxu0
      %v851 = vadd.f32 0.0, %v850
      %v852 = vpop.f32.mrf.mxu0
      %v853 = vadd.f32 0.0, %v852
      %854 = vdwg.mxu0
      %v855 = vadd.f32 %v775, %v831
      %v856 = vadd.f32 %v776, %v833
      %v857 = vadd.f32 %v777, %v836
      %v858 = vadd.f32 %v778, %v838
      %v859 = vadd.f32 %v779, %v841
      %v860 = vadd.f32 %v780, %v843
      %v861 = vadd.f32 %v781, %v846
      %v862 = vadd.f32 %v782, %v848
      %v863 = vadd.f32 %v783, %v851
      %v864 = vadd.f32 %v784, %v853
      %v865 = vld [vmem:[%s256 + $0x8] sm:$0xc]
      %v866 = vld [vmem:[%s256 + $0xc] sm:$0xf]
      %v867 = vld [vmem:[%s256 + $0x10] sm:$0xf]
      %v868 = vld [vmem:[%s256 + $0x14] sm:$0xf]
      %v869 = vld [vmem:[%s256 + $0x18] sm:$0xf]
      %v870 = vld [vmem:[%s256 + $0x1c] sm:$0xf]
      %v871 = vld [vmem:[%s256 + $0x20] sm:$0xf]
      %v872 = vld [vmem:[%s256 + $0x24] sm:$0xf]
      %v873 = vld [vmem:[%s256 + $0x28] sm:$0xf]
      %v874 = vld [vmem:[%s256 + $0x2c] sm:$0xf]
      %v875 = vld [vmem:[%s256 + $0x30] sm:$0x3]
      %s876 = scalar_lea.vmem %s260, 24
      %v877 = vld [vmem:[%s876] sm:$0xf]
      %v889 = vunpack.c.l.b16 %v865
      %v890 = vunpack.c.l.b16 %v866
      %v891 = vunpack.c.l.b16 %v867
      %v892 = vunpack.c.l.b16 %v868
      %v893 = vunpack.c.l.b16 %v869
      %v894 = vunpack.c.l.b16 %v870
      %v895 = vunpack.c.l.b16 %v871
      %v896 = vunpack.c.l.b16 %v872
      %v897 = vunpack.c.l.b16 %v873
      %v898 = vunpack.c.l.b16 %v874
      %v899 = vunpack.c.l.b16 %v875
      %v900 = vpack.c.b16 %v890, %v889
      %v901 = vpack.c.b16 %v892, %v891
      %v902 = vpack.c.b16 %v894, %v893
      %v903 = vpack.c.b16 %v896, %v895
      %v904 = vpack.c.b16 %v898, %v897
      %v905 = vpack.c.b16 %v899, %v899
      %v906 = vrot.slane %v900, 2
      %v907 = vrot.slane %v901, 2
      %v908 = vsel %vm791, %v906, %v907
      %v909 = vrot.slane %v902, 2
      %v910 = vsel %vm791, %v907, %v909
      %v911 = vrot.slane %v903, 2
      %v912 = vsel %vm791, %v909, %v911
      %v913 = vrot.slane %v904, 2
      %v914 = vsel %vm791, %v911, %v913
      %v915 = vrot.slane %v905, 2
      %v916 = vsel %vm791, %v913, %v915
      %v918 = vsel %vm368, %v908, 0
      %v921 = vsel %vm368, %v910, 0
      %v924 = vsel %vm368, %v912, 0
      %v927 = vsel %vm368, %v914, 0
      %v930 = vsel %vm368, %v916, 0
      %v933 = vsel %vm384, %v877, 0
      %935 = vmatpush.bf16.msra.mxu0 0
      %936 = vmatpush.bf16.msra.mxu0 0
      %937 = vmatpush.bf16.msra.mxu0 0
      %938 = vmatpush.bf16.msra.mxu0 0
      %939 = vmatpush.bf16.msra.mxu0 0
      %940 = vmatpush.bf16.msra.mxu0 0
      %941 = vmatpush.bf16.msra.mxu0 0
      %942 = vmatpush.bf16.msra.mxu0 %v933
      %943 = vmatmul.bf16.gmra.mxu0 %v918
      %v944 = vpop.f32.mrf.mxu0
      %v945 = vadd.f32 0.0, %v944
      %v946 = vpop.f32.mrf.mxu0
      %v947 = vadd.f32 0.0, %v946
      %948 = vmatmul.bf16.gmra.mxu0 %v921
      %v949 = vpop.f32.mrf.mxu0
      %v950 = vadd.f32 0.0, %v949
      %v951 = vpop.f32.mrf.mxu0
      %v952 = vadd.f32 0.0, %v951
      %953 = vmatmul.bf16.gmra.mxu0 %v924
      %v954 = vpop.f32.mrf.mxu0
      %v955 = vadd.f32 0.0, %v954
      %v956 = vpop.f32.mrf.mxu0
      %v957 = vadd.f32 0.0, %v956
      %958 = vmatmul.bf16.gmra.mxu0 %v927
      %v959 = vpop.f32.mrf.mxu0
      %v960 = vadd.f32 0.0, %v959
      %v961 = vpop.f32.mrf.mxu0
      %v962 = vadd.f32 0.0, %v961
      %963 = vmatmul.bf16.gmra.mxu0 %v930
      %v964 = vpop.f32.mrf.mxu0
      %v965 = vadd.f32 0.0, %v964
      %v966 = vpop.f32.mrf.mxu0
      %v967 = vadd.f32 0.0, %v966
      %968 = vdwg.mxu0
      %v969 = vadd.f32 %v855, %v945
      %v970 = vadd.f32 %v856, %v947
      %v971 = vadd.f32 %v857, %v950
      %v972 = vadd.f32 %v858, %v952
      %v973 = vadd.f32 %v859, %v955
      %v974 = vadd.f32 %v860, %v957
      %v975 = vadd.f32 %v861, %v960
      %v976 = vadd.f32 %v862, %v962
      %v977 = vadd.f32 %v863, %v965
      %v978 = vadd.f32 %v864, %v967
      %v979 = vld [vmem:[%s256 + $0x30] sm:$0x7]
      %s980 = scalar_lea.vmem %s260, 28
      %v981 = vld [vmem:[%s980] sm:$0xf]
      %v983 = vunpack.c.l.b16 %v979
      %v984 = vpack.c.b16 %v983, %v983
      %vm985 = vsmask.f32 5376
      %v987 = vshrl.u32 %v900, 16
      %v989 = vrot.slane %v987, 2
      %v990 = vshll.u32 %v900, 16
      %v992 = vrot.slane %v990, 3
      %v993 = vor.u32 %v989, %v992
      %v995 = vshrl.u32 %v901, 16
      %v997 = vrot.slane %v995, 2
      %v998 = vshll.u32 %v901, 16
      %v1000 = vrot.slane %v998, 3
      %v1001 = vor.u32 %v997, %v1000
      %v1002 = vsel %vm985, %v993, %v1001
      %v1004 = vshrl.u32 %v902, 16
      %v1006 = vrot.slane %v1004, 2
      %v1007 = vshll.u32 %v902, 16
      %v1009 = vrot.slane %v1007, 3
      %v1010 = vor.u32 %v1006, %v1009
      %v1011 = vsel %vm985, %v1001, %v1010
      %v1013 = vshrl.u32 %v903, 16
      %v1015 = vrot.slane %v1013, 2
      %v1016 = vshll.u32 %v903, 16
      %v1018 = vrot.slane %v1016, 3
      %v1019 = vor.u32 %v1015, %v1018
      %v1020 = vsel %vm985, %v1010, %v1019
      %v1022 = vshrl.u32 %v904, 16
      %v1024 = vrot.slane %v1022, 2
      %v1025 = vshll.u32 %v904, 16
      %v1027 = vrot.slane %v1025, 3
      %v1028 = vor.u32 %v1024, %v1027
      %v1029 = vsel %vm985, %v1019, %v1028
      %v1031 = vshrl.u32 %v984, 16
      %v1033 = vrot.slane %v1031, 2
      %v1034 = vshll.u32 %v984, 16
      %v1036 = vrot.slane %v1034, 3
      %v1037 = vor.u32 %v1033, %v1036
      %v1038 = vsel %vm985, %v1028, %v1037
      %v1040 = vsel %vm368, %v1002, 0
      %v1043 = vsel %vm368, %v1011, 0
      %v1046 = vsel %vm368, %v1020, 0
      %v1049 = vsel %vm368, %v1029, 0
      %v1052 = vsel %vm368, %v1038, 0
      %v1055 = vsel %vm384, %v981, 0
      %1057 = vmatpush.bf16.msra.mxu0 0
      %1058 = vmatpush.bf16.msra.mxu0 0
      %1059 = vmatpush.bf16.msra.mxu0 0
      %1060 = vmatpush.bf16.msra.mxu0 0
      %1061 = vmatpush.bf16.msra.mxu0 0
      %1062 = vmatpush.bf16.msra.mxu0 0
      %1063 = vmatpush.bf16.msra.mxu0 0
      %1064 = vmatpush.bf16.msra.mxu0 %v1055
      %1065 = vmatmul.bf16.gmra.mxu0 %v1040
      %v1066 = vpop.f32.mrf.mxu0
      %v1067 = vadd.f32 0.0, %v1066
      %v1068 = vpop.f32.mrf.mxu0
      %v1069 = vadd.f32 0.0, %v1068
      %1070 = vmatmul.bf16.gmra.mxu0 %v1043
      %v1071 = vpop.f32.mrf.mxu0
      %v1072 = vadd.f32 0.0, %v1071
      %v1073 = vpop.f32.mrf.mxu0
      %v1074 = vadd.f32 0.0, %v1073
      %1075 = vmatmul.bf16.gmra.mxu0 %v1046
      %v1076 = vpop.f32.mrf.mxu0
      %v1077 = vadd.f32 0.0, %v1076
      %v1078 = vpop.f32.mrf.mxu0
      %v1079 = vadd.f32 0.0, %v1078
      %1080 = vmatmul.bf16.gmra.mxu0 %v1049
      %v1081 = vpop.f32.mrf.mxu0
      %v1082 = vadd.f32 0.0, %v1081
      %v1083 = vpop.f32.mrf.mxu0
      %v1084 = vadd.f32 0.0, %v1083
      %1085 = vmatmul.bf16.gmra.mxu0 %v1052
      %v1086 = vpop.f32.mrf.mxu0
      %v1087 = vadd.f32 0.0, %v1086
      %v1088 = vpop.f32.mrf.mxu0
      %v1089 = vadd.f32 0.0, %v1088
      %1090 = vdwg.mxu0
      %v1091 = vadd.f32 %v969, %v1067
      %v1092 = vadd.f32 %v970, %v1069
      %v1093 = vadd.f32 %v971, %v1072
      %v1094 = vadd.f32 %v972, %v1074
      %v1095 = vadd.f32 %v973, %v1077
      %v1096 = vadd.f32 %v974, %v1079
      %v1097 = vadd.f32 %v975, %v1082
      %v1098 = vadd.f32 %v976, %v1084
      %v1099 = vadd.f32 %v977, %v1087
      %v1100 = vadd.f32 %v978, %v1089
      %v1101 = vld [vmem:[%s256 + $0x8] sm:$0x8]
      %s1102 = scalar_lea.vmem %s260, 32
      %v1103 = vld [vmem:[%s1102] sm:$0xf]
      %v1105 = vunpack.c.l.b16 %v1101
      %v1106 = vpack.c.b16 %v890, %v1105
      %vm1107 = vcmask 1044480
      %v1108 = vrot.slane %v1106, 3
      %v1109 = vrot.slane %v901, 3
      %v1110 = vsel %vm1107, %v1108, %v1109
      %v1111 = vrot.slane %v902, 3
      %v1112 = vsel %vm1107, %v1109, %v1111
      %v1113 = vrot.slane %v903, 3
      %v1114 = vsel %vm1107, %v1111, %v1113
      %v1115 = vrot.slane %v904, 3
      %v1116 = vsel %vm1107, %v1113, %v1115
      %v1117 = vrot.slane %v984, 3
      %v1118 = vsel %vm1107, %v1115, %v1117
      %v1120 = vsel %vm368, %v1110, 0
      %v1123 = vsel %vm368, %v1112, 0
      %v1126 = vsel %vm368, %v1114, 0
      %v1129 = vsel %vm368, %v1116, 0
      %v1132 = vsel %vm368, %v1118, 0
      %v1135 = vsel %vm384, %v1103, 0
      %1137 = vmatpush.bf16.msra.mxu0 0
      %1138 = vmatpush.bf16.msra.mxu0 0
      %1139 = vmatpush.bf16.msra.mxu0 0
      %1140 = vmatpush.bf16.msra.mxu0 0
      %1141 = vmatpush.bf16.msra.mxu0 0
      %1142 = vmatpush.bf16.msra.mxu0 0
      %1143 = vmatpush.bf16.msra.mxu0 0
      %1144 = vmatpush.bf16.msra.mxu0 %v1135
      %1145 = vmatmul.bf16.gmra.mxu0 %v1120
      %v1146 = vpop.f32.mrf.mxu0
      %v1147 = vadd.f32 0.0, %v1146
      %v1148 = vpop.f32.mrf.mxu0
      %v1149 = vadd.f32 0.0, %v1148
      %1150 = vmatmul.bf16.gmra.mxu0 %v1123
      %v1151 = vpop.f32.mrf.mxu0
      %v1152 = vadd.f32 0.0, %v1151
      %v1153 = vpop.f32.mrf.mxu0
      %v1154 = vadd.f32 0.0, %v1153
      %1155 = vmatmul.bf16.gmra.mxu0 %v1126
      %v1156 = vpop.f32.mrf.mxu0
      %v1157 = vadd.f32 0.0, %v1156
      %v1158 = vpop.f32.mrf.mxu0
      %v1159 = vadd.f32 0.0, %v1158
      %1160 = vmatmul.bf16.gmra.mxu0 %v1129
      %v1161 = vpop.f32.mrf.mxu0
      %v1162 = vadd.f32 0.0, %v1161
      %v1163 = vpop.f32.mrf.mxu0
      %v1164 = vadd.f32 0.0, %v1163
      %1165 = vmatmul.bf16.gmra.mxu0 %v1132
      %v1166 = vpop.f32.mrf.mxu0
      %v1167 = vadd.f32 0.0, %v1166
      %v1168 = vpop.f32.mrf.mxu0
      %v1169 = vadd.f32 0.0, %v1168
      %1170 = vdwg.mxu0
      %v1171 = vadd.f32 %v1091, %v1147
      %v1172 = vadd.f32 %v1092, %v1149
      %v1173 = vadd.f32 %v1093, %v1152
      %v1174 = vadd.f32 %v1094, %v1154
      %v1175 = vadd.f32 %v1095, %v1157
      %v1176 = vadd.f32 %v1096, %v1159
      %v1177 = vadd.f32 %v1097, %v1162
      %v1178 = vadd.f32 %v1098, %v1164
      %v1179 = vadd.f32 %v1099, %v1167
      %v1180 = vadd.f32 %v1100, %v1169
      %v1181 = vld [vmem:[%s263] sm:$0x1]
      %v1183 = vperm.slane %v1181, 0
      %v1185 = vadd.f32 %v1171, %v1183
      %v1186 = vadd.f32 %v1172, %v1183
      %v1187 = vadd.f32 %v1173, %v1183
      %v1188 = vadd.f32 %v1174, %v1183
      %v1189 = vadd.f32 %v1175, %v1183
      %v1190 = vadd.f32 %v1176, %v1183
      %v1191 = vadd.f32 %v1177, %v1183
      %v1192 = vadd.f32 %v1178, %v1183
      %v1193 = vadd.f32 %v1179, %v1183
      %v1194 = vadd.f32 %v1180, %v1183
      %v1195 = vld [vmem:[%s271] sm:$0xf]
      %v1196 = vld [vmem:[%s271 + $0x4] sm:$0xf]
      %v1197 = vld [vmem:[%s271 + $0x8] sm:$0xf]
      %v1198 = vld [vmem:[%s271 + $0xc] sm:$0xf]
      %v1199 = vld [vmem:[%s271 + $0x10] sm:$0xf]
      %v1200 = vld [vmem:[%s271 + $0x14] sm:$0xf]
      %v1201 = vld [vmem:[%s271 + $0x18] sm:$0xf]
      %v1202 = vld [vmem:[%s271 + $0x1c] sm:$0xf]
      %v1203 = vld [vmem:[%s271 + $0x20] sm:$0xf]
      %v1204 = vld [vmem:[%s271 + $0x24] sm:$0xf]
      %v1205 = vunpack.c.l.bf16 %v1195
      %v1206 = vunpack.c.l.bf16 %v1196
      %v1207 = vunpack.c.l.bf16 %v1197
      %v1208 = vunpack.c.l.bf16 %v1198
      %v1209 = vunpack.c.l.bf16 %v1199
      %v1210 = vunpack.c.l.bf16 %v1200
      %v1211 = vunpack.c.l.bf16 %v1201
      %v1212 = vunpack.c.l.bf16 %v1202
      %v1213 = vunpack.c.l.bf16 %v1203
      %v1214 = vunpack.c.l.bf16 %v1204
      %v1215 = vadd.f32 %v1185, %v1205
      %v1216 = vadd.f32 %v1186, %v1206
      %v1217 = vadd.f32 %v1187, %v1207
      %v1218 = vadd.f32 %v1188, %v1208
      %v1219 = vadd.f32 %v1189, %v1209
      %v1220 = vadd.f32 %v1190, %v1210
      %v1221 = vadd.f32 %v1191, %v1211
      %v1222 = vadd.f32 %v1192, %v1212
      %v1223 = vadd.f32 %v1193, %v1213
      %v1224 = vadd.f32 %v1194, %v1214
      %v1225 = vmax.f32 %v1215, 0.0
      %v1226 = vmax.f32 %v1216, 0.0
      %v1227 = vmax.f32 %v1217, 0.0
      %v1228 = vmax.f32 %v1218, 0.0
      %v1229 = vmax.f32 %v1219, 0.0
      %v1230 = vmax.f32 %v1220, 0.0
      %v1231 = vmax.f32 %v1221, 0.0
      %v1232 = vmax.f32 %v1222, 0.0
      %v1233 = vmax.f32 %v1223, 0.0
      %v1234 = vmax.f32 %v1224, 0.0
      %v1235 = vpack.c.bf16 %v1225, %v1225
      %v1236 = vpack.c.bf16 %v1226, %v1226
      %v1237 = vpack.c.bf16 %v1227, %v1227
      %v1238 = vpack.c.bf16 %v1228, %v1228
      %v1239 = vpack.c.bf16 %v1229, %v1229
      %v1240 = vpack.c.bf16 %v1230, %v1230
      %v1241 = vpack.c.bf16 %v1231, %v1231
      %v1242 = vpack.c.bf16 %v1232, %v1232
      %v1243 = vpack.c.bf16 %v1233, %v1233
      %v1244 = vpack.c.bf16 %v1234, %v1234
      %vm1245 = vcmask 60416
      %1246 = vst.msk [vmem:[%s279] sm:$0xf] %vm1245, %v1235
      %1247 = vst.msk [vmem:[%s279 + $0x4] sm:$0xf] %vm1245, %v1236
      %1248 = vst.msk [vmem:[%s279 + $0x8] sm:$0xf] %vm1245, %v1237
      %1249 = vst.msk [vmem:[%s279 + $0xc] sm:$0xf] %vm1245, %v1238
      %1250 = vst.msk [vmem:[%s279 + $0x10] sm:$0xf] %vm1245, %v1239
      %1251 = vst.msk [vmem:[%s279 + $0x14] sm:$0xf] %vm1245, %v1240
      %1252 = vst.msk [vmem:[%s279 + $0x18] sm:$0xf] %vm1245, %v1241
      %1253 = vst.msk [vmem:[%s279 + $0x1c] sm:$0xf] %vm1245, %v1242
      %1254 = vst.msk [vmem:[%s279 + $0x20] sm:$0xf] %vm1245, %v1243
      %1255 = vst.msk [vmem:[%s279 + $0x24] sm:$0xf] %vm1245, %v1244
      %p1256 = scmp.lt.s32.totalorder %s19, 1
      %s1257 = scalar_select %p1256, %s19, 1
      %p1258 = scmp.lt.s32.totalorder %s20, 0
      %s1259 = scalar_select %p1258, %s20, 0
      %s1260 = smul.addr %s1257, 10
      %s1261 = sadd.s32 %s1259, %s1260
      %s1262 = smul.addr %s1261, 4
      %s1263 = scalar_lea.vmem %s4, %s1262
      // Predicated region
      $region37: #{reslayer_forward_nchw.7} parent=35 // pred_check
        %p1264 = pneg %p153
      $region38: #{reslayer_forward_nchw.7} parent=35 // pred_check_branch
        %1266 = sbr.rel (%p1264) target = $region40
      $region39: #{reslayer_forward_nchw.7} parent=35 // pred_region
        _
      $region40: #{reslayer_forward_nchw.7} parent=35 // pred_fallthru
        _
    $region36: #{reslayer_forward_nchw.7} parent=5 // pred_fallthru
      _
    %p1267 = scmp.le.s32.totalorder 2, %s10
    // Predicated region
    $region41: #{reslayer_forward_nchw.7} parent=5 // pred_check
      %p1268 = pneg %p1267
    $region42: #{reslayer_forward_nchw.7} parent=5 // pred_check_branch
      %1270 = sbr.rel (%p1268) target = $region44
    $region43: #{reslayer_forward_nchw.7} parent=5 // pred_region
      %s1271 = ssub.s32 %s10, 2
      // Predicated region
      $region45: #{reslayer_forward_nchw.7} parent=43 // pred_check
        %p1272 = pneg %p159
      $region46: #{reslayer_forward_nchw.7} parent=43 // pred_check_branch
        %1274 = sbr.rel (%p1272) target = $region48
      $region47: #{reslayer_forward_nchw.7} parent=43 // pred_region
        %p1275 = scmp.lt.s32.totalorder %s21, 1
        %s1276 = scalar_select %p1275, %s21, 1
        %p1277 = scmp.lt.s32.totalorder %s22, 0
        %s1278 = scalar_select %p1277, %s22, 0
        %s1279 = smul.addr %s1276, 10
        %s1280 = sadd.s32 %s1278, %s1279
        %s1281 = smul.addr %s1280, 4
        %s1282 = scalar_lea.vmem %s4, %s1281
      $region48: #{reslayer_forward_nchw.7} parent=43 // pred_fallthru
        _
    $region44: #{reslayer_forward_nchw.7} parent=5 // pred_fallthru
      _
  $region6: #{reslayer_forward_nchw.7} parent=0 // loop_footer
    %s14 = sadd.s32 1, %s10
  $region7: #{reslayer_forward_nchw.7} parent=0 // loop_footer_branch
    %9 = sbr.rel target = $region3
  $region8: #{reslayer_forward_nchw.7} parent=0 // loop_exit
    _

// kernel: reslayer_forward_nchw.9
$region0: #{reslayer_forward_nchw.9}
  #allocation0 [shape = 'u32[]', space=smem, size = 0x4, offset = 0x4, fixed_abs, tag = 'smem constant byte address 0x4 - core index']
  #allocation1 [shape = 'u32[72,128]{1,0:T(1,128)}', space=vmem, size = 0x9000, scoped, tag = 'internal scratch']
  %s0 = inlined_call_operand.vmem [shape: bf16[2,104,8], index: 0, kind: input, shape index: {}]
  %s1 = inlined_call_operand.vmem [shape: bf16[9,8,8], index: 1, kind: input, shape index: {}]
  %s2 = inlined_call_operand.vmem [shape: f32[1,8], index: 2, kind: input, shape index: {}]
  %s3 = inlined_call_operand.vmem [shape: bf16[2,80,8], index: 3, kind: input, shape index: {}]
  %s4 = inlined_call_operand.vmem [shape: f32[2,80,8], index: 4, kind: output, shape index: {}]
  %s5 = sld [smem:[#allocation0]]
  $region49: #{reslayer_forward_nchw.9} parent=0
    _
  %s7 = ssub.s32 1, %s5
  %s8 = scalar_select 0, %s7, %s5
  loop: start=0, step=1, limit=4
  $region2: #{reslayer_forward_nchw.9} parent=0 // loop_pre_header
    _
  $region3: #{reslayer_forward_nchw.9} parent=0 // loop_header
    %s10 = sphi 0, %s14
    %p11 = scmp.ge.s32.totalorder %s10, 4
    %s17 = sphi 0, %s29
    %s18 = sphi 0, %s25
    %s19 = sphi 0, %s17
    %s20 = sphi 0, %s18
    %s21 = sphi 0, %s19
    %s22 = sphi 0, %s20
    %s32 = sphi 0, %s34
    %s35 = sphi 0, %s32
    %s36 = sphi 0, %s35
    %s52 = sphi 0, %s36
    %s58 = sphi 0, %s60
    %s61 = sphi 0, %s58
    %s62 = sphi 0, %s61
    %s78 = sphi 0, %s62
    %s84 = sphi 0, %s86
    %s87 = sphi 0, %s84
    %s88 = sphi 0, %s87
    %s104 = sphi 0, %s88
    %s112 = sphi 0, %s114
    %s115 = sphi 0, %s112
    %s116 = sphi 0, %s115
    %s132 = sphi 0, %s116
    %s140 = sphi 0, %s142
    %s143 = sphi 0, %s140
    %s144 = sphi 0, %s143
    %s160 = sphi 0, %s144
  $region4: #{reslayer_forward_nchw.9} parent=0 // loop_header_branch
    %13 = sbr.rel (%p11) target = $region8
  $region5: #{reslayer_forward_nchw.9} parent=0 // loop_body
    %s15 = ssub.s32 %s10, 1
    %s16 = ssub.s32 %s10, 2
    %s23 = sadd.s32 1, %s18
    %p24 = scmp.ge.s32.totalorder %s23, 1
    %s25 = scalar_select %p24, 0, %s23
    %s26 = sadd.s32 1, %s17
    %s27 = scalar_select %p24, %s26, %s17
    %p28 = scmp.ge.s32.totalorder %s27, 2
    %s29 = scalar_select %p28, 0, %s27
    %s30 = ssub.s32 %s17, %s29
    %p31 = scmp.eq.s32.totalorder %s30, 0
    %s33 = sadd.s32 %s32, 1
    %s34 = scalar_select %p31, %s32, %s33
    %p37 = pneg %p31
    %p38 = scmp.eq.s32.totalorder %s10, 1
    %p39 = por %p37, %p38
    %p40 = scmp.ne.s32.totalorder %s32, %s35
    %p41 = scmp.eq.s32.totalorder %s10, 0
    %p42 = por %p40, %p41
    %p43 = scmp.ne.s32.totalorder %s32, %s35
    %p44 = scmp.eq.s32.totalorder %s15, 1
    %p45 = por %p43, %p44
    %p46 = scmp.ne.s32.totalorder %s35, %s36
    %p47 = scmp.eq.s32.totalorder %s15, 0
    %p48 = por %p46, %p47
    %p49 = scmp.ne.s32.totalorder %s35, %s36
    %p50 = scmp.eq.s32.totalorder %s16, 1
    %p51 = por %p49, %p50
    %p53 = scmp.ne.s32.totalorder %s36, %s52
    %p54 = scmp.eq.s32.totalorder %s16, 0
    %p55 = por %p53, %p54
    %s56 = ssub.s32 %s18, %s25
    %p57 = scmp.eq.s32.totalorder %s56, 0
    %s59 = sadd.s32 %s58, 1
    %s60 = scalar_select %p57, %s58, %s59
    %p63 = pneg %p57
    %p64 = scmp.eq.s32.totalorder %s10, 1
    %p65 = por %p63, %p64
    %p66 = scmp.ne.s32.totalorder %s58, %s61
    %p67 = scmp.eq.s32.totalorder %s10, 0
    %p68 = por %p66, %p67
    %p69 = scmp.ne.s32.totalorder %s58, %s61
    %p70 = scmp.eq.s32.totalorder %s15, 1
    %p71 = por %p69, %p70
    %p72 = scmp.ne.s32.totalorder %s61, %s62
    %p73 = scmp.eq.s32.totalorder %s15, 0
    %p74 = por %p72, %p73
    %p75 = scmp.ne.s32.totalorder %s61, %s62
    %p76 = scmp.eq.s32.totalorder %s16, 1
    %p77 = por %p75, %p76
    %p79 = scmp.ne.s32.totalorder %s62, %s78
    %p80 = scmp.eq.s32.totalorder %s16, 0
    %p81 = por %p79, %p80
    %s82 = ssub.s32 %s18, %s25
    %p83 = scmp.eq.s32.totalorder %s82, 0
    %s85 = sadd.s32 %s84, 1
    %s86 = scalar_select %p83, %s84, %s85
    %p89 = pneg %p83
    %p90 = scmp.eq.s32.totalorder %s10, 1
    %p91 = por %p89, %p90
    %p92 = scmp.ne.s32.totalorder %s84, %s87
    %p93 = scmp.eq.s32.totalorder %s10, 0
    %p94 = por %p92, %p93
    %p95 = scmp.ne.s32.totalorder %s84, %s87
    %p96 = scmp.eq.s32.totalorder %s15, 1
    %p97 = por %p95, %p96
    %p98 = scmp.ne.s32.totalorder %s87, %s88
    %p99 = scmp.eq.s32.totalorder %s15, 0
    %p100 = por %p98, %p99
    %p101 = scmp.ne.s32.totalorder %s87, %s88
    %p102 = scmp.eq.s32.totalorder %s16, 1
    %p103 = por %p101, %p102
    %p105 = scmp.ne.s32.totalorder %s88, %s104
    %p106 = scmp.eq.s32.totalorder %s16, 0
    %p107 = por %p105, %p106
    %s108 = ssub.s32 %s17, %s29
    %s109 = ssub.s32 %s18, %s25
    %s110 = sor.u32 %s108, %s109
    %p111 = scmp.eq.s32.totalorder %s110, 0
    %s113 = sadd.s32 %s112, 1
    %s114 = scalar_select %p111, %s112, %s113
    %p117 = pneg %p111
    %p118 = scmp.eq.s32.totalorder %s10, 1
    %p119 = por %p117, %p118
    %p120 = scmp.ne.s32.totalorder %s112, %s115
    %p121 = scmp.eq.s32.totalorder %s10, 0
    %p122 = por %p120, %p121
    %p123 = scmp.ne.s32.totalorder %s112, %s115
    %p124 = scmp.eq.s32.totalorder %s15, 1
    %p125 = por %p123, %p124
    %p126 = scmp.ne.s32.totalorder %s115, %s116
    %p127 = scmp.eq.s32.totalorder %s15, 0
    %p128 = por %p126, %p127
    %p129 = scmp.ne.s32.totalorder %s115, %s116
    %p130 = scmp.eq.s32.totalorder %s16, 1
    %p131 = por %p129, %p130
    %p133 = scmp.ne.s32.totalorder %s116, %s132
    %p134 = scmp.eq.s32.totalorder %s16, 0
    %p135 = por %p133, %p134
    %s136 = ssub.s32 %s17, %s29
    %s137 = ssub.s32 %s18, %s25
    %s138 = sor.u32 %s136, %s137
    %p139 = scmp.eq.s32.totalorder %s138, 0
    %s141 = sadd.s32 %s140, 1
    %s142 = scalar_select %p139, %s140, %s141
    %p145 = pneg %p139
    %p146 = scmp.eq.s32.totalorder %s10, 1
    %p147 = por %p145, %p146
    %p148 = scmp.ne.s32.totalorder %s140, %s143
    %p149 = scmp.eq.s32.totalorder %s10, 0
    %p150 = por %p148, %p149
    %p151 = scmp.ne.s32.totalorder %s140, %s143
    %p152 = scmp.eq.s32.totalorder %s15, 1
    %p153 = por %p151, %p152
    %p154 = scmp.ne.s32.totalorder %s143, %s144
    %p155 = scmp.eq.s32.totalorder %s15, 0
    %p156 = por %p154, %p155
    %p157 = scmp.ne.s32.totalorder %s143, %s144
    %p158 = scmp.eq.s32.totalorder %s16, 1
    %p159 = por %p157, %p158
    %p161 = scmp.ne.s32.totalorder %s144, %s160
    %p162 = scmp.eq.s32.totalorder %s16, 0
    %p163 = por %p161, %p162
    %p164 = scmp.le.s32.totalorder 1, %s10
    %p165 = scmp.lt.s32.totalorder %s10, 3
    %p166 = pnand %p164, %p165
    %p167 = pneg %p166
    // Predicated region
    $region9: #{reslayer_forward_nchw.9} parent=5 // pred_check
      _
    $region10: #{reslayer_forward_nchw.9} parent=5 // pred_check_branch
      %169 = sbr.rel (%p166) target = $region12
    $region11: #{reslayer_forward_nchw.9} parent=5 // pred_region
      %s170 = ssub.s32 %s10, 1
      // Predicated region
      $region13: #{reslayer_forward_nchw.9} parent=11 // pred_check
        %p171 = pneg %p74
      $region14: #{reslayer_forward_nchw.9} parent=11 // pred_check_branch
        %173 = sbr.rel (%p171) target = $region16
      $region15: #{reslayer_forward_nchw.9} parent=11 // pred_region
        %p174 = scmp.lt.s32.totalorder %s20, 0
        %s175 = scalar_select %p174, %s20, 0
        %s176 = smul.addr %s175, 4
        %s177 = scalar_lea.vmem %s1, %s176
      $region16: #{reslayer_forward_nchw.9} parent=11 // pred_fallthru
        _
      // Predicated region
      $region17: #{reslayer_forward_nchw.9} parent=11 // pred_check
        %p178 = pneg %p100
      $region18: #{reslayer_forward_nchw.9} parent=11 // pred_check_branch
        %180 = sbr.rel (%p178) target = $region20
      $region19: #{reslayer_forward_nchw.9} parent=11 // pred_region
        %p181 = scmp.lt.s32.totalorder %s20, 0
        %s182 = scalar_select %p181, %s20, 0
        %s183 = scalar_lea.vmem %s2, %s182
      $region20: #{reslayer_forward_nchw.9} parent=11 // pred_fallthru
        _
    $region12: #{reslayer_forward_nchw.9} parent=5 // pred_fallthru
      _
    %p184 = scmp.lt.s32.totalorder %s10, 2
    // Predicated region
    $region21: #{reslayer_forward_nchw.9} parent=5 // pred_check
      %p185 = pneg %p184
    $region22: #{reslayer_forward_nchw.9} parent=5 // pred_check_branch
      %187 = sbr.rel (%p185) target = $region24
    $region23: #{reslayer_forward_nchw.9} parent=5 // pred_region
      // Predicated region
      $region25: #{reslayer_forward_nchw.9} parent=23 // pred_check
        %p188 = pneg %p42
      $region26: #{reslayer_forward_nchw.9} parent=23 // pred_check_branch
        %190 = sbr.rel (%p188) target = $region28
      $region27: #{reslayer_forward_nchw.9} parent=23 // pred_region
        %p191 = scmp.lt.s32.totalorder %s17, 1
        %s192 = scalar_select %p191, %s17, 1
        %s193 = smul.addr %s192, 13
        %s194 = smul.addr %s193, 4
        %s195 = scalar_lea.vmem %s0, %s194
      $region28: #{reslayer_forward_nchw.9} parent=23 // pred_fallthru
        _
      // Predicated region
      $region29: #{reslayer_forward_nchw.9} parent=23 // pred_check
        %p196 = pneg %p122
      $region30: #{reslayer_forward_nchw.9} parent=23 // pred_check_branch
        %198 = sbr.rel (%p196) target = $region32
      $region31: #{reslayer_forward_nchw.9} parent=23 // pred_region
        %p199 = scmp.lt.s32.totalorder %s17, 1
        %s200 = scalar_select %p199, %s17, 1
        %p201 = scmp.lt.s32.totalorder %s18, 0
        %s202 = scalar_select %p201, %s18, 0
        %s203 = smul.addr %s200, 10
        %s204 = sadd.s32 %s202, %s203
        %s205 = smul.addr %s204, 4
        %s206 = scalar_lea.vmem %s3, %s205
      $region32: #{reslayer_forward_nchw.9} parent=23 // pred_fallthru
        _
    $region24: #{reslayer_forward_nchw.9} parent=5 // pred_fallthru
      _
    %p207 = scmp.le.s32.totalorder 1, %s10
    %p208 = scmp.lt.s32.totalorder %s10, 3
    %p209 = pnand %p207, %p208
    %p210 = pneg %p209
    // Predicated region
    $region33: #{reslayer_forward_nchw.9} parent=5 // pred_check
      _
    $region34: #{reslayer_forward_nchw.9} parent=5 // pred_check_branch
      %212 = sbr.rel (%p209) target = $region36
    $region35: #{reslayer_forward_nchw.9} parent=5 // pred_region
      %s213 = ssub.s32 %s10, 1
      %p214 = scmp.lt.s32.totalorder %s19, 1
      %s215 = scalar_select %p214, %s19, 1
      %s216 = smul.addr %s215, 13
      %s217 = smul.addr %s216, 4
      %s218 = scalar_lea.vmem %s0, %s217
      %p219 = pneg %p48
      %p220 = pneg %p45
      %p221 = scmp.lt.s32.totalorder %s20, 0
      %s222 = scalar_select %p221, %s20, 0
      %s223 = smul.addr %s222, 4
      %s224 = scalar_lea.vmem %s1, %s223
      %p225 = pneg %p74
      %p226 = pneg %p71
      %p227 = scmp.lt.s32.totalorder %s20, 0
      %s228 = scalar_select %p227, %s20, 0
      %s229 = scalar_lea.vmem %s2, %s228
      %p230 = pneg %p100
      %p231 = pneg %p97
      %p232 = scmp.lt.s32.totalorder %s19, 1
      %s233 = scalar_select %p232, %s19, 1
      %p234 = scmp.lt.s32.totalorder %s20, 0
      %s235 = scalar_select %p234, %s20, 0
      %s236 = smul.addr %s233, 10
      %s237 = sadd.s32 %s235, %s236
      %s238 = smul.addr %s237, 4
      %s239 = scalar_lea.vmem %s3, %s238
      %p240 = pneg %p128
      %p241 = pneg %p125
      %p242 = pneg %p156
      %p243 = pneg %p153
      %p244 = scmp.lt.s32.totalorder %s19, 1
      %s245 = scalar_select %p244, %s19, 1
      %p246 = scmp.lt.s32.totalorder %s20, 0
      %s247 = scalar_select %p246, %s20, 0
      %s248 = smul.addr %s245, 10
      %s249 = sadd.s32 %s247, %s248
      %s250 = smul.addr %s249, 8
      %s251 = scalar_lea.vmem %s4, %s250
      %p252 = scmp.lt.s32.totalorder %s19, 1
      %s253 = scalar_select %p252, %s19, 1
      %s254 = smul.addr %s253, 13
      %s255 = smul.addr %s254, 4
      %s256 = scalar_lea.vmem %s0, %s255
      %p257 = scmp.lt.s32.totalorder %s20, 0
      %s258 = scalar_select %p257, %s20, 0
      %s259 = smul.addr %s258, 4
      %s260 = scalar_lea.vmem %s1, %s259
      %p261 = scmp.lt.s32.totalorder %s20, 0
      %s262 = scalar_select %p261, %s20, 0
      %s263 = scalar_lea.vmem %s2, %s262
      %p264 = scmp.lt.s32.totalorder %s19, 1
      %s265 = scalar_select %p264, %s19, 1
      %p266 = scmp.lt.s32.totalorder %s20, 0
      %s267 = scalar_select %p266, %s20, 0
      %s268 = smul.addr %s265, 10
      %s269 = sadd.s32 %s267, %s268
      %s270 = smul.addr %s269, 4
      %s271 = scalar_lea.vmem %s3, %s270
      %p272 = scmp.lt.s32.totalorder %s19, 1
      %s273 = scalar_select %p272, %s19, 1
      %p274 = scmp.lt.s32.totalorder %s20, 0
      %s275 = scalar_select %p274, %s20, 0
      %s276 = smul.addr %s273, 10
      %s277 = sadd.s32 %s275, %s276
      %s278 = smul.addr %s277, 8
      %s279 = scalar_lea.vmem %s4, %s278
      %v281 = vld [vmem:[%s256] sm:$0xf]
      %v282 = vld [vmem:[%s256 + $0x4] sm:$0xf]
      %v283 = vld [vmem:[%s256 + $0x8] sm:$0xf]
      %v284 = vld [vmem:[%s256 + $0xc] sm:$0xf]
      %v285 = vld [vmem:[%s256 + $0x10] sm:$0xf]
      %v286 = vld [vmem:[%s256 + $0x14] sm:$0xf]
      %v287 = vld [vmem:[%s256 + $0x18] sm:$0xf]
      %v288 = vld [vmem:[%s256 + $0x1c] sm:$0xf]
      %v289 = vld [vmem:[%s256 + $0x20] sm:$0xf]
      %v290 = vld [vmem:[%s256 + $0x24] sm:$0xf]
      %v291 = vld [vmem:[%s260] sm:$0xf]
      %v292 = vld [vmem:[%s256 + $0x28] sm:$0x1]
      %s293 = scalar_lea.vmem %s260, 4
      %v294 = vld [vmem:[%s293] sm:$0xf]
      %v306 = vunpack.c.l.b16 %v281
      %v307 = vunpack.c.l.b16 %v282
      %v308 = vunpack.c.l.b16 %v283
      %v309 = vunpack.c.l.b16 %v284
      %v310 = vunpack.c.l.b16 %v285
      %v311 = vunpack.c.l.b16 %v286
      %v312 = vunpack.c.l.b16 %v287
      %v313 = vunpack.c.l.b16 %v288
      %v314 = vunpack.c.l.b16 %v289
      %v315 = vunpack.c.l.b16 %v290
      %v316 = vunpack.c.l.b16 %v292
      %v317 = vpack.c.b16 %v307, %v306
      %v318 = vpack.c.b16 %v309, %v308
      %v319 = vpack.c.b16 %v311, %v310
      %v320 = vpack.c.b16 %v313, %v312
      %v321 = vpack.c.b16 %v315, %v314
      %v322 = vpack.c.b16 %v316, %v316
      %vm323 = vsmask.f32 7424
      %v325 = vshrl.u32 %v317, 16
      %v327 = vshll.u32 %v317, 16
      %v329 = vrot.slane %v327, 1
      %v330 = vor.u32 %v325, %v329
      %v332 = vshll.u32 %v318, 16
      %v334 = vrot.slane %v332, 1
      %v335 = vsel %vm323, %v330, %v334
      %v336 = vshrl.u32 %v318, 16
      %v338 = vor.u32 %v336, %v334
      %v340 = vshll.u32 %v319, 16
      %v342 = vrot.slane %v340, 1
      %v343 = vsel %vm323, %v338, %v342
      %v344 = vshrl.u32 %v319, 16
      %v346 = vor.u32 %v344, %v342
      %v348 = vshll.u32 %v320, 16
      %v350 = vrot.slane %v348, 1
      %v351 = vsel %vm323, %v346, %v350
      %v352 = vshrl.u32 %v320, 16
      %v354 = vor.u32 %v352, %v350
      %v356 = vshll.u32 %v321, 16
      %v358 = vrot.slane %v356, 1
      %v359 = vsel %vm323, %v354, %v358
      %v360 = vshrl.u32 %v321, 16
      %v362 = vor.u32 %v360, %v358
      %v364 = vshll.u32 %v322, 16
      %v366 = vrot.slane %v364, 1
      %v367 = vsel %vm323, %v362, %v366
      %vm368 = vcmask 64512
      %v370 = vsel %vm368, %v335, 0
      %v373 = vsel %vm368, %v343, 0
      %v376 = vsel %vm368, %v351, 0
      %v379 = vsel %vm368, %v359, 0
      %v382 = vsel %vm368, %v367, 0
      %vm384 = vcmask 1043456
      %v386 = vsel %vm384, %v294, 0
      %388 = vmatpush.bf16.msra.mxu0 0
      %389 = vmatpush.bf16.msra.mxu0 0
      %390 = vmatpush.bf16.msra.mxu0 0
      %391 = vmatpush.bf16.msra.mxu0 0
      %392 = vmatpush.bf16.msra.mxu0 0
      %393 = vmatpush.bf16.msra.mxu0 0
      %394 = vmatpush.bf16.msra.mxu0 0
      %395 = vmatpush.bf16.msra.mxu0 %v386
      %396 = vmatmul.bf16.gmra.mxu0 %v370
      %v397 = vpop.f32.mrf.mxu0
      %v398 = vadd.f32 0.0, %v397
      %v399 = vpop.f32.mrf.mxu0
      %v400 = vadd.f32 0.0, %v399
      %401 = vmatmul.bf16.gmra.mxu0 %v373
      %v402 = vpop.f32.mrf.mxu0
      %v403 = vadd.f32 0.0, %v402
      %v404 = vpop.f32.mrf.mxu0
      %v405 = vadd.f32 0.0, %v404
      %406 = vmatmul.bf16.gmra.mxu0 %v376
      %v407 = vpop.f32.mrf.mxu0
      %v408 = vadd.f32 0.0, %v407
      %v409 = vpop.f32.mrf.mxu0
      %v410 = vadd.f32 0.0, %v409
      %411 = vmatmul.bf16.gmra.mxu0 %v379
      %v412 = vpop.f32.mrf.mxu0
      %v413 = vadd.f32 0.0, %v412
      %v414 = vpop.f32.mrf.mxu0
      %v415 = vadd.f32 0.0, %v414
      %416 = vmatmul.bf16.gmra.mxu0 %v382
      %v417 = vpop.f32.mrf.mxu0
      %v418 = vadd.f32 0.0, %v417
      %v419 = vpop.f32.mrf.mxu0
      %v420 = vadd.f32 0.0, %v419
      %421 = vdwg.mxu0
      %v422 = vsel %vm368, %v317, 0
      %v424 = vsel %vm368, %v318, 0
      %v426 = vsel %vm368, %v319, 0
      %v428 = vsel %vm368, %v320, 0
      %v430 = vsel %vm368, %v321, 0
      %v433 = vsel %vm384, %v291, 0
      %435 = vmatpush.bf16.msra.mxu0 0
      %436 = vmatpush.bf16.msra.mxu0 0
      %437 = vmatpush.bf16.msra.mxu0 0
      %438 = vmatpush.bf16.msra.mxu0 0
      %439 = vmatpush.bf16.msra.mxu0 0
      %440 = vmatpush.bf16.msra.mxu0 0
      %441 = vmatpush.bf16.msra.mxu0 0
      %442 = vmatpush.bf16.msra.mxu0 %v433
      %443 = vmatmul.bf16.gmra.mxu0 %v422
      %v444 = vpop.f32.mrf.mxu0
      %v445 = vadd.f32 %v398, %v444
      %v446 = vpop.f32.mrf.mxu0
      %v447 = vadd.f32 %v400, %v446
      %448 = vmatmul.bf16.gmra.mxu0 %v424
      %v449 = vpop.f32.mrf.mxu0
      %v450 = vadd.f32 %v403, %v449
      %v451 = vpop.f32.mrf.mxu0
      %v452 = vadd.f32 %v405, %v451
      %453 = vmatmul.bf16.gmra.mxu0 %v426
      %v454 = vpop.f32.mrf.mxu0
      %v455 = vadd.f32 %v408, %v454
      %v456 = vpop.f32.mrf.mxu0
      %v457 = vadd.f32 %v410, %v456
      %458 = vmatmul.bf16.gmra.mxu0 %v428
      %v459 = vpop.f32.mrf.mxu0
      %v460 = vadd.f32 %v413, %v459
      %v461 = vpop.f32.mrf.mxu0
      %v462 = vadd.f32 %v415, %v461
      %463 = vmatmul.bf16.gmra.mxu0 %v430
      %v464 = vpop.f32.mrf.mxu0
      %v465 = vadd.f32 %v418, %v464
      %v466 = vpop.f32.mrf.mxu0
      %v467 = vadd.f32 %v420, %v466
      %468 = vdwg.mxu0
      %v469 = vld [vmem:[%s256] sm:$0xe]
      %s470 = scalar_lea.vmem %s260, 8
      %v471 = vld [vmem:[%s470] sm:$0xf]
      %v473 = vunpack.c.l.b16 %v469
      %v474 = vpack.c.b16 %v307, %v473
      %vm475 = vcmask 1046528
      %v476 = vrot.slane %v474, 1
      %v477 = vrot.slane %v318, 1
      %v478 = vsel %vm475, %v476, %v477
      %v479 = vrot.slane %v319, 1
      %v480 = vsel %vm475, %v477, %v479
      %v481 = vrot.slane %v320, 1
      %v482 = vsel %vm475, %v479, %v481
      %v483 = vrot.slane %v321, 1
      %v484 = vsel %vm475, %v481, %v483
      %v485 = vrot.slane %v322, 1
      %v486 = vsel %vm475, %v483, %v485
      %v488 = vsel %vm368, %v478, 0
      %v491 = vsel %vm368, %v480, 0
      %v494 = vsel %vm368, %v482, 0
      %v497 = vsel %vm368, %v484, 0
      %v500 = vsel %vm368, %v486, 0
      %v503 = vsel %vm384, %v471, 0
      %505 = vmatpush.bf16.msra.mxu0 0
      %506 = vmatpush.bf16.msra.mxu0 0
      %507 = vmatpush.bf16.msra.mxu0 0
      %508 = vmatpush.bf16.msra.mxu0 0
      %509 = vmatpush.bf16.msra.mxu0 0
      %510 = vmatpush.bf16.msra.mxu0 0
      %511 = vmatpush.bf16.msra.mxu0 0
      %512 = vmatpush.bf16.msra.mxu0 %v503
      %513 = vmatmul.bf16.gmra.mxu0 %v488
      %v514 = vpop.f32.mrf.mxu0
      %v515 = vadd.f32 0.0, %v514
      %v516 = vpop.f32.mrf.mxu0
      %v517 = vadd.f32 0.0, %v516
      %518 = vmatmul.bf16.gmra.mxu0 %v491
      %v519 = vpop.f32.mrf.mxu0
      %v520 = vadd.f32 0.0, %v519
      %v521 = vpop.f32.mrf.mxu0
      %v522 = vadd.f32 0.0, %v521
      %523 = vmatmul.bf16.gmra.mxu0 %v494
      %v524 = vpop.f32.mrf.mxu0
      %v525 = vadd.f32 0.0, %v524
      %v526 = vpop.f32.mrf.mxu0
      %v527 = vadd.f32 0.0, %v526
      %528 = vmatmul.bf16.gmra.mxu0 %v497
      %v529 = vpop.f32.mrf.mxu0
      %v530 = vadd.f32 0.0, %v529
      %v531 = vpop.f32.mrf.mxu0
      %v532 = vadd.f32 0.0, %v531
      %533 = vmatmul.bf16.gmra.mxu0 %v500
      %v534 = vpop.f32.mrf.mxu0
      %v535 = vadd.f32 0.0, %v534
      %v536 = vpop.f32.mrf.mxu0
      %v537 = vadd.f32 0.0, %v536
      %538 = vdwg.mxu0
      %v539 = vadd.f32 %v445, %v515
      %v540 = vadd.f32 %v447, %v517
      %v541 = vadd.f32 %v450, %v520
      %v542 = vadd.f32 %v452, %v522
      %v543 = vadd.f32 %v455, %v525
      %v544 = vadd.f32 %v457, %v527
      %v545 = vadd.f32 %v460, %v530
      %v546 = vadd.f32 %v462, %v532
      %v547 = vadd.f32 %v465, %v535
      %v548 = vadd.f32 %v467, %v537
      %v549 = vld [vmem:[%s256 + $0x4] sm:$0xe]
      %v550 = vld [vmem:[%s256 + $0x8] sm:$0xf]
      %v551 = vld [vmem:[%s256 + $0xc] sm:$0xf]
      %v552 = vld [vmem:[%s256 + $0x10] sm:$0xf]
      %v553 = vld [vmem:[%s256 + $0x14] sm:$0xf]
      %v554 = vld [vmem:[%s256 + $0x18] sm:$0xf]
      %v555 = vld [vmem:[%s256 + $0x1c] sm:$0xf]
      %v556 = vld [vmem:[%s256 + $0x20] sm:$0xf]
      %v557 = vld [vmem:[%s256 + $0x24] sm:$0xf]
      %v558 = vld [vmem:[%s256 + $0x28] sm:$0xf]
      %v559 = vld [vmem:[%s256 + $0x2c] sm:$0x1]
      %s560 = scalar_lea.vmem %s260, 12
      %v561 = vld [vmem:[%s560] sm:$0xf]
      %v573 = vunpack.c.l.b16 %v549
      %v574 = vunpack.c.l.b16 %v550
      %v575 = vunpack.c.l.b16 %v551
      %v576 = vunpack.c.l.b16 %v552
      %v577 = vunpack.c.l.b16 %v553
      %v578 = vunpack.c.l.b16 %v554
      %v579 = vunpack.c.l.b16 %v555
      %v580 = vunpack.c.l.b16 %v556
      %v581 = vunpack.c.l.b16 %v557
      %v582 = vunpack.c.l.b16 %v558
      %v583 = vunpack.c.l.b16 %v559
      %v584 = vpack.c.b16 %v574, %v573
      %v585 = vpack.c.b16 %v576, %v575
      %v586 = vpack.c.b16 %v578, %v577
      %v587 = vpack.c.b16 %v580, %v579
      %v588 = vpack.c.b16 %v582, %v581
      %v589 = vpack.c.b16 %v583, %v583
      %v590 = vrot.slane %v584, 1
      %v591 = vrot.slane %v585, 1
      %v592 = vsel %vm475, %v590, %v591
      %v593 = vrot.slane %v586, 1
      %v594 = vsel %vm475, %v591, %v593
      %v595 = vrot.slane %v587, 1
      %v596 = vsel %vm475, %v593, %v595
      %v597 = vrot.slane %v588, 1
      %v598 = vsel %vm475, %v595, %v597
      %v599 = vrot.slane %v589, 1
      %v600 = vsel %vm475, %v597, %v599
      %v602 = vsel %vm368, %v592, 0
      %v605 = vsel %vm368, %v594, 0
      %v608 = vsel %vm368, %v596, 0
      %v611 = vsel %vm368, %v598, 0
      %v614 = vsel %vm368, %v600, 0
      %v617 = vsel %vm384, %v561, 0
      %619 = vmatpush.bf16.msra.mxu0 0
      %620 = vmatpush.bf16.msra.mxu0 0
      %621 = vmatpush.bf16.msra.mxu0 0
      %622 = vmatpush.bf16.msra.mxu0 0
      %623 = vmatpush.bf16.msra.mxu0 0
      %624 = vmatpush.bf16.msra.mxu0 0
      %625 = vmatpush.bf16.msra.mxu0 0
      %626 = vmatpush.bf16.msra.mxu0 %v617
      %627 = vmatmul.bf16.gmra.mxu0 %v602
      %v628 = vpop.f32.mrf.mxu0
      %v629 = vadd.f32 0.0, %v628
      %v630 = vpop.f32.mrf.mxu0
      %v631 = vadd.f32 0.0, %v630
      %632 = vmatmul.bf16.gmra.mxu0 %v605
      %v633 = vpop.f32.mrf.mxu0
      %v634 = vadd.f32 0.0, %v633
      %v635 = vpop.f32.mrf.mxu0
      %v636 = vadd.f32 0.0, %v635
      %637 = vmatmul.bf16.gmra.mxu0 %v608
      %v638 = vpop.f32.mrf.mxu0
      %v639 = vadd.f32 0.0, %v638
      %v640 = vpop.f32.mrf.mxu0
      %v641 = vadd.f32 0.0, %v640
      %642 = vmatmul.bf16.gmra.mxu0 %v611
      %v643 = vpop.f32.mrf.mxu0
      %v644 = vadd.f32 0.0, %v643
      %v645 = vpop.f32.mrf.mxu0
      %v646 = vadd.f32 0.0, %v645
      %647 = vmatmul.bf16.gmra.mxu0 %v614
      %v648 = vpop.f32.mrf.mxu0
      %v649 = vadd.f32 0.0, %v648
      %v650 = vpop.f32.mrf.mxu0
      %v651 = vadd.f32 0.0, %v650
      %652 = vdwg.mxu0
      %v653 = vadd.f32 %v539, %v629
      %v654 = vadd.f32 %v540, %v631
      %v655 = vadd.f32 %v541, %v634
      %v656 = vadd.f32 %v542, %v636
      %v657 = vadd.f32 %v543, %v639
      %v658 = vadd.f32 %v544, %v641
      %v659 = vadd.f32 %v545, %v644
      %v660 = vadd.f32 %v546, %v646
      %v661 = vadd.f32 %v547, %v649
      %v662 = vadd.f32 %v548, %v651
      %v663 = vld [vmem:[%s256 + $0x2c] sm:$0x3]
      %s664 = scalar_lea.vmem %s260, 16
      %v665 = vld [vmem:[%s664] sm:$0xf]
      %v667 = vunpack.c.l.b16 %v663
      %v668 = vpack.c.b16 %v667, %v667
      %vm669 = vsmask.f32 6400
      %v671 = vshrl.u32 %v584, 16
      %v673 = vrot.slane %v671, 1
      %v674 = vshll.u32 %v584, 16
      %v676 = vrot.slane %v674, 2
      %v677 = vor.u32 %v673, %v676
      %v679 = vshrl.u32 %v585, 16
      %v681 = vrot.slane %v679, 1
      %v682 = vshll.u32 %v585, 16
      %v684 = vrot.slane %v682, 2
      %v685 = vor.u32 %v681, %v684
      %v686 = vsel %vm669, %v677, %v685
      %v688 = vshrl.u32 %v586, 16
      %v690 = vrot.slane %v688, 1
      %v691 = vshll.u32 %v586, 16
      %v693 = vrot.slane %v691, 2
      %v694 = vor.u32 %v690, %v693
      %v695 = vsel %vm669, %v685, %v694
      %v697 = vshrl.u32 %v587, 16
      %v699 = vrot.slane %v697, 1
      %v700 = vshll.u32 %v587, 16
      %v702 = vrot.slane %v700, 2
      %v703 = vor.u32 %v699, %v702
      %v704 = vsel %vm669, %v694, %v703
      %v706 = vshrl.u32 %v588, 16
      %v708 = vrot.slane %v706, 1
      %v709 = vshll.u32 %v588, 16
      %v711 = vrot.slane %v709, 2
      %v712 = vor.u32 %v708, %v711
      %v713 = vsel %vm669, %v703, %v712
      %v715 = vshrl.u32 %v668, 16
      %v717 = vrot.slane %v715, 1
      %v718 = vshll.u32 %v668, 16
      %v720 = vrot.slane %v718, 2
      %v721 = vor.u32 %v717, %v720
      %v722 = vsel %vm669, %v712, %v721
      %v724 = vsel %vm368, %v686, 0
      %v727 = vsel %vm368, %v695, 0
      %v730 = vsel %vm368, %v704, 0
      %v733 = vsel %vm368, %v713, 0
      %v736 = vsel %vm368, %v722, 0
      %v739 = vsel %vm384, %v665, 0
      %741 = vmatpush.bf16.msra.mxu0 0
      %742 = vmatpush.bf16.msra.mxu0 0
      %743 = vmatpush.bf16.msra.mxu0 0
      %744 = vmatpush.bf16.msra.mxu0 0
      %745 = vmatpush.bf16.msra.mxu0 0
      %746 = vmatpush.bf16.msra.mxu0 0
      %747 = vmatpush.bf16.msra.mxu0 0
      %748 = vmatpush.bf16.msra.mxu0 %v739
      %749 = vmatmul.bf16.gmra.mxu0 %v724
      %v750 = vpop.f32.mrf.mxu0
      %v751 = vadd.f32 0.0, %v750
      %v752 = vpop.f32.mrf.mxu0
      %v753 = vadd.f32 0.0, %v752
      %754 = vmatmul.bf16.gmra.mxu0 %v727
      %v755 = vpop.f32.mrf.mxu0
      %v756 = vadd.f32 0.0, %v755
      %v757 = vpop.f32.mrf.mxu0
      %v758 = vadd.f32 0.0, %v757
      %759 = vmatmul.bf16.gmra.mxu0 %v730
      %v760 = vpop.f32.mrf.mxu0
      %v761 = vadd.f32 0.0, %v760
      %v762 = vpop.f32.mrf.mxu0
      %v763 = vadd.f32 0.0, %v762
      %764 = vmatmul.bf16.gmra.mxu0 %v733
      %v765 = vpop.f32.mrf.mxu0
      %v766 = vadd.f32 0.0, %v765
      %v767 = vpop.f32.mrf.mxu0
      %v768 = vadd.f32 0.0, %v767
      %769 = vmatmul.bf16.gmra.mxu0 %v736
      %v770 = vpop.f32.mrf.mxu0
      %v771 = vadd.f32 0.0, %v770
      %v772 = vpop.f32.mrf.mxu0
      %v773 = vadd.f32 0.0, %v772
      %774 = vdwg.mxu0
      %v775 = vadd.f32 %v653, %v751
      %v776 = vadd.f32 %v654, %v753
      %v777 = vadd.f32 %v655, %v756
      %v778 = vadd.f32 %v656, %v758
      %v779 = vadd.f32 %v657, %v761
      %v780 = vadd.f32 %v658, %v763
      %v781 = vadd.f32 %v659, %v766
      %v782 = vadd.f32 %v660, %v768
      %v783 = vadd.f32 %v661, %v771
      %v784 = vadd.f32 %v662, %v773
      %v785 = vld [vmem:[%s256 + $0x4] sm:$0xc]
      %s786 = scalar_lea.vmem %s260, 20
      %v787 = vld [vmem:[%s786] sm:$0xf]
      %v789 = vunpack.c.l.b16 %v785
      %v790 = vpack.c.b16 %v574, %v789
      %vm791 = vcmask 1045504
      %v792 = vrot.slane %v790, 2
      %v793 = vrot.slane %v585, 2
      %v794 = vsel %vm791, %v792, %v793
      %v795 = vrot.slane %v586, 2
      %v796 = vsel %vm791, %v793, %v795
      %v797 = vrot.slane %v587, 2
      %v798 = vsel %vm791, %v795, %v797
      %v799 = vrot.slane %v588, 2
      %v800 = vsel %vm791, %v797, %v799
      %v801 = vrot.slane %v668, 2
      %v802 = vsel %vm791, %v799, %v801
      %v804 = vsel %vm368, %v794, 0
      %v807 = vsel %vm368, %v796, 0
      %v810 = vsel %vm368, %v798, 0
      %v813 = vsel %vm368, %v800, 0
      %v816 = vsel %vm368, %v802, 0
      %v819 = vsel %vm384, %v787, 0
      %821 = vmatpush.bf16.msra.mxu0 0
      %822 = vmatpush.bf16.msra.mxu0 0
      %823 = vmatpush.bf16.msra.mxu0 0
      %824 = vmatpush.bf16.msra.mxu0 0
      %825 = vmatpush.bf16.msra.mxu0 0
      %826 = vmatpush.bf16.msra.mxu0 0
      %827 = vmatpush.bf16.msra.mxu0 0
      %828 = vmatpush.bf16.msra.mxu0 %v819
      %829 = vmatmul.bf16.gmra.mxu0 %v804
      %v830 = vpop.f32.mrf.mxu0
      %v831 = vadd.f32 0.0, %v830
      %v832 = vpop.f32.mrf.mxu0
      %v833 = vadd.f32 0.0, %v832
      %834 = vmatmul.bf16.gmra.mxu0 %v807
      %v835 = vpop.f32.mrf.mxu0
      %v836 = vadd.f32 0.0, %v835
      %v837 = vpop.f32.mrf.mxu0
      %v838 = vadd.f32 0.0, %v837
      %839 = vmatmul.bf16.gmra.mxu0 %v810
      %v840 = vpop.f32.mrf.mxu0
      %v841 = vadd.f32 0.0, %v840
      %v842 = vpop.f32.mrf.mxu0
      %v843 = vadd.f32 0.0, %v842
      %844 = vmatmul.bf16.gmra.mxu0 %v813
      %v845 = vpop.f32.mrf.mxu0
      %v846 = vadd.f32 0.0, %v845
      %v847 = vpop.f32.mrf.mxu0
      %v848 = vadd.f32 0.0, %v847
      %849 = vmatmul.bf16.gmra.mxu0 %v816
      %v850 = vpop.f32.mrf.mxu0
      %v851 = vadd.f32 0.0, %v850
      %v852 = vpop.f32.mrf.mxu0
      %v853 = vadd.f32 0.0, %v852
      %854 = vdwg.mxu0
      %v855 = vadd.f32 %v775, %v831
      %v856 = vadd.f32 %v776, %v833
      %v857 = vadd.f32 %v777, %v836
      %v858 = vadd.f32 %v778, %v838
      %v859 = vadd.f32 %v779, %v841
      %v860 = vadd.f32 %v780, %v843
      %v861 = vadd.f32 %v781, %v846
      %v862 = vadd.f32 %v782, %v848
      %v863 = vadd.f32 %v783, %v851
      %v864 = vadd.f32 %v784, %v853
      %v865 = vld [vmem:[%s256 + $0x8] sm:$0xc]
      %v866 = vld [vmem:[%s256 + $0xc] sm:$0xf]
      %v867 = vld [vmem:[%s256 + $0x10] sm:$0xf]
      %v868 = vld [vmem:[%s256 + $0x14] sm:$0xf]
      %v869 = vld [vmem:[%s256 + $0x18] sm:$0xf]
      %v870 = vld [vmem:[%s256 + $0x1c] sm:$0xf]
      %v871 = vld [vmem:[%s256 + $0x20] sm:$0xf]
      %v872 = vld [vmem:[%s256 + $0x24] sm:$0xf]
      %v873 = vld [vmem:[%s256 + $0x28] sm:$0xf]
      %v874 = vld [vmem:[%s256 + $0x2c] sm:$0xf]
      %v875 = vld [vmem:[%s256 + $0x30] sm:$0x3]
      %s876 = scalar_lea.vmem %s260, 24
      %v877 = vld [vmem:[%s876] sm:$0xf]
      %v889 = vunpack.c.l.b16 %v865
      %v890 = vunpack.c.l.b16 %v866
      %v891 = vunpack.c.l.b16 %v867
      %v892 = vunpack.c.l.b16 %v868
      %v893 = vunpack.c.l.b16 %v869
      %v894 = vunpack.c.l.b16 %v870
      %v895 = vunpack.c.l.b16 %v871
      %v896 = vunpack.c.l.b16 %v872
      %v897 = vunpack.c.l.b16 %v873
      %v898 = vunpack.c.l.b16 %v874
      %v899 = vunpack.c.l.b16 %v875
      %v900 = vpack.c.b16 %v890, %v889
      %v901 = vpack.c.b16 %v892, %v891
      %v902 = vpack.c.b16 %v894, %v893
      %v903 = vpack.c.b16 %v896, %v895
      %v904 = vpack.c.b16 %v898, %v897
      %v905 = vpack.c.b16 %v899, %v899
      %v906 = vrot.slane %v900, 2
      %v907 = vrot.slane %v901, 2
      %v908 = vsel %vm791, %v906, %v907
      %v909 = vrot.slane %v902, 2
      %v910 = vsel %vm791, %v907, %v909
      %v911 = vrot.slane %v903, 2
      %v912 = vsel %vm791, %v909, %v911
      %v913 = vrot.slane %v904, 2
      %v914 = vsel %vm791, %v911, %v913
      %v915 = vrot.slane %v905, 2
      %v916 = vsel %vm791, %v913, %v915
      %v918 = vsel %vm368, %v908, 0
      %v921 = vsel %vm368, %v910, 0
      %v924 = vsel %vm368, %v912, 0
      %v927 = vsel %vm368, %v914, 0
      %v930 = vsel %vm368, %v916, 0
      %v933 = vsel %vm384, %v877, 0
      %935 = vmatpush.bf16.msra.mxu0 0
      %936 = vmatpush.bf16.msra.mxu0 0
      %937 = vmatpush.bf16.msra.mxu0 0
      %938 = vmatpush.bf16.msra.mxu0 0
      %939 = vmatpush.bf16.msra.mxu0 0
      %940 = vmatpush.bf16.msra.mxu0 0
      %941 = vmatpush.bf16.msra.mxu0 0
      %942 = vmatpush.bf16.msra.mxu0 %v933
      %943 = vmatmul.bf16.gmra.mxu0 %v918
      %v944 = vpop.f32.mrf.mxu0
      %v945 = vadd.f32 0.0, %v944
      %v946 = vpop.f32.mrf.mxu0
      %v947 = vadd.f32 0.0, %v946
      %948 = vmatmul.bf16.gmra.mxu0 %v921
      %v949 = vpop.f32.mrf.mxu0
      %v950 = vadd.f32 0.0, %v949
      %v951 = vpop.f32.mrf.mxu0
      %v952 = vadd.f32 0.0, %v951
      %953 = vmatmul.bf16.gmra.mxu0 %v924
      %v954 = vpop.f32.mrf.mxu0
      %v955 = vadd.f32 0.0, %v954
      %v956 = vpop.f32.mrf.mxu0
      %v957 = vadd.f32 0.0, %v956
      %958 = vmatmul.bf16.gmra.mxu0 %v927
      %v959 = vpop.f32.mrf.mxu0
      %v960 = vadd.f32 0.0, %v959
      %v961 = vpop.f32.mrf.mxu0
      %v962 = vadd.f32 0.0, %v961
      %963 = vmatmul.bf16.gmra.mxu0 %v930
      %v964 = vpop.f32.mrf.mxu0
      %v965 = vadd.f32 0.0, %v964
      %v966 = vpop.f32.mrf.mxu0
      %v967 = vadd.f32 0.0, %v966
      %968 = vdwg.mxu0
      %v969 = vadd.f32 %v855, %v945
      %v970 = vadd.f32 %v856, %v947
      %v971 = vadd.f32 %v857, %v950
      %v972 = vadd.f32 %v858, %v952
      %v973 = vadd.f32 %v859, %v955
      %v974 = vadd.f32 %v860, %v957
      %v975 = vadd.f32 %v861, %v960
      %v976 = vadd.f32 %v862, %v962
      %v977 = vadd.f32 %v863, %v965
      %v978 = vadd.f32 %v864, %v967
      %v979 = vld [vmem:[%s256 + $0x30] sm:$0x7]
      %s980 = scalar_lea.vmem %s260, 28
      %v981 = vld [vmem:[%s980] sm:$0xf]
      %v983 = vunpack.c.l.b16 %v979
      %v984 = vpack.c.b16 %v983, %v983
      %vm985 = vsmask.f32 5376
      %v987 = vshrl.u32 %v900, 16
      %v989 = vrot.slane %v987, 2
      %v990 = vshll.u32 %v900, 16
      %v992 = vrot.slane %v990, 3
      %v993 = vor.u32 %v989, %v992
      %v995 = vshrl.u32 %v901, 16
      %v997 = vrot.slane %v995, 2
      %v998 = vshll.u32 %v901, 16
      %v1000 = vrot.slane %v998, 3
      %v1001 = vor.u32 %v997, %v1000
      %v1002 = vsel %vm985, %v993, %v1001
      %v1004 = vshrl.u32 %v902, 16
      %v1006 = vrot.slane %v1004, 2
      %v1007 = vshll.u32 %v902, 16
      %v1009 = vrot.slane %v1007, 3
      %v1010 = vor.u32 %v1006, %v1009
      %v1011 = vsel %vm985, %v1001, %v1010
      %v1013 = vshrl.u32 %v903, 16
      %v1015 = vrot.slane %v1013, 2
      %v1016 = vshll.u32 %v903, 16
      %v1018 = vrot.slane %v1016, 3
      %v1019 = vor.u32 %v1015, %v1018
      %v1020 = vsel %vm985, %v1010, %v1019
      %v1022 = vshrl.u32 %v904, 16
      %v1024 = vrot.slane %v1022, 2
      %v1025 = vshll.u32 %v904, 16
      %v1027 = vrot.slane %v1025, 3
      %v1028 = vor.u32 %v1024, %v1027
      %v1029 = vsel %vm985, %v1019, %v1028
      %v1031 = vshrl.u32 %v984, 16
      %v1033 = vrot.slane %v1031, 2
      %v1034 = vshll.u32 %v984, 16
      %v1036 = vrot.slane %v1034, 3
      %v1037 = vor.u32 %v1033, %v1036
      %v1038 = vsel %vm985, %v1028, %v1037
      %v1040 = vsel %vm368, %v1002, 0
      %v1043 = vsel %vm368, %v1011, 0
      %v1046 = vsel %vm368, %v1020, 0
      %v1049 = vsel %vm368, %v1029, 0
      %v1052 = vsel %vm368, %v1038, 0
      %v1055 = vsel %vm384, %v981, 0
      %1057 = vmatpush.bf16.msra.mxu0 0
      %1058 = vmatpush.bf16.msra.mxu0 0
      %1059 = vmatpush.bf16.msra.mxu0 0
      %1060 = vmatpush.bf16.msra.mxu0 0
      %1061 = vmatpush.bf16.msra.mxu0 0
      %1062 = vmatpush.bf16.msra.mxu0 0
      %1063 = vmatpush.bf16.msra.mxu0 0
      %1064 = vmatpush.bf16.msra.mxu0 %v1055
      %1065 = vmatmul.bf16.gmra.mxu0 %v1040
      %v1066 = vpop.f32.mrf.mxu0
      %v1067 = vadd.f32 0.0, %v1066
      %v1068 = vpop.f32.mrf.mxu0
      %v1069 = vadd.f32 0.0, %v1068
      %1070 = vmatmul.bf16.gmra.mxu0 %v1043
      %v1071 = vpop.f32.mrf.mxu0
      %v1072 = vadd.f32 0.0, %v1071
      %v1073 = vpop.f32.mrf.mxu0
      %v1074 = vadd.f32 0.0, %v1073
      %1075 = vmatmul.bf16.gmra.mxu0 %v1046
      %v1076 = vpop.f32.mrf.mxu0
      %v1077 = vadd.f32 0.0, %v1076
      %v1078 = vpop.f32.mrf.mxu0
      %v1079 = vadd.f32 0.0, %v1078
      %1080 = vmatmul.bf16.gmra.mxu0 %v1049
      %v1081 = vpop.f32.mrf.mxu0
      %v1082 = vadd.f32 0.0, %v1081
      %v1083 = vpop.f32.mrf.mxu0
      %v1084 = vadd.f32 0.0, %v1083
      %1085 = vmatmul.bf16.gmra.mxu0 %v1052
      %v1086 = vpop.f32.mrf.mxu0
      %v1087 = vadd.f32 0.0, %v1086
      %v1088 = vpop.f32.mrf.mxu0
      %v1089 = vadd.f32 0.0, %v1088
      %1090 = vdwg.mxu0
      %v1091 = vadd.f32 %v969, %v1067
      %v1092 = vadd.f32 %v970, %v1069
      %v1093 = vadd.f32 %v971, %v1072
      %v1094 = vadd.f32 %v972, %v1074
      %v1095 = vadd.f32 %v973, %v1077
      %v1096 = vadd.f32 %v974, %v1079
      %v1097 = vadd.f32 %v975, %v1082
      %v1098 = vadd.f32 %v976, %v1084
      %v1099 = vadd.f32 %v977, %v1087
      %v1100 = vadd.f32 %v978, %v1089
      %v1101 = vld [vmem:[%s256 + $0x8] sm:$0x8]
      %s1102 = scalar_lea.vmem %s260, 32
      %v1103 = vld [vmem:[%s1102] sm:$0xf]
      %v1105 = vunpack.c.l.b16 %v1101
      %v1106 = vpack.c.b16 %v890, %v1105
      %vm1107 = vcmask 1044480
      %v1108 = vrot.slane %v1106, 3
      %v1109 = vrot.slane %v901, 3
      %v1110 = vsel %vm1107, %v1108, %v1109
      %v1111 = vrot.slane %v902, 3
      %v1112 = vsel %vm1107, %v1109, %v1111
      %v1113 = vrot.slane %v903, 3
      %v1114 = vsel %vm1107, %v1111, %v1113
      %v1115 = vrot.slane %v904, 3
      %v1116 = vsel %vm1107, %v1113, %v1115
      %v1117 = vrot.slane %v984, 3
      %v1118 = vsel %vm1107, %v1115, %v1117
      %v1120 = vsel %vm368, %v1110, 0
      %v1123 = vsel %vm368, %v1112, 0
      %v1126 = vsel %vm368, %v1114, 0
      %v1129 = vsel %vm368, %v1116, 0
      %v1132 = vsel %vm368, %v1118, 0
      %v1135 = vsel %vm384, %v1103, 0
      %1137 = vmatpush.bf16.msra.mxu0 0
      %1138 = vmatpush.bf16.msra.mxu0 0
      %1139 = vmatpush.bf16.msra.mxu0 0
      %1140 = vmatpush.bf16.msra.mxu0 0
      %1141 = vmatpush.bf16.msra.mxu0 0
      %1142 = vmatpush.bf16.msra.mxu0 0
      %1143 = vmatpush.bf16.msra.mxu0 0
      %1144 = vmatpush.bf16.msra.mxu0 %v1135
      %1145 = vmatmul.bf16.gmra.mxu0 %v1120
      %v1146 = vpop.f32.mrf.mxu0
      %v1147 = vadd.f32 0.0, %v1146
      %v1148 = vpop.f32.mrf.mxu0
      %v1149 = vadd.f32 0.0, %v1148
      %1150 = vmatmul.bf16.gmra.mxu0 %v1123
      %v1151 = vpop.f32.mrf.mxu0
      %v1152 = vadd.f32 0.0, %v1151
      %v1153 = vpop.f32.mrf.mxu0
      %v1154 = vadd.f32 0.0, %v1153
      %1155 = vmatmul.bf16.gmra.mxu0 %v1126
      %v1156 = vpop.f32.mrf.mxu0
      %v1157 = vadd.f32 0.0, %v1156
      %v1158 = vpop.f32.mrf.mxu0
      %v1159 = vadd.f32 0.0, %v1158
      %1160 = vmatmul.bf16.gmra.mxu0 %v1129
      %v1161 = vpop.f32.mrf.mxu0
      %v1162 = vadd.f32 0.0, %v1161
      %v1163 = vpop.f32.mrf.mxu0
      %v1164 = vadd.f32 0.0, %v1163
      %1165 = vmatmul.bf16.gmra.mxu0 %v1132
      %v1166 = vpop.f32.mrf.mxu0
      %v1167 = vadd.f32 0.0, %v1166
      %v1168 = vpop.f32.mrf.mxu0
      %v1169 = vadd.f32 0.0, %v1168
      %1170 = vdwg.mxu0
      %v1171 = vadd.f32 %v1091, %v1147
      %v1172 = vadd.f32 %v1092, %v1149
      %v1173 = vadd.f32 %v1093, %v1152
      %v1174 = vadd.f32 %v1094, %v1154
      %v1175 = vadd.f32 %v1095, %v1157
      %v1176 = vadd.f32 %v1096, %v1159
      %v1177 = vadd.f32 %v1097, %v1162
      %v1178 = vadd.f32 %v1098, %v1164
      %v1179 = vadd.f32 %v1099, %v1167
      %v1180 = vadd.f32 %v1100, %v1169
      %v1181 = vld [vmem:[%s263] sm:$0x1]
      %v1183 = vperm.slane %v1181, 0
      %v1185 = vadd.f32 %v1171, %v1183
      %v1186 = vadd.f32 %v1172, %v1183
      %v1187 = vadd.f32 %v1173, %v1183
      %v1188 = vadd.f32 %v1174, %v1183
      %v1189 = vadd.f32 %v1175, %v1183
      %v1190 = vadd.f32 %v1176, %v1183
      %v1191 = vadd.f32 %v1177, %v1183
      %v1192 = vadd.f32 %v1178, %v1183
      %v1193 = vadd.f32 %v1179, %v1183
      %v1194 = vadd.f32 %v1180, %v1183
      %v1195 = vld [vmem:[%s271] sm:$0xf]
      %v1196 = vld [vmem:[%s271 + $0x4] sm:$0xf]
      %v1197 = vld [vmem:[%s271 + $0x8] sm:$0xf]
      %v1198 = vld [vmem:[%s271 + $0xc] sm:$0xf]
      %v1199 = vld [vmem:[%s271 + $0x10] sm:$0xf]
      %v1200 = vld [vmem:[%s271 + $0x14] sm:$0xf]
      %v1201 = vld [vmem:[%s271 + $0x18] sm:$0xf]
      %v1202 = vld [vmem:[%s271 + $0x1c] sm:$0xf]
      %v1203 = vld [vmem:[%s271 + $0x20] sm:$0xf]
      %v1204 = vld [vmem:[%s271 + $0x24] sm:$0xf]
      %v1205 = vunpack.c.l.bf16 %v1195
      %v1206 = vunpack.c.l.bf16 %v1196
      %v1207 = vunpack.c.l.bf16 %v1197
      %v1208 = vunpack.c.l.bf16 %v1198
      %v1209 = vunpack.c.l.bf16 %v1199
      %v1210 = vunpack.c.l.bf16 %v1200
      %v1211 = vunpack.c.l.bf16 %v1201
      %v1212 = vunpack.c.l.bf16 %v1202
      %v1213 = vunpack.c.l.bf16 %v1203
      %v1214 = vunpack.c.l.bf16 %v1204
      %v1215 = vadd.f32 %v1185, %v1205
      %v1216 = vadd.f32 %v1186, %v1206
      %v1217 = vadd.f32 %v1187, %v1207
      %v1218 = vadd.f32 %v1188, %v1208
      %v1219 = vadd.f32 %v1189, %v1209
      %v1220 = vadd.f32 %v1190, %v1210
      %v1221 = vadd.f32 %v1191, %v1211
      %v1222 = vadd.f32 %v1192, %v1212
      %v1223 = vadd.f32 %v1193, %v1213
      %v1224 = vadd.f32 %v1194, %v1214
      %v1225 = vmax.f32 %v1215, 0.0
      %v1226 = vmax.f32 %v1216, 0.0
      %v1227 = vmax.f32 %v1217, 0.0
      %v1228 = vmax.f32 %v1218, 0.0
      %v1229 = vmax.f32 %v1219, 0.0
      %v1230 = vmax.f32 %v1220, 0.0
      %v1231 = vmax.f32 %v1221, 0.0
      %v1232 = vmax.f32 %v1222, 0.0
      %v1233 = vmax.f32 %v1223, 0.0
      %v1234 = vmax.f32 %v1224, 0.0
      %1235 = vst.msk [vmem:[%s279] sm:$0xff] %vm368, %v1225
      %1236 = vst.msk [vmem:[%s279 + $0x8] sm:$0xff] %vm368, %v1226
      %1237 = vst.msk [vmem:[%s279 + $0x10] sm:$0xff] %vm368, %v1227
      %1238 = vst.msk [vmem:[%s279 + $0x18] sm:$0xff] %vm368, %v1228
      %1239 = vst.msk [vmem:[%s279 + $0x20] sm:$0xff] %vm368, %v1229
      %1240 = vst.msk [vmem:[%s279 + $0x28] sm:$0xff] %vm368, %v1230
      %1241 = vst.msk [vmem:[%s279 + $0x30] sm:$0xff] %vm368, %v1231
      %1242 = vst.msk [vmem:[%s279 + $0x38] sm:$0xff] %vm368, %v1232
      %1243 = vst.msk [vmem:[%s279 + $0x40] sm:$0xff] %vm368, %v1233
      %1244 = vst.msk [vmem:[%s279 + $0x48] sm:$0xff] %vm368, %v1234
      %p1245 = scmp.lt.s32.totalorder %s19, 1
      %s1246 = scalar_select %p1245, %s19, 1
      %p1247 = scmp.lt.s32.totalorder %s20, 0
      %s1248 = scalar_select %p1247, %s20, 0
      %s1249 = smul.addr %s1246, 10
      %s1250 = sadd.s32 %s1248, %s1249
      %s1251 = smul.addr %s1250, 8
      %s1252 = scalar_lea.vmem %s4, %s1251
      // Predicated region
      $region37: #{reslayer_forward_nchw.9} parent=35 // pred_check
        %p1253 = pneg %p153
      $region38: #{reslayer_forward_nchw.9} parent=35 // pred_check_branch
        %1255 = sbr.rel (%p1253) target = $region40
      $region39: #{reslayer_forward_nchw.9} parent=35 // pred_region
        _
      $region40: #{reslayer_forward_nchw.9} parent=35 // pred_fallthru
        _
    $region36: #{reslayer_forward_nchw.9} parent=5 // pred_fallthru
      _
    %p1256 = scmp.le.s32.totalorder 2, %s10
    // Predicated region
    $region41: #{reslayer_forward_nchw.9} parent=5 // pred_check
      %p1257 = pneg %p1256
    $region42: #{reslayer_forward_nchw.9} parent=5 // pred_check_branch
      %1259 = sbr.rel (%p1257) target = $region44
    $region43: #{reslayer_forward_nchw.9} parent=5 // pred_region
      %s1260 = ssub.s32 %s10, 2
      // Predicated region
      $region45: #{reslayer_forward_nchw.9} parent=43 // pred_check
        %p1261 = pneg %p159
      $region46: #{reslayer_forward_nchw.9} parent=43 // pred_check_branch
        %1263 = sbr.rel (%p1261) target = $region48
      $region47: #{reslayer_forward_nchw.9} parent=43 // pred_region
        %p1264 = scmp.lt.s32.totalorder %s21, 1
        %s1265 = scalar_select %p1264, %s21, 1
        %p1266 = scmp.lt.s32.totalorder %s22, 0
        %s1267 = scalar_select %p1266, %s22, 0
        %s1268 = smul.addr %s1265, 10
        %s1269 = sadd.s32 %s1267, %s1268
        %s1270 = smul.addr %s1269, 8
        %s1271 = scalar_lea.vmem %s4, %s1270
      $region48: #{reslayer_forward_nchw.9} parent=43 // pred_fallthru
        _
    $region44: #{reslayer_forward_nchw.9} parent=5 // pred_fallthru
      _
  $region6: #{reslayer_forward_nchw.9} parent=0 // loop_footer
    %s14 = sadd.s32 1, %s10
  $region7: #{reslayer_forward_nchw.9} parent=0 // loop_footer_branch
    %9 = sbr.rel target = $region3
  $region8: #{reslayer_forward_nchw.9} parent=0 // loop_exit
    _

</llo_original>
